<compile_context>
chip_gen: v7x
topology: tpu7x:2x2x1
jax: 0.10.0
libtpu: 0.0.40
codegen_flags: <defaults>
</compile_context>

<pallas_src>
import jax
import jax.numpy as jnp
from jax.experimental import pallas as pl
from jax.experimental.pallas import tpu as pltpu

EPS = 1e-5      # nn.BatchNorm2d default eps
LANE = 128      # TPU lane width


# ----------------------------------------------------------------------------
# Kernels
# ----------------------------------------------------------------------------
def _make_conv3x3_stats_kernel(TH, W, CP):
    """Direct 3x3 conv (stride=1, pad=1) on one halo row-block + per-tile stats."""

    def kernel(x_ref, w_ref, y_ref, s_ref):
        # x_ref : (1, TH+2, W+2, CP)  bf16 input block with 1-px halo
        # w_ref : (9*CP, CP)          bf16 flattened weights (VMEM resident)
        # y_ref : (1, TH*W, CP)       f32 conv output rows for this block
        # s_ref : (1, 2, CP)          f32 per-tile (sum, sum of squares)
        acc = jnp.zeros((TH * W, CP), jnp.float32)
        k = 0
        for dy in range(3):
            for dx in range(3):
                patch = x_ref[0, dy:dy + TH, dx:dx + W, :].reshape(TH * W, CP)
                wk = w_ref[k * CP:(k + 1) * CP, :]
                acc = acc + jnp.dot(patch, wk, preferred_element_type=jnp.float32)
                k += 1
        y_ref[0] = acc
        s_ref[0, 0:1, :] = jnp.sum(acc, axis=0, keepdims=True)
        s_ref[0, 1:2, :] = jnp.sum(acc * acc, axis=0, keepdims=True)

    return kernel


def _bn_relu_kernel(y_ref, sc_ref, sh_ref, o_ref):
    v = y_ref[...] * sc_ref[...] + sh_ref[...]
    o_ref[...] = jnp.maximum(v, 0.0).astype(o_ref.dtype)


def _bn_add_relu_kernel(y_ref, sc_ref, sh_ref, r_ref, o_ref):
    v = y_ref[...] * sc_ref[...] + sh_ref[...] + r_ref[...]
    o_ref[...] = jnp.maximum(v, 0.0).astype(o_ref.dtype)


# ----------------------------------------------------------------------------
# pallas_call wrappers
# ----------------------------------------------------------------------------
def _conv3x3_with_stats(x_blocks, w_flat, TH, W, CP):
    G = x_blocks.shape[0]
    kernel = _make_conv3x3_stats_kernel(TH, W, CP)
    return pl.pallas_call(
        kernel,
        out_shape=(jax.ShapeDtypeStruct((G, TH * W, CP), jnp.float32),
                   jax.ShapeDtypeStruct((G, 2, CP), jnp.float32)),
        grid_spec=pltpu.PrefetchScalarGridSpec(
            num_scalar_prefetch=0,
            grid=(G,),
            in_specs=[
                pl.BlockSpec((1, TH + 2, W + 2, CP), lambda g: (g, 0, 0, 0)),
                pl.BlockSpec((9 * CP, CP), lambda g: (0, 0)),   # VMEM-resident weights
            ],
            out_specs=[
                pl.BlockSpec((1, TH * W, CP), lambda g: (g, 0, 0)),
                pl.BlockSpec((1, 2, CP), lambda g: (g, 0, 0)),
            ]),
        compiler_params=pltpu.CompilerParams(dimension_semantics=("parallel",)),
    )(x_blocks, w_flat)


def _pick_row_tile(M):
    for t in (1024, 512, 256, 128, 64, 32, 16, 8):
        if M % t == 0:
            return t
    return M


def _bn_relu(y, scale, shift, out_dtype):
    M, CP = y.shape
    TM = _pick_row_tile(M)
    return pl.pallas_call(
        _bn_relu_kernel,
        out_shape=jax.ShapeDtypeStruct((M, CP), out_dtype),
        grid_spec=pltpu.PrefetchScalarGridSpec(
            num_scalar_prefetch=0,
            grid=(M // TM,),
            in_specs=[pl.BlockSpec((TM, CP), lambda i: (i, 0)),
                      pl.BlockSpec((1, CP), lambda i: (0, 0)),
                      pl.BlockSpec((1, CP), lambda i: (0, 0))],
            out_specs=pl.BlockSpec((TM, CP), lambda i: (i, 0))),
        compiler_params=pltpu.CompilerParams(dimension_semantics=("parallel",)),
    )(y, scale, shift)


def _bn_add_relu(y, scale, shift, res, out_dtype):
    M, CP = y.shape
    TM = _pick_row_tile(M)
    return pl.pallas_call(
        _bn_add_relu_kernel,
        out_shape=jax.ShapeDtypeStruct((M, CP), out_dtype),
        grid_spec=pltpu.PrefetchScalarGridSpec(
            num_scalar_prefetch=0,
            grid=(M // TM,),
            in_specs=[pl.BlockSpec((TM, CP), lambda i: (i, 0)),
                      pl.BlockSpec((1, CP), lambda i: (0, 0)),
                      pl.BlockSpec((1, CP), lambda i: (0, 0)),
                      pl.BlockSpec((TM, CP), lambda i: (i, 0))],
            out_specs=pl.BlockSpec((TM, CP), lambda i: (i, 0))),
        compiler_params=pltpu.CompilerParams(dimension_semantics=("parallel",)),
    )(y, scale, shift, res)


# ----------------------------------------------------------------------------
# Plain-JAX glue (layout plumbing only; all hot-path math is in the kernels)
# ----------------------------------------------------------------------------
def _round_up(x, m):
    return (x + m - 1) // m * m


def _halo_blocks(x_nhwc, TH):
    """(N,H,W,CP) -> (N*HB, TH+2, W+2, CP) overlapping row blocks with 1-px halo."""
    N, H, W, CP = x_nhwc.shape
    HB = H // TH
    xp = jnp.pad(x_nhwc, ((0, 0), (1, 1), (1, 1), (0, 0)))
    blocks = jnp.stack([xp[:, i * TH:i * TH + TH + 2] for i in range(HB)], axis=1)
    return blocks.reshape(N * HB, TH + 2, W + 2, CP)


def _flatten_weight(w, CP):
    """PyTorch (Cout, Cin, 3, 3) -> (9*CP, CP) bf16, (kh, kw, cin)-major rows."""
    Cout, Cin = w.shape[0], w.shape[1]
    wt = jnp.transpose(w, (2, 3, 1, 0)).astype(jnp.float32)        # (3,3,Cin,Cout)
    wt = jnp.pad(wt, ((0, 0), (0, 0), (0, CP - Cin), (0, CP - Cout)))
    return wt.reshape(9 * CP, CP).astype(jnp.bfloat16)


def _bn_scale_shift(stats, gamma, beta, M, CP):
    """Fold global batch stats into per-channel scale/shift (train-mode BN)."""
    s = jnp.sum(stats.astype(jnp.float32), axis=0)                 # (2, CP)
    mean = s[0] / M
    var = jnp.maximum(s[1] / M - mean * mean, 0.0)                 # biased variance
    C = gamma.shape[0]
    g = jnp.pad(gamma.astype(jnp.float32), (0, CP - C))            # pad gamma with 0 so
    b = jnp.pad(beta.astype(jnp.float32), (0, CP - C))             # padded channels stay 0
    scale = g * jax.lax.rsqrt(var + EPS)
    shift = b - mean * scale
    return scale.reshape(1, CP), shift.reshape(1, CP)


def basic_block_forward(x_nchw, params):
    """BasicBlock forward (stride=1, downsample=None -- the module defaults)."""
    # TODO(synk): stride>1 / downsample shortcut not implemented (module defaults used).
    w1, g1, b1 = params["w1"], params["g1"], params["b1"]
    w2, g2, b2 = params["w2"], params["g2"], params["b2"]
    N, C, H, W = x_nchw.shape
    Cout = w1.shape[0]
    assert Cout == C, "identity shortcut requires in_channel == out_channel"

    CP = _round_up(C, LANE)                                   # lane-dense channel dim
    TH = next(t for t in (8, 4, 2, 1) if H % t == 0)          # output rows per grid step
    M = N * H * W

    x = jnp.transpose(x_nchw, (0, 2, 3, 1)).astype(jnp.float32)        # NCHW -> NHWC
    xpad_c = jnp.pad(x, ((0, 0), (0, 0), (0, 0), (0, CP - C)))         # (N,H,W,CP) f32

    w1f = _flatten_weight(w1, CP)
    w2f = _flatten_weight(w2, CP)

    # conv1 (direct 3x3, bf16 MXU inputs, f32 acc) + global BN1 stats -> ReLU
    xb1 = _halo_blocks(xpad_c.astype(jnp.bfloat16), TH)
    y1, st1 = _conv3x3_with_stats(xb1, w1f, TH, W, CP)
    sc1, sh1 = _bn_scale_shift(st1, g1, b1, M, CP)
    a1 = _bn_relu(y1.reshape(M, CP), sc1, sh1, jnp.bfloat16)           # conv2 input

    # conv2 + global BN2 stats -> +identity -> ReLU
    xb2 = _halo_blocks(a1.reshape(N, H, W, CP), TH)
    y2, st2 = _conv3x3_with_stats(xb2, w2f, TH, W, CP)
    sc2, sh2 = _bn_scale_shift(st2, g2, b2, M, CP)
    out = _bn_add_relu(y2.reshape(M, CP), sc2, sh2,
                       xpad_c.reshape(M, CP), jnp.float32)

    out = out.reshape(N, H, W, CP)[:, :, :, :C]
    return jnp.transpose(out, (0, 3, 1, 2))                            # NHWC -> NCHW


def basic_block_reference(x, params):
    """Pure-JAX f32 reference (same train-mode BN semantics) for validation."""
    def conv(x, w):
        return jax.lax.conv_general_dilated(
            x, w, window_strides=(1, 1), padding=((1, 1), (1, 1)),
            dimension_numbers=("NCHW", "OIHW", "NCHW"))

    def bn(x, g, b):
        mean = jnp.mean(x, axis=(0, 2, 3), keepdims=True)
        var = jnp.mean((x - mean) ** 2, axis=(0, 2, 3), keepdims=True)
        return (x - mean) * jax.lax.rsqrt(var + EPS) * g.reshape(1, -1, 1, 1) \
            + b.reshape(1, -1, 1, 1)

    out = jax.nn.relu(bn(conv(x, params["w1"]), params["g1"], params["b1"]))
    out = bn(conv(out, params["w2"]), params["g2"], params["b2"]) + x
    return jax.nn.relu(out)


if __name__ == "__main__":
    key = jax.random.PRNGKey(0)
    N, C, H, W = 2, 4, 16, 16        # in_channel == out_channel == 4, stride=1
    k1, k2, kx = jax.random.split(key, 3)

    params = {
        "w1": jax.random.normal(k1, (C, C, 3, 3), jnp.float32) * 0.1,
        "g1": jnp.ones((C,), jnp.float32),    # BatchNorm2d default weight init
        "b1": jnp.zeros((C,), jnp.float32),   # BatchNorm2d default bias init
        "w2": jax.random.normal(k2, (C, C, 3, 3), jnp.float32) * 0.1,
        "g2": jnp.ones((C,), jnp.float32),
        "b2": jnp.zeros((C,), jnp.float32),
    }
    x = jax.random.normal(kx, (N, C, H, W), jnp.float32)

    out = jax.jit(basic_block_forward)(x, params)
    out = jax.block_until_ready(out)

    ref = basic_block_reference(x, params)
    assert out.shape == (N, C, H, W)
    max_err = float(jnp.max(jnp.abs(out - ref)))
    # bf16 MXU inputs (f32 accumulation / BN math) vs f32 reference.
    assert max_err < 6e-2, f"max abs err {max_err}"
    print("KERNEL_OK")
</pallas_src>

<mosaic_0001>
module attributes {stable_mosaic.version = 11 : i64} {
  func.func @kernel(%arg0: i32, %arg1: memref<1x10x18x128xbf16, #tpu.memory_space<vmem>>, %arg2: memref<1152x128xbf16, #tpu.memory_space<vmem>>, %arg3: memref<1x128x128xf32, #tpu.memory_space<vmem>>, %arg4: memref<1x2x128xf32, #tpu.memory_space<vmem>>) attributes {dimension_semantics = [#tpu.dimension_semantics<parallel>], iteration_bounds = array<i64: 4>, scalar_prefetch = 0 : i64, scratch_operands = 0 : i64, tpu.core_type = #tpu.core_type<tc>, window_params = [{transform_indices = @transform_0, window_bounds = array<i64: 1, 10, 18, 128>}, {pipeline_mode = #tpu.pipeline_mode<synchronous>, transform_indices = @transform_1, window_bounds = array<i64: 1152, 128>}, {transform_indices = @transform_2, window_bounds = array<i64: 1, 128, 128>}, {transform_indices = @transform_3, window_bounds = array<i64: 1, 2, 128>}]} {
    %cst = arith.constant 0.000000e+00 : f32
    %0 = vector.broadcast %cst : f32 to vector<128x128xf32>
    %c0 = arith.constant 0 : index
    %c0_0 = arith.constant 0 : index
    %c0_1 = arith.constant 0 : index
    %c0_2 = arith.constant 0 : index
    %1 = vector.load %arg1[%c0, %c0_0, %c0_1, %c0_2] : memref<1x10x18x128xbf16, #tpu.memory_space<vmem>>, vector<1x8x16x128xbf16>
    %2 = vector.shape_cast %1 : vector<1x8x16x128xbf16> to vector<8x16x128xbf16>
    %3 = vector.shape_cast %2 : vector<8x16x128xbf16> to vector<128x128xbf16>
    %c0_3 = arith.constant 0 : index
    %c0_4 = arith.constant 0 : index
    %4 = vector.load %arg2[%c0_3, %c0_4] : memref<1152x128xbf16, #tpu.memory_space<vmem>>, vector<128x128xbf16>
    %cst_5 = arith.constant dense<0.000000e+00> : vector<128x128xf32>
    %5 = tpu.matmul %3, %4, %cst_5 {dimension_numbers = #tpu.dot_dimension_numbers<[1], [0], [0], [1], [0, 0, 1, 1], [], []>} : vector<128x128xbf16>, vector<128x128xbf16>, vector<128x128xf32> -> vector<128x128xf32>
    %6 = arith.addf %0, %5 : vector<128x128xf32>
    %c0_6 = arith.constant 0 : index
    %c0_7 = arith.constant 0 : index
    %c1 = arith.constant 1 : index
    %c0_8 = arith.constant 0 : index
    %7 = vector.load %arg1[%c0_6, %c0_7, %c1, %c0_8] : memref<1x10x18x128xbf16, #tpu.memory_space<vmem>>, vector<1x8x16x128xbf16>
    %8 = vector.shape_cast %7 : vector<1x8x16x128xbf16> to vector<8x16x128xbf16>
    %9 = vector.shape_cast %8 : vector<8x16x128xbf16> to vector<128x128xbf16>
    %c128 = arith.constant 128 : index
    %c0_9 = arith.constant 0 : index
    %10 = vector.load %arg2[%c128, %c0_9] : memref<1152x128xbf16, #tpu.memory_space<vmem>>, vector<128x128xbf16>
    %cst_10 = arith.constant dense<0.000000e+00> : vector<128x128xf32>
    %11 = tpu.matmul %9, %10, %cst_10 {dimension_numbers = #tpu.dot_dimension_numbers<[1], [0], [0], [1], [0, 0, 1, 1], [], []>} : vector<128x128xbf16>, vector<128x128xbf16>, vector<128x128xf32> -> vector<128x128xf32>
    %12 = arith.addf %6, %11 : vector<128x128xf32>
    %c0_11 = arith.constant 0 : index
    %c0_12 = arith.constant 0 : index
    %c2 = arith.constant 2 : index
    %c0_13 = arith.constant 0 : index
    %13 = vector.load %arg1[%c0_11, %c0_12, %c2, %c0_13] : memref<1x10x18x128xbf16, #tpu.memory_space<vmem>>, vector<1x8x16x128xbf16>
    %14 = vector.shape_cast %13 : vector<1x8x16x128xbf16> to vector<8x16x128xbf16>
    %15 = vector.shape_cast %14 : vector<8x16x128xbf16> to vector<128x128xbf16>
    %c256 = arith.constant 256 : index
    %c0_14 = arith.constant 0 : index
    %16 = vector.load %arg2[%c256, %c0_14] : memref<1152x128xbf16, #tpu.memory_space<vmem>>, vector<128x128xbf16>
    %cst_15 = arith.constant dense<0.000000e+00> : vector<128x128xf32>
    %17 = tpu.matmul %15, %16, %cst_15 {dimension_numbers = #tpu.dot_dimension_numbers<[1], [0], [0], [1], [0, 0, 1, 1], [], []>} : vector<128x128xbf16>, vector<128x128xbf16>, vector<128x128xf32> -> vector<128x128xf32>
    %18 = arith.addf %12, %17 : vector<128x128xf32>
    %c0_16 = arith.constant 0 : index
    %c1_17 = arith.constant 1 : index
    %c0_18 = arith.constant 0 : index
    %c0_19 = arith.constant 0 : index
    %19 = vector.load %arg1[%c0_16, %c1_17, %c0_18, %c0_19] : memref<1x10x18x128xbf16, #tpu.memory_space<vmem>>, vector<1x8x16x128xbf16>
    %20 = vector.shape_cast %19 : vector<1x8x16x128xbf16> to vector<8x16x128xbf16>
    %21 = vector.shape_cast %20 : vector<8x16x128xbf16> to vector<128x128xbf16>
    %c384 = arith.constant 384 : index
    %c0_20 = arith.constant 0 : index
    %22 = vector.load %arg2[%c384, %c0_20] : memref<1152x128xbf16, #tpu.memory_space<vmem>>, vector<128x128xbf16>
    %cst_21 = arith.constant dense<0.000000e+00> : vector<128x128xf32>
    %23 = tpu.matmul %21, %22, %cst_21 {dimension_numbers = #tpu.dot_dimension_numbers<[1], [0], [0], [1], [0, 0, 1, 1], [], []>} : vector<128x128xbf16>, vector<128x128xbf16>, vector<128x128xf32> -> vector<128x128xf32>
    %24 = arith.addf %18, %23 : vector<128x128xf32>
    %c0_22 = arith.constant 0 : index
    %c1_23 = arith.constant 1 : index
    %c1_24 = arith.constant 1 : index
    %c0_25 = arith.constant 0 : index
    %25 = vector.load %arg1[%c0_22, %c1_23, %c1_24, %c0_25] : memref<1x10x18x128xbf16, #tpu.memory_space<vmem>>, vector<1x8x16x128xbf16>
    %26 = vector.shape_cast %25 : vector<1x8x16x128xbf16> to vector<8x16x128xbf16>
    %27 = vector.shape_cast %26 : vector<8x16x128xbf16> to vector<128x128xbf16>
    %c512 = arith.constant 512 : index
    %c0_26 = arith.constant 0 : index
    %28 = vector.load %arg2[%c512, %c0_26] : memref<1152x128xbf16, #tpu.memory_space<vmem>>, vector<128x128xbf16>
    %cst_27 = arith.constant dense<0.000000e+00> : vector<128x128xf32>
    %29 = tpu.matmul %27, %28, %cst_27 {dimension_numbers = #tpu.dot_dimension_numbers<[1], [0], [0], [1], [0, 0, 1, 1], [], []>} : vector<128x128xbf16>, vector<128x128xbf16>, vector<128x128xf32> -> vector<128x128xf32>
    %30 = arith.addf %24, %29 : vector<128x128xf32>
    %c0_28 = arith.constant 0 : index
    %c1_29 = arith.constant 1 : index
    %c2_30 = arith.constant 2 : index
    %c0_31 = arith.constant 0 : index
    %31 = vector.load %arg1[%c0_28, %c1_29, %c2_30, %c0_31] : memref<1x10x18x128xbf16, #tpu.memory_space<vmem>>, vector<1x8x16x128xbf16>
    %32 = vector.shape_cast %31 : vector<1x8x16x128xbf16> to vector<8x16x128xbf16>
    %33 = vector.shape_cast %32 : vector<8x16x128xbf16> to vector<128x128xbf16>
    %c640 = arith.constant 640 : index
    %c0_32 = arith.constant 0 : index
    %34 = vector.load %arg2[%c640, %c0_32] : memref<1152x128xbf16, #tpu.memory_space<vmem>>, vector<128x128xbf16>
    %cst_33 = arith.constant dense<0.000000e+00> : vector<128x128xf32>
    %35 = tpu.matmul %33, %34, %cst_33 {dimension_numbers = #tpu.dot_dimension_numbers<[1], [0], [0], [1], [0, 0, 1, 1], [], []>} : vector<128x128xbf16>, vector<128x128xbf16>, vector<128x128xf32> -> vector<128x128xf32>
    %36 = arith.addf %30, %35 : vector<128x128xf32>
    %c0_34 = arith.constant 0 : index
    %c2_35 = arith.constant 2 : index
    %c0_36 = arith.constant 0 : index
    %c0_37 = arith.constant 0 : index
    %37 = vector.load %arg1[%c0_34, %c2_35, %c0_36, %c0_37] : memref<1x10x18x128xbf16, #tpu.memory_space<vmem>>, vector<1x8x16x128xbf16>
    %38 = vector.shape_cast %37 : vector<1x8x16x128xbf16> to vector<8x16x128xbf16>
    %39 = vector.shape_cast %38 : vector<8x16x128xbf16> to vector<128x128xbf16>
    %c768 = arith.constant 768 : index
    %c0_38 = arith.constant 0 : index
    %40 = vector.load %arg2[%c768, %c0_38] : memref<1152x128xbf16, #tpu.memory_space<vmem>>, vector<128x128xbf16>
    %cst_39 = arith.constant dense<0.000000e+00> : vector<128x128xf32>
    %41 = tpu.matmul %39, %40, %cst_39 {dimension_numbers = #tpu.dot_dimension_numbers<[1], [0], [0], [1], [0, 0, 1, 1], [], []>} : vector<128x128xbf16>, vector<128x128xbf16>, vector<128x128xf32> -> vector<128x128xf32>
    %42 = arith.addf %36, %41 : vector<128x128xf32>
    %c0_40 = arith.constant 0 : index
    %c2_41 = arith.constant 2 : index
    %c1_42 = arith.constant 1 : index
    %c0_43 = arith.constant 0 : index
    %43 = vector.load %arg1[%c0_40, %c2_41, %c1_42, %c0_43] : memref<1x10x18x128xbf16, #tpu.memory_space<vmem>>, vector<1x8x16x128xbf16>
    %44 = vector.shape_cast %43 : vector<1x8x16x128xbf16> to vector<8x16x128xbf16>
    %45 = vector.shape_cast %44 : vector<8x16x128xbf16> to vector<128x128xbf16>
    %c896 = arith.constant 896 : index
    %c0_44 = arith.constant 0 : index
    %46 = vector.load %arg2[%c896, %c0_44] : memref<1152x128xbf16, #tpu.memory_space<vmem>>, vector<128x128xbf16>
    %cst_45 = arith.constant dense<0.000000e+00> : vector<128x128xf32>
    %47 = tpu.matmul %45, %46, %cst_45 {dimension_numbers = #tpu.dot_dimension_numbers<[1], [0], [0], [1], [0, 0, 1, 1], [], []>} : vector<128x128xbf16>, vector<128x128xbf16>, vector<128x128xf32> -> vector<128x128xf32>
    %48 = arith.addf %42, %47 : vector<128x128xf32>
    %c0_46 = arith.constant 0 : index
    %c2_47 = arith.constant 2 : index
    %c2_48 = arith.constant 2 : index
    %c0_49 = arith.constant 0 : index
    %49 = vector.load %arg1[%c0_46, %c2_47, %c2_48, %c0_49] : memref<1x10x18x128xbf16, #tpu.memory_space<vmem>>, vector<1x8x16x128xbf16>
    %50 = vector.shape_cast %49 : vector<1x8x16x128xbf16> to vector<8x16x128xbf16>
    %51 = vector.shape_cast %50 : vector<8x16x128xbf16> to vector<128x128xbf16>
    %c1024 = arith.constant 1024 : index
    %c0_50 = arith.constant 0 : index
    %52 = vector.load %arg2[%c1024, %c0_50] : memref<1152x128xbf16, #tpu.memory_space<vmem>>, vector<128x128xbf16>
    %cst_51 = arith.constant dense<0.000000e+00> : vector<128x128xf32>
    %53 = tpu.matmul %51, %52, %cst_51 {dimension_numbers = #tpu.dot_dimension_numbers<[1], [0], [0], [1], [0, 0, 1, 1], [], []>} : vector<128x128xbf16>, vector<128x128xbf16>, vector<128x128xf32> -> vector<128x128xf32>
    %54 = arith.addf %48, %53 : vector<128x128xf32>
    %c0_52 = arith.constant 0 : index
    %c0_53 = arith.constant 0 : index
    %c0_54 = arith.constant 0 : index
    %55 = vector.load %arg3[%c0_52, %c0_53, %c0_54] : memref<1x128x128xf32, #tpu.memory_space<vmem>>, vector<1x128x128xf32>
    %56 = vector.shape_cast %55 : vector<1x128x128xf32> to vector<128x128xf32>
    %57 = vector.shape_cast %54 : vector<128x128xf32> to vector<1x128x128xf32>
    tpu.vector_store %arg3[%c0_52, %c0_53, %c0_54], %57 {strides = array<i32>} : memref<1x128x128xf32, #tpu.memory_space<vmem>>, vector<1x128x128xf32>,
    %cst_55 = arith.constant dense<0.000000e+00> : vector<128xf32>
    %58 = vector.multi_reduction <add>, %54, %cst_55 [0] : vector<128x128xf32> to vector<128xf32>
    %59 = vector.shape_cast %58 : vector<128xf32> to vector<1x128xf32>
    %c0_56 = arith.constant 0 : index
    %c0_57 = arith.constant 0 : index
    %c0_58 = arith.constant 0 : index
    %60 = vector.load %arg4[%c0_56, %c0_57, %c0_58] : memref<1x2x128xf32, #tpu.memory_space<vmem>>, vector<1x1x128xf32>
    %61 = vector.shape_cast %60 : vector<1x1x128xf32> to vector<1x128xf32>
    %62 = vector.shape_cast %59 : vector<1x128xf32> to vector<1x1x128xf32>
    tpu.vector_store %arg4[%c0_56, %c0_57, %c0_58], %62 {strides = array<i32>} : memref<1x2x128xf32, #tpu.memory_space<vmem>>, vector<1x1x128xf32>,
    %63 = arith.mulf %54, %54 : vector<128x128xf32>
    %cst_59 = arith.constant dense<0.000000e+00> : vector<128xf32>
    %64 = vector.multi_reduction <add>, %63, %cst_59 [0] : vector<128x128xf32> to vector<128xf32>
    %65 = vector.shape_cast %64 : vector<128xf32> to vector<1x128xf32>
    %c0_60 = arith.constant 0 : index
    %c1_61 = arith.constant 1 : index
    %c0_62 = arith.constant 0 : index
    %66 = vector.load %arg4[%c0_60, %c1_61, %c0_62] : memref<1x2x128xf32, #tpu.memory_space<vmem>>, vector<1x1x128xf32>
    %67 = vector.shape_cast %66 : vector<1x1x128xf32> to vector<1x128xf32>
    %68 = vector.shape_cast %65 : vector<1x128xf32> to vector<1x1x128xf32>
    tpu.vector_store %arg4[%c0_60, %c1_61, %c0_62], %68 {strides = array<i32>} : memref<1x2x128xf32, #tpu.memory_space<vmem>>, vector<1x1x128xf32>,
    return
  }
  func.func @transform_0(%arg0: i32) -> (i32, i32, i32, i32) {
    %c0_i32 = arith.constant 0 : i32
    %c0_i32_0 = arith.constant 0 : i32
    %c0_i32_1 = arith.constant 0 : i32
    %c0_i32_2 = arith.constant 0 : i32
    return %arg0, %c0_i32, %c0_i32_0, %c0_i32_1 : i32, i32, i32, i32
  }
  func.func @transform_1(%arg0: i32) -> (i32, i32) {
    %c0_i32 = arith.constant 0 : i32
    %c0_i32_0 = arith.constant 0 : i32
    %c0_i32_1 = arith.constant 0 : i32
    return %c0_i32, %c0_i32_0 : i32, i32
  }
  func.func @transform_2(%arg0: i32) -> (i32, i32, i32) {
    %c0_i32 = arith.constant 0 : i32
    %c0_i32_0 = arith.constant 0 : i32
    %c0_i32_1 = arith.constant 0 : i32
    return %arg0, %c0_i32, %c0_i32_0 : i32, i32, i32
  }
  func.func @transform_3(%arg0: i32) -> (i32, i32, i32) {
    %c0_i32 = arith.constant 0 : i32
    %c0_i32_0 = arith.constant 0 : i32
    %c0_i32_1 = arith.constant 0 : i32
    return %arg0, %c0_i32, %c0_i32_0 : i32, i32, i32
  }
}

module attributes {stable_mosaic.version = 11 : i64} {
  func.func @_bn_relu_kernel(%arg0: i32, %arg1: memref<512x128xf32, #tpu.memory_space<vmem>>, %arg2: memref<1x128xf32, #tpu.memory_space<vmem>>, %arg3: memref<1x128xf32, #tpu.memory_space<vmem>>, %arg4: memref<512x128xbf16, #tpu.memory_space<vmem>>) attributes {dimension_semantics = [#tpu.dimension_semantics<parallel>], iteration_bounds = array<i64: 1>, scalar_prefetch = 0 : i64, scratch_operands = 0 : i64, tpu.core_type = #tpu.core_type<tc>, window_params = [{transform_indices = @transform_0, window_bounds = array<i64: 512, 128>}, {pipeline_mode = #tpu.pipeline_mode<synchronous>, transform_indices = @transform_1, window_bounds = array<i64: 1, 128>}, {pipeline_mode = #tpu.pipeline_mode<synchronous>, transform_indices = @transform_2, window_bounds = array<i64: 1, 128>}, {transform_indices = @transform_3, window_bounds = array<i64: 512, 128>}]} {
    %c0 = arith.constant 0 : index
    %c0_0 = arith.constant 0 : index
    %0 = vector.load %arg1[%c0, %c0_0] : memref<512x128xf32, #tpu.memory_space<vmem>>, vector<512x128xf32>
    %c0_1 = arith.constant 0 : index
    %c0_2 = arith.constant 0 : index
    %1 = vector.load %arg2[%c0_1, %c0_2] : memref<1x128xf32, #tpu.memory_space<vmem>>, vector<1x128xf32>
    %2 = vector.broadcast %1 : vector<1x128xf32> to vector<512x128xf32>
    %3 = arith.mulf %0, %2 : vector<512x128xf32>
    %c0_3 = arith.constant 0 : index
    %c0_4 = arith.constant 0 : index
    %4 = vector.load %arg3[%c0_3, %c0_4] : memref<1x128xf32, #tpu.memory_space<vmem>>, vector<1x128xf32>
    %5 = vector.broadcast %4 : vector<1x128xf32> to vector<512x128xf32>
    %6 = arith.addf %3, %5 : vector<512x128xf32>
    %cst = arith.constant 0.000000e+00 : f32
    %7 = vector.broadcast %cst : f32 to vector<512x128xf32>
    %8 = arith.maximumf %6, %7 : vector<512x128xf32>
    %9 = arith.truncf %8 : vector<512x128xf32> to vector<512x128xbf16>
    %c0_5 = arith.constant 0 : index
    %c0_6 = arith.constant 0 : index
    %10 = vector.load %arg4[%c0_5, %c0_6] : memref<512x128xbf16, #tpu.memory_space<vmem>>, vector<512x128xbf16>
    tpu.vector_store %arg4[%c0_5, %c0_6], %9 {strides = array<i32>} : memref<512x128xbf16, #tpu.memory_space<vmem>>, vector<512x128xbf16>,
    return
  }
  func.func @transform_0(%arg0: i32) -> (i32, i32) {
    %c0_i32 = arith.constant 0 : i32
    %c0_i32_0 = arith.constant 0 : i32
    return %arg0, %c0_i32 : i32, i32
  }
  func.func @transform_1(%arg0: i32) -> (i32, i32) {
    %c0_i32 = arith.constant 0 : i32
    %c0_i32_0 = arith.constant 0 : i32
    %c0_i32_1 = arith.constant 0 : i32
    return %c0_i32, %c0_i32_0 : i32, i32
  }
  func.func @transform_2(%arg0: i32) -> (i32, i32) {
    %c0_i32 = arith.constant 0 : i32
    %c0_i32_0 = arith.constant 0 : i32
    %c0_i32_1 = arith.constant 0 : i32
    return %c0_i32, %c0_i32_0 : i32, i32
  }
  func.func @transform_3(%arg0: i32) -> (i32, i32) {
    %c0_i32 = arith.constant 0 : i32
    %c0_i32_0 = arith.constant 0 : i32
    return %arg0, %c0_i32 : i32, i32
  }
}

module attributes {stable_mosaic.version = 11 : i64} {
  func.func @_bn_add_relu_kernel(%arg0: i32, %arg1: memref<512x128xf32, #tpu.memory_space<vmem>>, %arg2: memref<1x128xf32, #tpu.memory_space<vmem>>, %arg3: memref<1x128xf32, #tpu.memory_space<vmem>>, %arg4: memref<512x128xf32, #tpu.memory_space<vmem>>, %arg5: memref<512x128xf32, #tpu.memory_space<vmem>>) attributes {dimension_semantics = [#tpu.dimension_semantics<parallel>], iteration_bounds = array<i64: 1>, scalar_prefetch = 0 : i64, scratch_operands = 0 : i64, tpu.core_type = #tpu.core_type<tc>, window_params = [{transform_indices = @transform_0, window_bounds = array<i64: 512, 128>}, {pipeline_mode = #tpu.pipeline_mode<synchronous>, transform_indices = @transform_1, window_bounds = array<i64: 1, 128>}, {pipeline_mode = #tpu.pipeline_mode<synchronous>, transform_indices = @transform_2, window_bounds = array<i64: 1, 128>}, {transform_indices = @transform_3, window_bounds = array<i64: 512, 128>}, {transform_indices = @transform_4, window_bounds = array<i64: 512, 128>}]} {
    %c0 = arith.constant 0 : index
    %c0_0 = arith.constant 0 : index
    %0 = vector.load %arg1[%c0, %c0_0] : memref<512x128xf32, #tpu.memory_space<vmem>>, vector<512x128xf32>
    %c0_1 = arith.constant 0 : index
    %c0_2 = arith.constant 0 : index
    %1 = vector.load %arg2[%c0_1, %c0_2] : memref<1x128xf32, #tpu.memory_space<vmem>>, vector<1x128xf32>
    %2 = vector.broadcast %1 : vector<1x128xf32> to vector<512x128xf32>
    %3 = arith.mulf %0, %2 : vector<512x128xf32>
    %c0_3 = arith.constant 0 : index
    %c0_4 = arith.constant 0 : index
    %4 = vector.load %arg3[%c0_3, %c0_4] : memref<1x128xf32, #tpu.memory_space<vmem>>, vector<1x128xf32>
    %5 = vector.broadcast %4 : vector<1x128xf32> to vector<512x128xf32>
    %6 = arith.addf %3, %5 : vector<512x128xf32>
    %c0_5 = arith.constant 0 : index
    %c0_6 = arith.constant 0 : index
    %7 = vector.load %arg4[%c0_5, %c0_6] : memref<512x128xf32, #tpu.memory_space<vmem>>, vector<512x128xf32>
    %8 = arith.addf %6, %7 : vector<512x128xf32>
    %cst = arith.constant 0.000000e+00 : f32
    %9 = vector.broadcast %cst : f32 to vector<512x128xf32>
    %10 = arith.maximumf %8, %9 : vector<512x128xf32>
    %c0_7 = arith.constant 0 : index
    %c0_8 = arith.constant 0 : index
    %11 = vector.load %arg5[%c0_7, %c0_8] : memref<512x128xf32, #tpu.memory_space<vmem>>, vector<512x128xf32>
    tpu.vector_store %arg5[%c0_7, %c0_8], %10 {strides = array<i32>} : memref<512x128xf32, #tpu.memory_space<vmem>>, vector<512x128xf32>,
    return
  }
  func.func @transform_0(%arg0: i32) -> (i32, i32) {
    %c0_i32 = arith.constant 0 : i32
    %c0_i32_0 = arith.constant 0 : i32
    return %arg0, %c0_i32 : i32, i32
  }
  func.func @transform_1(%arg0: i32) -> (i32, i32) {
    %c0_i32 = arith.constant 0 : i32
    %c0_i32_0 = arith.constant 0 : i32
    %c0_i32_1 = arith.constant 0 : i32
    return %c0_i32, %c0_i32_0 : i32, i32
  }
  func.func @transform_2(%arg0: i32) -> (i32, i32) {
    %c0_i32 = arith.constant 0 : i32
    %c0_i32_0 = arith.constant 0 : i32
    %c0_i32_1 = arith.constant 0 : i32
    return %c0_i32, %c0_i32_0 : i32, i32
  }
  func.func @transform_3(%arg0: i32) -> (i32, i32) {
    %c0_i32 = arith.constant 0 : i32
    %c0_i32_0 = arith.constant 0 : i32
    return %arg0, %c0_i32 : i32, i32
  }
  func.func @transform_4(%arg0: i32) -> (i32, i32) {
    %c0_i32 = arith.constant 0 : i32
    %c0_i32_0 = arith.constant 0 : i32
    return %arg0, %c0_i32 : i32, i32
  }
}

</mosaic_0001>

<llo_original>
// kernel: basic_block_forward.5
$region0: #{basic_block_forward.5}
  #allocation0 [shape = 'u32[]', space=smem, size = 0x4, offset = 0x4, fixed_abs, tag = 'smem constant byte address 0x4 - core index']
  #allocation1 [shape = 'u32[144,128]{1,0:T(1,128)}', space=vmem, size = 0x12000, scoped, tag = 'internal scratch']
  %s0 = inlined_call_operand.vmem [shape: f32[512,128], index: 0, kind: input, shape index: {}]
  %s1 = inlined_call_operand.vmem [shape: f32[1,128], index: 1, kind: input, shape index: {}]
  %s2 = inlined_call_operand.vmem [shape: f32[1,128], index: 2, kind: input, shape index: {}]
  %s3 = inlined_call_operand.vmem [shape: bf16[512,128], index: 3, kind: output, shape index: {}]
  %s4 = sld [smem:[#allocation0]]
  $region22: #{basic_block_forward.5} parent=0
    _
  %s6 = ssub.s32 1, %s4
  %s7 = scalar_select 0, %s6, %s4
  // Predicated region
  $region2: #{basic_block_forward.5} parent=0 // pred_check
    _
  $region3: #{basic_block_forward.5} parent=0 // pred_check_branch
    %9 = sbr.rel (0) target = $region5
  $region4: #{basic_block_forward.5} parent=0 // pred_region
    _
  $region5: #{basic_block_forward.5} parent=0 // pred_fallthru
    _
  // Predicated region
  $region6: #{basic_block_forward.5} parent=0 // pred_check
    _
  $region7: #{basic_block_forward.5} parent=0 // pred_check_branch
    %11 = sbr.rel (0) target = $region9
  $region8: #{basic_block_forward.5} parent=0 // pred_region
    _
  $region9: #{basic_block_forward.5} parent=0 // pred_fallthru
    _
  // Predicated region
  $region10: #{basic_block_forward.5} parent=0 // pred_check
    _
  $region11: #{basic_block_forward.5} parent=0 // pred_check_branch
    %13 = sbr.rel (0) target = $region13
  $region12: #{basic_block_forward.5} parent=0 // pred_region
    _
  $region13: #{basic_block_forward.5} parent=0 // pred_fallthru
    _
  %v14 = vld [vmem:[%s0] sm:$0xff]
  %v15 = vld [vmem:[%s0 + $0x8] sm:$0xff]
  %v16 = vld [vmem:[%s0 + $0x10] sm:$0xff]
  %v17 = vld [vmem:[%s0 + $0x18] sm:$0xff]
  %v18 = vld [vmem:[%s0 + $0x20] sm:$0xff]
  %v19 = vld [vmem:[%s0 + $0x28] sm:$0xff]
  %v20 = vld [vmem:[%s0 + $0x30] sm:$0xff]
  %v21 = vld [vmem:[%s0 + $0x38] sm:$0xff]
  %v22 = vld [vmem:[%s0 + $0x40] sm:$0xff]
  %v23 = vld [vmem:[%s0 + $0x48] sm:$0xff]
  %v24 = vld [vmem:[%s0 + $0x50] sm:$0xff]
  %v25 = vld [vmem:[%s0 + $0x58] sm:$0xff]
  %v26 = vld [vmem:[%s0 + $0x60] sm:$0xff]
  %v27 = vld [vmem:[%s0 + $0x68] sm:$0xff]
  %v28 = vld [vmem:[%s0 + $0x70] sm:$0xff]
  %v29 = vld [vmem:[%s0 + $0x78] sm:$0xff]
  %v30 = vld [vmem:[%s0 + $0x80] sm:$0xff]
  %v31 = vld [vmem:[%s0 + $0x88] sm:$0xff]
  %v32 = vld [vmem:[%s0 + $0x90] sm:$0xff]
  %v33 = vld [vmem:[%s0 + $0x98] sm:$0xff]
  %v34 = vld [vmem:[%s0 + $0xa0] sm:$0xff]
  %v35 = vld [vmem:[%s0 + $0xa8] sm:$0xff]
  %v36 = vld [vmem:[%s0 + $0xb0] sm:$0xff]
  %v37 = vld [vmem:[%s0 + $0xb8] sm:$0xff]
  %v38 = vld [vmem:[%s0 + $0xc0] sm:$0xff]
  %v39 = vld [vmem:[%s0 + $0xc8] sm:$0xff]
  %v40 = vld [vmem:[%s0 + $0xd0] sm:$0xff]
  %v41 = vld [vmem:[%s0 + $0xd8] sm:$0xff]
  %v42 = vld [vmem:[%s0 + $0xe0] sm:$0xff]
  %v43 = vld [vmem:[%s0 + $0xe8] sm:$0xff]
  %v44 = vld [vmem:[%s0 + $0xf0] sm:$0xff]
  %v45 = vld [vmem:[%s0 + $0xf8] sm:$0xff]
  %v46 = vld [vmem:[%s0 + $0x100] sm:$0xff]
  %v47 = vld [vmem:[%s0 + $0x108] sm:$0xff]
  %v48 = vld [vmem:[%s0 + $0x110] sm:$0xff]
  %v49 = vld [vmem:[%s0 + $0x118] sm:$0xff]
  %v50 = vld [vmem:[%s0 + $0x120] sm:$0xff]
  %v51 = vld [vmem:[%s0 + $0x128] sm:$0xff]
  %v52 = vld [vmem:[%s0 + $0x130] sm:$0xff]
  %v53 = vld [vmem:[%s0 + $0x138] sm:$0xff]
  %v54 = vld [vmem:[%s0 + $0x140] sm:$0xff]
  %v55 = vld [vmem:[%s0 + $0x148] sm:$0xff]
  %v56 = vld [vmem:[%s0 + $0x150] sm:$0xff]
  %v57 = vld [vmem:[%s0 + $0x158] sm:$0xff]
  %v58 = vld [vmem:[%s0 + $0x160] sm:$0xff]
  %v59 = vld [vmem:[%s0 + $0x168] sm:$0xff]
  %v60 = vld [vmem:[%s0 + $0x170] sm:$0xff]
  %v61 = vld [vmem:[%s0 + $0x178] sm:$0xff]
  %v62 = vld [vmem:[%s0 + $0x180] sm:$0xff]
  %v63 = vld [vmem:[%s0 + $0x188] sm:$0xff]
  %v64 = vld [vmem:[%s0 + $0x190] sm:$0xff]
  %v65 = vld [vmem:[%s0 + $0x198] sm:$0xff]
  %v66 = vld [vmem:[%s0 + $0x1a0] sm:$0xff]
  %v67 = vld [vmem:[%s0 + $0x1a8] sm:$0xff]
  %v68 = vld [vmem:[%s0 + $0x1b0] sm:$0xff]
  %v69 = vld [vmem:[%s0 + $0x1b8] sm:$0xff]
  %v70 = vld [vmem:[%s0 + $0x1c0] sm:$0xff]
  %v71 = vld [vmem:[%s0 + $0x1c8] sm:$0xff]
  %v72 = vld [vmem:[%s0 + $0x1d0] sm:$0xff]
  %v73 = vld [vmem:[%s0 + $0x1d8] sm:$0xff]
  %v74 = vld [vmem:[%s0 + $0x1e0] sm:$0xff]
  %v75 = vld [vmem:[%s0 + $0x1e8] sm:$0xff]
  %v76 = vld [vmem:[%s0 + $0x1f0] sm:$0xff]
  %v77 = vld [vmem:[%s0 + $0x1f8] sm:$0xff]
  %v78 = vld [vmem:[%s1] sm:$0x1]
  %v80 = vlaneseq
  %v81 = vshrl.u32 %v80, 7
  %v82 = vsub.s32 0, %v81
  %v83 = vrot.slane %v78, %v82
  %v85 = vmul.f32 %v14, %v83
  %v86 = vmul.f32 %v15, %v83
  %v87 = vmul.f32 %v16, %v83
  %v88 = vmul.f32 %v17, %v83
  %v89 = vmul.f32 %v18, %v83
  %v90 = vmul.f32 %v19, %v83
  %v91 = vmul.f32 %v20, %v83
  %v92 = vmul.f32 %v21, %v83
  %v93 = vmul.f32 %v22, %v83
  %v94 = vmul.f32 %v23, %v83
  %v95 = vmul.f32 %v24, %v83
  %v96 = vmul.f32 %v25, %v83
  %v97 = vmul.f32 %v26, %v83
  %v98 = vmul.f32 %v27, %v83
  %v99 = vmul.f32 %v28, %v83
  %v100 = vmul.f32 %v29, %v83
  %v101 = vmul.f32 %v30, %v83
  %v102 = vmul.f32 %v31, %v83
  %v103 = vmul.f32 %v32, %v83
  %v104 = vmul.f32 %v33, %v83
  %v105 = vmul.f32 %v34, %v83
  %v106 = vmul.f32 %v35, %v83
  %v107 = vmul.f32 %v36, %v83
  %v108 = vmul.f32 %v37, %v83
  %v109 = vmul.f32 %v38, %v83
  %v110 = vmul.f32 %v39, %v83
  %v111 = vmul.f32 %v40, %v83
  %v112 = vmul.f32 %v41, %v83
  %v113 = vmul.f32 %v42, %v83
  %v114 = vmul.f32 %v43, %v83
  %v115 = vmul.f32 %v44, %v83
  %v116 = vmul.f32 %v45, %v83
  %v117 = vmul.f32 %v46, %v83
  %v118 = vmul.f32 %v47, %v83
  %v119 = vmul.f32 %v48, %v83
  %v120 = vmul.f32 %v49, %v83
  %v121 = vmul.f32 %v50, %v83
  %v122 = vmul.f32 %v51, %v83
  %v123 = vmul.f32 %v52, %v83
  %v124 = vmul.f32 %v53, %v83
  %v125 = vmul.f32 %v54, %v83
  %v126 = vmul.f32 %v55, %v83
  %v127 = vmul.f32 %v56, %v83
  %v128 = vmul.f32 %v57, %v83
  %v129 = vmul.f32 %v58, %v83
  %v130 = vmul.f32 %v59, %v83
  %v131 = vmul.f32 %v60, %v83
  %v132 = vmul.f32 %v61, %v83
  %v133 = vmul.f32 %v62, %v83
  %v134 = vmul.f32 %v63, %v83
  %v135 = vmul.f32 %v64, %v83
  %v136 = vmul.f32 %v65, %v83
  %v137 = vmul.f32 %v66, %v83
  %v138 = vmul.f32 %v67, %v83
  %v139 = vmul.f32 %v68, %v83
  %v140 = vmul.f32 %v69, %v83
  %v141 = vmul.f32 %v70, %v83
  %v142 = vmul.f32 %v71, %v83
  %v143 = vmul.f32 %v72, %v83
  %v144 = vmul.f32 %v73, %v83
  %v145 = vmul.f32 %v74, %v83
  %v146 = vmul.f32 %v75, %v83
  %v147 = vmul.f32 %v76, %v83
  %v148 = vmul.f32 %v77, %v83
  %v149 = vld [vmem:[%s2] sm:$0x1]
  %v151 = vlaneseq
  %v152 = vshrl.u32 %v151, 7
  %v153 = vsub.s32 0, %v152
  %v154 = vrot.slane %v149, %v153
  %v156 = vadd.f32 %v85, %v154
  %v157 = vadd.f32 %v86, %v154
  %v158 = vadd.f32 %v87, %v154
  %v159 = vadd.f32 %v88, %v154
  %v160 = vadd.f32 %v89, %v154
  %v161 = vadd.f32 %v90, %v154
  %v162 = vadd.f32 %v91, %v154
  %v163 = vadd.f32 %v92, %v154
  %v164 = vadd.f32 %v93, %v154
  %v165 = vadd.f32 %v94, %v154
  %v166 = vadd.f32 %v95, %v154
  %v167 = vadd.f32 %v96, %v154
  %v168 = vadd.f32 %v97, %v154
  %v169 = vadd.f32 %v98, %v154
  %v170 = vadd.f32 %v99, %v154
  %v171 = vadd.f32 %v100, %v154
  %v172 = vadd.f32 %v101, %v154
  %v173 = vadd.f32 %v102, %v154
  %v174 = vadd.f32 %v103, %v154
  %v175 = vadd.f32 %v104, %v154
  %v176 = vadd.f32 %v105, %v154
  %v177 = vadd.f32 %v106, %v154
  %v178 = vadd.f32 %v107, %v154
  %v179 = vadd.f32 %v108, %v154
  %v180 = vadd.f32 %v109, %v154
  %v181 = vadd.f32 %v110, %v154
  %v182 = vadd.f32 %v111, %v154
  %v183 = vadd.f32 %v112, %v154
  %v184 = vadd.f32 %v113, %v154
  %v185 = vadd.f32 %v114, %v154
  %v186 = vadd.f32 %v115, %v154
  %v187 = vadd.f32 %v116, %v154
  %v188 = vadd.f32 %v117, %v154
  %v189 = vadd.f32 %v118, %v154
  %v190 = vadd.f32 %v119, %v154
  %v191 = vadd.f32 %v120, %v154
  %v192 = vadd.f32 %v121, %v154
  %v193 = vadd.f32 %v122, %v154
  %v194 = vadd.f32 %v123, %v154
  %v195 = vadd.f32 %v124, %v154
  %v196 = vadd.f32 %v125, %v154
  %v197 = vadd.f32 %v126, %v154
  %v198 = vadd.f32 %v127, %v154
  %v199 = vadd.f32 %v128, %v154
  %v200 = vadd.f32 %v129, %v154
  %v201 = vadd.f32 %v130, %v154
  %v202 = vadd.f32 %v131, %v154
  %v203 = vadd.f32 %v132, %v154
  %v204 = vadd.f32 %v133, %v154
  %v205 = vadd.f32 %v134, %v154
  %v206 = vadd.f32 %v135, %v154
  %v207 = vadd.f32 %v136, %v154
  %v208 = vadd.f32 %v137, %v154
  %v209 = vadd.f32 %v138, %v154
  %v210 = vadd.f32 %v139, %v154
  %v211 = vadd.f32 %v140, %v154
  %v212 = vadd.f32 %v141, %v154
  %v213 = vadd.f32 %v142, %v154
  %v214 = vadd.f32 %v143, %v154
  %v215 = vadd.f32 %v144, %v154
  %v216 = vadd.f32 %v145, %v154
  %v217 = vadd.f32 %v146, %v154
  %v218 = vadd.f32 %v147, %v154
  %v219 = vadd.f32 %v148, %v154
  %v220 = vmax.f32 %v156, 0.0
  %v221 = vmax.f32 %v157, 0.0
  %v222 = vmax.f32 %v158, 0.0
  %v223 = vmax.f32 %v159, 0.0
  %v224 = vmax.f32 %v160, 0.0
  %v225 = vmax.f32 %v161, 0.0
  %v226 = vmax.f32 %v162, 0.0
  %v227 = vmax.f32 %v163, 0.0
  %v228 = vmax.f32 %v164, 0.0
  %v229 = vmax.f32 %v165, 0.0
  %v230 = vmax.f32 %v166, 0.0
  %v231 = vmax.f32 %v167, 0.0
  %v232 = vmax.f32 %v168, 0.0
  %v233 = vmax.f32 %v169, 0.0
  %v234 = vmax.f32 %v170, 0.0
  %v235 = vmax.f32 %v171, 0.0
  %v236 = vmax.f32 %v172, 0.0
  %v237 = vmax.f32 %v173, 0.0
  %v238 = vmax.f32 %v174, 0.0
  %v239 = vmax.f32 %v175, 0.0
  %v240 = vmax.f32 %v176, 0.0
  %v241 = vmax.f32 %v177, 0.0
  %v242 = vmax.f32 %v178, 0.0
  %v243 = vmax.f32 %v179, 0.0
  %v244 = vmax.f32 %v180, 0.0
  %v245 = vmax.f32 %v181, 0.0
  %v246 = vmax.f32 %v182, 0.0
  %v247 = vmax.f32 %v183, 0.0
  %v248 = vmax.f32 %v184, 0.0
  %v249 = vmax.f32 %v185, 0.0
  %v250 = vmax.f32 %v186, 0.0
  %v251 = vmax.f32 %v187, 0.0
  %v252 = vmax.f32 %v188, 0.0
  %v253 = vmax.f32 %v189, 0.0
  %v254 = vmax.f32 %v190, 0.0
  %v255 = vmax.f32 %v191, 0.0
  %v256 = vmax.f32 %v192, 0.0
  %v257 = vmax.f32 %v193, 0.0
  %v258 = vmax.f32 %v194, 0.0
  %v259 = vmax.f32 %v195, 0.0
  %v260 = vmax.f32 %v196, 0.0
  %v261 = vmax.f32 %v197, 0.0
  %v262 = vmax.f32 %v198, 0.0
  %v263 = vmax.f32 %v199, 0.0
  %v264 = vmax.f32 %v200, 0.0
  %v265 = vmax.f32 %v201, 0.0
  %v266 = vmax.f32 %v202, 0.0
  %v267 = vmax.f32 %v203, 0.0
  %v268 = vmax.f32 %v204, 0.0
  %v269 = vmax.f32 %v205, 0.0
  %v270 = vmax.f32 %v206, 0.0
  %v271 = vmax.f32 %v207, 0.0
  %v272 = vmax.f32 %v208, 0.0
  %v273 = vmax.f32 %v209, 0.0
  %v274 = vmax.f32 %v210, 0.0
  %v275 = vmax.f32 %v211, 0.0
  %v276 = vmax.f32 %v212, 0.0
  %v277 = vmax.f32 %v213, 0.0
  %v278 = vmax.f32 %v214, 0.0
  %v279 = vmax.f32 %v215, 0.0
  %v280 = vmax.f32 %v216, 0.0
  %v281 = vmax.f32 %v217, 0.0
  %v282 = vmax.f32 %v218, 0.0
  %v283 = vmax.f32 %v219, 0.0
  %v284 = vpack.c.bf16 %v221, %v220
  %v285 = vpack.c.bf16 %v223, %v222
  %v286 = vpack.c.bf16 %v225, %v224
  %v287 = vpack.c.bf16 %v227, %v226
  %v288 = vpack.c.bf16 %v229, %v228
  %v289 = vpack.c.bf16 %v231, %v230
  %v290 = vpack.c.bf16 %v233, %v232
  %v291 = vpack.c.bf16 %v235, %v234
  %v292 = vpack.c.bf16 %v237, %v236
  %v293 = vpack.c.bf16 %v239, %v238
  %v294 = vpack.c.bf16 %v241, %v240
  %v295 = vpack.c.bf16 %v243, %v242
  %v296 = vpack.c.bf16 %v245, %v244
  %v297 = vpack.c.bf16 %v247, %v246
  %v298 = vpack.c.bf16 %v249, %v248
  %v299 = vpack.c.bf16 %v251, %v250
  %v300 = vpack.c.bf16 %v253, %v252
  %v301 = vpack.c.bf16 %v255, %v254
  %v302 = vpack.c.bf16 %v257, %v256
  %v303 = vpack.c.bf16 %v259, %v258
  %v304 = vpack.c.bf16 %v261, %v260
  %v305 = vpack.c.bf16 %v263, %v262
  %v306 = vpack.c.bf16 %v265, %v264
  %v307 = vpack.c.bf16 %v267, %v266
  %v308 = vpack.c.bf16 %v269, %v268
  %v309 = vpack.c.bf16 %v271, %v270
  %v310 = vpack.c.bf16 %v273, %v272
  %v311 = vpack.c.bf16 %v275, %v274
  %v312 = vpack.c.bf16 %v277, %v276
  %v313 = vpack.c.bf16 %v279, %v278
  %v314 = vpack.c.bf16 %v281, %v280
  %v315 = vpack.c.bf16 %v283, %v282
  %v348 = vunpack.c.l.b16 %v284
  %v349 = vunpack.c.h.b16 %v284
  %v350 = vunpack.c.l.b16 %v285
  %v351 = vunpack.c.h.b16 %v285
  %v352 = vunpack.c.l.b16 %v286
  %v353 = vunpack.c.h.b16 %v286
  %v354 = vunpack.c.l.b16 %v287
  %v355 = vunpack.c.h.b16 %v287
  %v356 = vunpack.c.l.b16 %v288
  %v357 = vunpack.c.h.b16 %v288
  %v358 = vunpack.c.l.b16 %v289
  %v359 = vunpack.c.h.b16 %v289
  %v360 = vunpack.c.l.b16 %v290
  %v361 = vunpack.c.h.b16 %v290
  %v362 = vunpack.c.l.b16 %v291
  %v363 = vunpack.c.h.b16 %v291
  %v364 = vunpack.c.l.b16 %v292
  %v365 = vunpack.c.h.b16 %v292
  %v366 = vunpack.c.l.b16 %v293
  %v367 = vunpack.c.h.b16 %v293
  %v368 = vunpack.c.l.b16 %v294
  %v369 = vunpack.c.h.b16 %v294
  %v370 = vunpack.c.l.b16 %v295
  %v371 = vunpack.c.h.b16 %v295
  %v372 = vunpack.c.l.b16 %v296
  %v373 = vunpack.c.h.b16 %v296
  %v374 = vunpack.c.l.b16 %v297
  %v375 = vunpack.c.h.b16 %v297
  %v376 = vunpack.c.l.b16 %v298
  %v377 = vunpack.c.h.b16 %v298
  %v378 = vunpack.c.l.b16 %v299
  %v379 = vunpack.c.h.b16 %v299
  %v380 = vunpack.c.l.b16 %v300
  %v381 = vunpack.c.h.b16 %v300
  %v382 = vunpack.c.l.b16 %v301
  %v383 = vunpack.c.h.b16 %v301
  %v384 = vunpack.c.l.b16 %v302
  %v385 = vunpack.c.h.b16 %v302
  %v386 = vunpack.c.l.b16 %v303
  %v387 = vunpack.c.h.b16 %v303
  %v388 = vunpack.c.l.b16 %v304
  %v389 = vunpack.c.h.b16 %v304
  %v390 = vunpack.c.l.b16 %v305
  %v391 = vunpack.c.h.b16 %v305
  %v392 = vunpack.c.l.b16 %v306
  %v393 = vunpack.c.h.b16 %v306
  %v394 = vunpack.c.l.b16 %v307
  %v395 = vunpack.c.h.b16 %v307
  %v396 = vunpack.c.l.b16 %v308
  %v397 = vunpack.c.h.b16 %v308
  %v398 = vunpack.c.l.b16 %v309
  %v399 = vunpack.c.h.b16 %v309
  %v400 = vunpack.c.l.b16 %v310
  %v401 = vunpack.c.h.b16 %v310
  %v402 = vunpack.c.l.b16 %v311
  %v403 = vunpack.c.h.b16 %v311
  %v404 = vunpack.c.l.b16 %v312
  %v405 = vunpack.c.h.b16 %v312
  %v406 = vunpack.c.l.b16 %v313
  %v407 = vunpack.c.h.b16 %v313
  %v408 = vunpack.c.l.b16 %v314
  %v409 = vunpack.c.h.b16 %v314
  %v410 = vunpack.c.l.b16 %v315
  %v411 = vunpack.c.h.b16 %v315
  %v412 = vpack.c.b16 %v348, %v348
  %v413 = vpack.c.b16 %v349, %v349
  %v414 = vpack.c.b16 %v350, %v350
  %v415 = vpack.c.b16 %v351, %v351
  %v416 = vpack.c.b16 %v352, %v352
  %v417 = vpack.c.b16 %v353, %v353
  %v418 = vpack.c.b16 %v354, %v354
  %v419 = vpack.c.b16 %v355, %v355
  %v420 = vpack.c.b16 %v356, %v356
  %v421 = vpack.c.b16 %v357, %v357
  %v422 = vpack.c.b16 %v358, %v358
  %v423 = vpack.c.b16 %v359, %v359
  %v424 = vpack.c.b16 %v360, %v360
  %v425 = vpack.c.b16 %v361, %v361
  %v426 = vpack.c.b16 %v362, %v362
  %v427 = vpack.c.b16 %v363, %v363
  %v428 = vpack.c.b16 %v364, %v364
  %v429 = vpack.c.b16 %v365, %v365
  %v430 = vpack.c.b16 %v366, %v366
  %v431 = vpack.c.b16 %v367, %v367
  %v432 = vpack.c.b16 %v368, %v368
  %v433 = vpack.c.b16 %v369, %v369
  %v434 = vpack.c.b16 %v370, %v370
  %v435 = vpack.c.b16 %v371, %v371
  %v436 = vpack.c.b16 %v372, %v372
  %v437 = vpack.c.b16 %v373, %v373
  %v438 = vpack.c.b16 %v374, %v374
  %v439 = vpack.c.b16 %v375, %v375
  %v440 = vpack.c.b16 %v376, %v376
  %v441 = vpack.c.b16 %v377, %v377
  %v442 = vpack.c.b16 %v378, %v378
  %v443 = vpack.c.b16 %v379, %v379
  %v444 = vpack.c.b16 %v380, %v380
  %v445 = vpack.c.b16 %v381, %v381
  %v446 = vpack.c.b16 %v382, %v382
  %v447 = vpack.c.b16 %v383, %v383
  %v448 = vpack.c.b16 %v384, %v384
  %v449 = vpack.c.b16 %v385, %v385
  %v450 = vpack.c.b16 %v386, %v386
  %v451 = vpack.c.b16 %v387, %v387
  %v452 = vpack.c.b16 %v388, %v388
  %v453 = vpack.c.b16 %v389, %v389
  %v454 = vpack.c.b16 %v390, %v390
  %v455 = vpack.c.b16 %v391, %v391
  %v456 = vpack.c.b16 %v392, %v392
  %v457 = vpack.c.b16 %v393, %v393
  %v458 = vpack.c.b16 %v394, %v394
  %v459 = vpack.c.b16 %v395, %v395
  %v460 = vpack.c.b16 %v396, %v396
  %v461 = vpack.c.b16 %v397, %v397
  %v462 = vpack.c.b16 %v398, %v398
  %v463 = vpack.c.b16 %v399, %v399
  %v464 = vpack.c.b16 %v400, %v400
  %v465 = vpack.c.b16 %v401, %v401
  %v466 = vpack.c.b16 %v402, %v402
  %v467 = vpack.c.b16 %v403, %v403
  %v468 = vpack.c.b16 %v404, %v404
  %v469 = vpack.c.b16 %v405, %v405
  %v470 = vpack.c.b16 %v406, %v406
  %v471 = vpack.c.b16 %v407, %v407
  %v472 = vpack.c.b16 %v408, %v408
  %v473 = vpack.c.b16 %v409, %v409
  %v474 = vpack.c.b16 %v410, %v410
  %v475 = vpack.c.b16 %v411, %v411
  %540 = vst [vmem:[%s3] sm:$0xf] %v412
  %541 = vst [vmem:[%s3 + $0x4] sm:$0xf] %v413
  %542 = vst [vmem:[%s3 + $0x8] sm:$0xf] %v414
  %543 = vst [vmem:[%s3 + $0xc] sm:$0xf] %v415
  %544 = vst [vmem:[%s3 + $0x10] sm:$0xf] %v416
  %545 = vst [vmem:[%s3 + $0x14] sm:$0xf] %v417
  %546 = vst [vmem:[%s3 + $0x18] sm:$0xf] %v418
  %547 = vst [vmem:[%s3 + $0x1c] sm:$0xf] %v419
  %548 = vst [vmem:[%s3 + $0x20] sm:$0xf] %v420
  %549 = vst [vmem:[%s3 + $0x24] sm:$0xf] %v421
  %550 = vst [vmem:[%s3 + $0x28] sm:$0xf] %v422
  %551 = vst [vmem:[%s3 + $0x2c] sm:$0xf] %v423
  %552 = vst [vmem:[%s3 + $0x30] sm:$0xf] %v424
  %553 = vst [vmem:[%s3 + $0x34] sm:$0xf] %v425
  %554 = vst [vmem:[%s3 + $0x38] sm:$0xf] %v426
  %555 = vst [vmem:[%s3 + $0x3c] sm:$0xf] %v427
  %556 = vst [vmem:[%s3 + $0x40] sm:$0xf] %v428
  %557 = vst [vmem:[%s3 + $0x44] sm:$0xf] %v429
  %558 = vst [vmem:[%s3 + $0x48] sm:$0xf] %v430
  %559 = vst [vmem:[%s3 + $0x4c] sm:$0xf] %v431
  %560 = vst [vmem:[%s3 + $0x50] sm:$0xf] %v432
  %561 = vst [vmem:[%s3 + $0x54] sm:$0xf] %v433
  %562 = vst [vmem:[%s3 + $0x58] sm:$0xf] %v434
  %563 = vst [vmem:[%s3 + $0x5c] sm:$0xf] %v435
  %564 = vst [vmem:[%s3 + $0x60] sm:$0xf] %v436
  %565 = vst [vmem:[%s3 + $0x64] sm:$0xf] %v437
  %566 = vst [vmem:[%s3 + $0x68] sm:$0xf] %v438
  %567 = vst [vmem:[%s3 + $0x6c] sm:$0xf] %v439
  %568 = vst [vmem:[%s3 + $0x70] sm:$0xf] %v440
  %569 = vst [vmem:[%s3 + $0x74] sm:$0xf] %v441
  %570 = vst [vmem:[%s3 + $0x78] sm:$0xf] %v442
  %571 = vst [vmem:[%s3 + $0x7c] sm:$0xf] %v443
  %572 = vst [vmem:[%s3 + $0x80] sm:$0xf] %v444
  %573 = vst [vmem:[%s3 + $0x84] sm:$0xf] %v445
  %574 = vst [vmem:[%s3 + $0x88] sm:$0xf] %v446
  %575 = vst [vmem:[%s3 + $0x8c] sm:$0xf] %v447
  %576 = vst [vmem:[%s3 + $0x90] sm:$0xf] %v448
  %577 = vst [vmem:[%s3 + $0x94] sm:$0xf] %v449
  %578 = vst [vmem:[%s3 + $0x98] sm:$0xf] %v450
  %579 = vst [vmem:[%s3 + $0x9c] sm:$0xf] %v451
  %580 = vst [vmem:[%s3 + $0xa0] sm:$0xf] %v452
  %581 = vst [vmem:[%s3 + $0xa4] sm:$0xf] %v453
  %582 = vst [vmem:[%s3 + $0xa8] sm:$0xf] %v454
  %583 = vst [vmem:[%s3 + $0xac] sm:$0xf] %v455
  %584 = vst [vmem:[%s3 + $0xb0] sm:$0xf] %v456
  %585 = vst [vmem:[%s3 + $0xb4] sm:$0xf] %v457
  %586 = vst [vmem:[%s3 + $0xb8] sm:$0xf] %v458
  %587 = vst [vmem:[%s3 + $0xbc] sm:$0xf] %v459
  %588 = vst [vmem:[%s3 + $0xc0] sm:$0xf] %v460
  %589 = vst [vmem:[%s3 + $0xc4] sm:$0xf] %v461
  %590 = vst [vmem:[%s3 + $0xc8] sm:$0xf] %v462
  %591 = vst [vmem:[%s3 + $0xcc] sm:$0xf] %v463
  %592 = vst [vmem:[%s3 + $0xd0] sm:$0xf] %v464
  %593 = vst [vmem:[%s3 + $0xd4] sm:$0xf] %v465
  %594 = vst [vmem:[%s3 + $0xd8] sm:$0xf] %v466
  %595 = vst [vmem:[%s3 + $0xdc] sm:$0xf] %v467
  %596 = vst [vmem:[%s3 + $0xe0] sm:$0xf] %v468
  %597 = vst [vmem:[%s3 + $0xe4] sm:$0xf] %v469
  %598 = vst [vmem:[%s3 + $0xe8] sm:$0xf] %v470
  %599 = vst [vmem:[%s3 + $0xec] sm:$0xf] %v471
  %600 = vst [vmem:[%s3 + $0xf0] sm:$0xf] %v472
  %601 = vst [vmem:[%s3 + $0xf4] sm:$0xf] %v473
  %602 = vst [vmem:[%s3 + $0xf8] sm:$0xf] %v474
  %603 = vst [vmem:[%s3 + $0xfc] sm:$0xf] %v475
  // Predicated region
  $region14: #{basic_block_forward.5} parent=0 // pred_check
    _
  $region15: #{basic_block_forward.5} parent=0 // pred_check_branch
    %605 = sbr.rel (0) target = $region17
  $region16: #{basic_block_forward.5} parent=0 // pred_region
    _
  $region17: #{basic_block_forward.5} parent=0 // pred_fallthru
    _
  // Predicated region
  $region18: #{basic_block_forward.5} parent=0 // pred_check
    _
  $region19: #{basic_block_forward.5} parent=0 // pred_check_branch
    %607 = sbr.rel (0) target = $region21
  $region20: #{basic_block_forward.5} parent=0 // pred_region
    _
  $region21: #{basic_block_forward.5} parent=0 // pred_fallthru
    _

// kernel: basic_block_forward.4
$region0: #{basic_block_forward.4}
  #allocation0 [shape = 'u32[]', space=smem, size = 0x4, offset = 0x4, fixed_abs, tag = 'smem constant byte address 0x4 - core index']
  #allocation1 [shape = 'u32[144,128]{1,0:T(1,128)}', space=vmem, size = 0x12000, scoped, tag = 'internal scratch']
  %s0 = inlined_call_operand.vmem [shape: bf16[4,10,18,128], index: 0, kind: input, shape index: {}]
  %s1 = inlined_call_operand.vmem [shape: bf16[1152,128], index: 1, kind: input, shape index: {}]
  %s2 = inlined_call_operand.vmem [shape: f32[4,128,128], index: 2, kind: output, shape index: {0}]
  %s3 = inlined_call_operand.vmem [shape: f32[4,2,128], index: 3, kind: output, shape index: {1}]
  %4 = xla_tuple %s2, %s3
  %s5 = sld [smem:[#allocation0]]
  $region49: #{basic_block_forward.4} parent=0
    _
  %s7 = ssub.s32 1, %s5
  %s8 = scalar_select 0, %s7, %s5
  loop: start=0, step=1, limit=6
  $region2: #{basic_block_forward.4} parent=0 // loop_pre_header
    _
  $region3: #{basic_block_forward.4} parent=0 // loop_header
    %s10 = sphi 0, %s14
    %p11 = scmp.ge.s32.totalorder %s10, 6
    %s20 = sphi 0, %s22
    %s23 = sphi 0, %s20
    %s24 = sphi 0, %s23
    %s40 = sphi 0, %s24
    %s44 = sphi 0, %s44
    %s46 = sphi 0, %s44
    %s47 = sphi 0, %s46
    %s61 = sphi 0, %s47
    %s67 = sphi 0, %s69
    %s70 = sphi 0, %s67
    %s71 = sphi 0, %s70
    %s87 = sphi 0, %s71
    %s93 = sphi 0, %s95
    %s96 = sphi 0, %s93
    %s97 = sphi 0, %s96
    %s113 = sphi 0, %s97
  $region4: #{basic_block_forward.4} parent=0 // loop_header_branch
    %13 = sbr.rel (%p11) target = $region8
  $region5: #{basic_block_forward.4} parent=0 // loop_body
    %s15 = ssub.s32 %s10, 1
    %s16 = ssub.s32 %s10, 2
    %s17 = sadd.s32 %s10, 1
    %s18 = ssub.s32 %s10, %s17
    %p19 = scmp.eq.s32.totalorder %s18, 0
    %s21 = sadd.s32 %s20, 1
    %s22 = scalar_select %p19, %s20, %s21
    %p25 = pneg %p19
    %p26 = scmp.eq.s32.totalorder %s10, 3
    %p27 = por %p25, %p26
    %p28 = scmp.ne.s32.totalorder %s20, %s23
    %p29 = scmp.eq.s32.totalorder %s10, 0
    %p30 = por %p28, %p29
    %p31 = scmp.ne.s32.totalorder %s20, %s23
    %p32 = scmp.eq.s32.totalorder %s15, 3
    %p33 = por %p31, %p32
    %p34 = scmp.ne.s32.totalorder %s23, %s24
    %p35 = scmp.eq.s32.totalorder %s15, 0
    %p36 = por %p34, %p35
    %p37 = scmp.ne.s32.totalorder %s23, %s24
    %p38 = scmp.eq.s32.totalorder %s16, 3
    %p39 = por %p37, %p38
    %p41 = scmp.ne.s32.totalorder %s24, %s40
    %p42 = scmp.eq.s32.totalorder %s16, 0
    %p43 = por %p41, %p42
    %s45 = sadd.s32 %s44, 1
    %p48 = scmp.eq.s32.totalorder %s10, 3
    %p49 = scmp.ne.s32.totalorder %s44, %s46
    %p50 = scmp.eq.s32.totalorder %s10, 0
    %p51 = por %p49, %p50
    %p52 = scmp.ne.s32.totalorder %s44, %s46
    %p53 = scmp.eq.s32.totalorder %s15, 3
    %p54 = por %p52, %p53
    %p55 = scmp.ne.s32.totalorder %s46, %s47
    %p56 = scmp.eq.s32.totalorder %s15, 0
    %p57 = por %p55, %p56
    %p58 = scmp.ne.s32.totalorder %s46, %s47
    %p59 = scmp.eq.s32.totalorder %s16, 3
    %p60 = por %p58, %p59
    %p62 = scmp.ne.s32.totalorder %s47, %s61
    %p63 = scmp.eq.s32.totalorder %s16, 0
    %p64 = por %p62, %p63
    %s65 = ssub.s32 %s10, %s17
    %p66 = scmp.eq.s32.totalorder %s65, 0
    %s68 = sadd.s32 %s67, 1
    %s69 = scalar_select %p66, %s67, %s68
    %p72 = pneg %p66
    %p73 = scmp.eq.s32.totalorder %s10, 3
    %p74 = por %p72, %p73
    %p75 = scmp.ne.s32.totalorder %s67, %s70
    %p76 = scmp.eq.s32.totalorder %s10, 0
    %p77 = por %p75, %p76
    %p78 = scmp.ne.s32.totalorder %s67, %s70
    %p79 = scmp.eq.s32.totalorder %s15, 3
    %p80 = por %p78, %p79
    %p81 = scmp.ne.s32.totalorder %s70, %s71
    %p82 = scmp.eq.s32.totalorder %s15, 0
    %p83 = por %p81, %p82
    %p84 = scmp.ne.s32.totalorder %s70, %s71
    %p85 = scmp.eq.s32.totalorder %s16, 3
    %p86 = por %p84, %p85
    %p88 = scmp.ne.s32.totalorder %s71, %s87
    %p89 = scmp.eq.s32.totalorder %s16, 0
    %p90 = por %p88, %p89
    %s91 = ssub.s32 %s10, %s17
    %p92 = scmp.eq.s32.totalorder %s91, 0
    %s94 = sadd.s32 %s93, 1
    %s95 = scalar_select %p92, %s93, %s94
    %p98 = pneg %p92
    %p99 = scmp.eq.s32.totalorder %s10, 3
    %p100 = por %p98, %p99
    %p101 = scmp.ne.s32.totalorder %s93, %s96
    %p102 = scmp.eq.s32.totalorder %s10, 0
    %p103 = por %p101, %p102
    %p104 = scmp.ne.s32.totalorder %s93, %s96
    %p105 = scmp.eq.s32.totalorder %s15, 3
    %p106 = por %p104, %p105
    %p107 = scmp.ne.s32.totalorder %s96, %s97
    %p108 = scmp.eq.s32.totalorder %s15, 0
    %p109 = por %p107, %p108
    %p110 = scmp.ne.s32.totalorder %s96, %s97
    %p111 = scmp.eq.s32.totalorder %s16, 3
    %p112 = por %p110, %p111
    %p114 = scmp.ne.s32.totalorder %s97, %s113
    %p115 = scmp.eq.s32.totalorder %s16, 0
    %p116 = por %p114, %p115
    %p117 = scmp.le.s32.totalorder 1, %s10
    %p118 = scmp.lt.s32.totalorder %s10, 5
    %p119 = pnand %p117, %p118
    %p120 = pneg %p119
    // Predicated region
    $region9: #{basic_block_forward.4} parent=5 // pred_check
      _
    $region10: #{basic_block_forward.4} parent=5 // pred_check_branch
      %122 = sbr.rel (%p119) target = $region12
    $region11: #{basic_block_forward.4} parent=5 // pred_region
      %s123 = ssub.s32 %s10, 1
      // Predicated region
      $region13: #{basic_block_forward.4} parent=11 // pred_check
        %p124 = pneg %p57
      $region14: #{basic_block_forward.4} parent=11 // pred_check_branch
        %126 = sbr.rel (%p124) target = $region16
      $region15: #{basic_block_forward.4} parent=11 // pred_region
        _
      $region16: #{basic_block_forward.4} parent=11 // pred_fallthru
        _
    $region12: #{basic_block_forward.4} parent=5 // pred_fallthru
      _
    %p127 = scmp.lt.s32.totalorder %s10, 4
    // Predicated region
    $region17: #{basic_block_forward.4} parent=5 // pred_check
      %p128 = pneg %p127
    $region18: #{basic_block_forward.4} parent=5 // pred_check_branch
      %130 = sbr.rel (%p128) target = $region20
    $region19: #{basic_block_forward.4} parent=5 // pred_region
      // Predicated region
      $region21: #{basic_block_forward.4} parent=19 // pred_check
        %p131 = pneg %p30
      $region22: #{basic_block_forward.4} parent=19 // pred_check_branch
        %133 = sbr.rel (%p131) target = $region24
      $region23: #{basic_block_forward.4} parent=19 // pred_region
        %p134 = scmp.lt.s32.totalorder %s10, 3
        %s135 = scalar_select %p134, %s10, 3
        %s136 = smul.addr %s135, 30
        %s137 = smul.addr %s136, 4
        %s138 = scalar_lea.vmem %s0, %s137
      $region24: #{basic_block_forward.4} parent=19 // pred_fallthru
        _
    $region20: #{basic_block_forward.4} parent=5 // pred_fallthru
      _
    %p139 = scmp.le.s32.totalorder 1, %s10
    %p140 = scmp.lt.s32.totalorder %s10, 5
    %p141 = pnand %p139, %p140
    %p142 = pneg %p141
    // Predicated region
    $region25: #{basic_block_forward.4} parent=5 // pred_check
      _
    $region26: #{basic_block_forward.4} parent=5 // pred_check_branch
      %144 = sbr.rel (%p141) target = $region28
    $region27: #{basic_block_forward.4} parent=5 // pred_region
      %s145 = ssub.s32 %s10, 1
      %p146 = scmp.lt.s32.totalorder %s15, 3
      %s147 = scalar_select %p146, %s15, 3
      %s148 = smul.addr %s147, 30
      %s149 = smul.addr %s148, 4
      %s150 = scalar_lea.vmem %s0, %s149
      %p151 = pneg %p36
      %p152 = pneg %p33
      %p153 = pneg %p57
      %p154 = pneg %p54
      %p155 = pneg %p83
      %p156 = pneg %p80
      %p157 = scmp.lt.s32.totalorder %s15, 3
      %s158 = scalar_select %p157, %s15, 3
      %s159 = smul.addr %s158, 16
      %s160 = smul.addr %s159, 8
      %s161 = scalar_lea.vmem %s2, %s160
      %p162 = pneg %p109
      %p163 = pneg %p106
      %p164 = scmp.lt.s32.totalorder %s15, 3
      %s165 = scalar_select %p164, %s15, 3
      %s166 = smul.addr %s165, 2
      %s167 = scalar_lea.vmem %s3, %s166
      %p168 = scmp.lt.s32.totalorder %s15, 3
      %s169 = scalar_select %p168, %s15, 3
      %s170 = smul.addr %s169, 30
      %s171 = smul.addr %s170, 4
      %s172 = scalar_lea.vmem %s0, %s171
      %p173 = scmp.lt.s32.totalorder %s15, 3
      %s174 = scalar_select %p173, %s15, 3
      %s175 = smul.addr %s174, 16
      %s176 = smul.addr %s175, 8
      %s177 = scalar_lea.vmem %s2, %s176
      %p178 = scmp.lt.s32.totalorder %s15, 3
      %s179 = scalar_select %p178, %s15, 3
      %s180 = smul.addr %s179, 2
      %s181 = scalar_lea.vmem %s3, %s180
      %v183 = vld [vmem:[%s172] sm:$0xf]
      %v184 = vld [vmem:[%s172 + $0x4] sm:$0xf]
      %v185 = vld [vmem:[%s172 + $0xc] sm:$0xf]
      %v186 = vld [vmem:[%s172 + $0x10] sm:$0xf]
      %v187 = vld [vmem:[%s172 + $0x18] sm:$0xf]
      %v188 = vld [vmem:[%s172 + $0x1c] sm:$0xf]
      %v189 = vld [vmem:[%s172 + $0x24] sm:$0xf]
      %v190 = vld [vmem:[%s172 + $0x28] sm:$0xf]
      %v191 = vld [vmem:[%s172 + $0x30] sm:$0xf]
      %v192 = vld [vmem:[%s172 + $0x34] sm:$0xf]
      %v193 = vld [vmem:[%s172 + $0x3c] sm:$0xf]
      %v194 = vld [vmem:[%s172 + $0x40] sm:$0xf]
      %v195 = vld [vmem:[%s172 + $0x48] sm:$0xf]
      %v196 = vld [vmem:[%s172 + $0x4c] sm:$0xf]
      %v197 = vld [vmem:[%s172 + $0x54] sm:$0xf]
      %v198 = vld [vmem:[%s172 + $0x58] sm:$0xf]
      %v199 = vld [vmem:[%s1] sm:$0xf]
      %v200 = vld [vmem:[%s1 + $0x4] sm:$0xf]
      %v201 = vld [vmem:[%s1 + $0x8] sm:$0xf]
      %v202 = vld [vmem:[%s1 + $0xc] sm:$0xf]
      %v203 = vld [vmem:[%s1 + $0x10] sm:$0xf]
      %v204 = vld [vmem:[%s1 + $0x14] sm:$0xf]
      %v205 = vld [vmem:[%s1 + $0x18] sm:$0xf]
      %v206 = vld [vmem:[%s1 + $0x1c] sm:$0xf]
      %v207 = vld [vmem:[%s1 + $0x20] sm:$0xf]
      %v208 = vld [vmem:[%s1 + $0x24] sm:$0xf]
      %v209 = vld [vmem:[%s1 + $0x28] sm:$0xf]
      %v210 = vld [vmem:[%s1 + $0x2c] sm:$0xf]
      %v211 = vld [vmem:[%s1 + $0x30] sm:$0xf]
      %v212 = vld [vmem:[%s1 + $0x34] sm:$0xf]
      %v213 = vld [vmem:[%s1 + $0x38] sm:$0xf]
      %v214 = vld [vmem:[%s1 + $0x3c] sm:$0xf]
      %v215 = vld [vmem:[%s172 + $0x8] sm:$0x1]
      %v216 = vld [vmem:[%s172 + $0x14] sm:$0x1]
      %v217 = vld [vmem:[%s172 + $0x20] sm:$0x1]
      %v218 = vld [vmem:[%s172 + $0x2c] sm:$0x1]
      %v219 = vld [vmem:[%s172 + $0x38] sm:$0x1]
      %v220 = vld [vmem:[%s172 + $0x44] sm:$0x1]
      %v221 = vld [vmem:[%s172 + $0x50] sm:$0x1]
      %v222 = vld [vmem:[%s172 + $0x5c] sm:$0x1]
      %vm223 = vsmask.f32 3328
      %vm224 = vsmask.f32 7440
      %vm225 = vmor %vm223, %vm224
      %v227 = vshrl.u32 %v183, 16
      %v229 = vrot.slane %v227, 4
      %v230 = vshll.u32 %v183, 16
      %v232 = vrot.slane %v230, 5
      %v233 = vor.u32 %v229, %v232
      %v234 = vrot.slane %v233, 4
      %v236 = vshll.u32 %v184, 16
      %v238 = vrot.slane %v236, 5
      %v239 = vsel %vm225, %v234, %v238
      %v240 = vshrl.u32 %v184, 16
      %v242 = vrot.slane %v240, 4
      %v243 = vor.u32 %v242, %v238
      %v244 = vrot.slane %v243, 4
      %v246 = vshll.u32 %v215, 16
      %v248 = vrot.slane %v246, 5
      %v249 = vsel %vm225, %v244, %v248
      %v251 = vshrl.u32 %v185, 16
      %v253 = vrot.slane %v251, 4
      %v254 = vshll.u32 %v185, 16
      %v256 = vrot.slane %v254, 5
      %v257 = vor.u32 %v253, %v256
      %v258 = vrot.slane %v257, 4
      %v260 = vshll.u32 %v186, 16
      %v262 = vrot.slane %v260, 5
      %v263 = vsel %vm225, %v258, %v262
      %v264 = vshrl.u32 %v186, 16
      %v266 = vrot.slane %v264, 4
      %v267 = vor.u32 %v266, %v262
      %v268 = vrot.slane %v267, 4
      %v270 = vshll.u32 %v216, 16
      %v272 = vrot.slane %v270, 5
      %v273 = vsel %vm225, %v268, %v272
      %v275 = vshrl.u32 %v187, 16
      %v277 = vrot.slane %v275, 4
      %v278 = vshll.u32 %v187, 16
      %v280 = vrot.slane %v278, 5
      %v281 = vor.u32 %v277, %v280
      %v282 = vrot.slane %v281, 4
      %v284 = vshll.u32 %v188, 16
      %v286 = vrot.slane %v284, 5
      %v287 = vsel %vm225, %v282, %v286
      %v288 = vshrl.u32 %v188, 16
      %v290 = vrot.slane %v288, 4
      %v291 = vor.u32 %v290, %v286
      %v292 = vrot.slane %v291, 4
      %v294 = vshll.u32 %v217, 16
      %v296 = vrot.slane %v294, 5
      %v297 = vsel %vm225, %v292, %v296
      %v299 = vshrl.u32 %v189, 16
      %v301 = vrot.slane %v299, 4
      %v302 = vshll.u32 %v189, 16
      %v304 = vrot.slane %v302, 5
      %v305 = vor.u32 %v301, %v304
      %v306 = vrot.slane %v305, 4
      %v308 = vshll.u32 %v190, 16
      %v310 = vrot.slane %v308, 5
      %v311 = vsel %vm225, %v306, %v310
      %v312 = vshrl.u32 %v190, 16
      %v314 = vrot.slane %v312, 4
      %v315 = vor.u32 %v314, %v310
      %v316 = vrot.slane %v315, 4
      %v318 = vshll.u32 %v218, 16
      %v320 = vrot.slane %v318, 5
      %v321 = vsel %vm225, %v316, %v320
      %v323 = vshrl.u32 %v191, 16
      %v325 = vrot.slane %v323, 4
      %v326 = vshll.u32 %v191, 16
      %v328 = vrot.slane %v326, 5
      %v329 = vor.u32 %v325, %v328
      %v330 = vrot.slane %v329, 4
      %v332 = vshll.u32 %v192, 16
      %v334 = vrot.slane %v332, 5
      %v335 = vsel %vm225, %v330, %v334
      %v336 = vshrl.u32 %v192, 16
      %v338 = vrot.slane %v336, 4
      %v339 = vor.u32 %v338, %v334
      %v340 = vrot.slane %v339, 4
      %v342 = vshll.u32 %v219, 16
      %v344 = vrot.slane %v342, 5
      %v345 = vsel %vm225, %v340, %v344
      %v347 = vshrl.u32 %v193, 16
      %v349 = vrot.slane %v347, 4
      %v350 = vshll.u32 %v193, 16
      %v352 = vrot.slane %v350, 5
      %v353 = vor.u32 %v349, %v352
      %v354 = vrot.slane %v353, 4
      %v356 = vshll.u32 %v194, 16
      %v358 = vrot.slane %v356, 5
      %v359 = vsel %vm225, %v354, %v358
      %v360 = vshrl.u32 %v194, 16
      %v362 = vrot.slane %v360, 4
      %v363 = vor.u32 %v362, %v358
      %v364 = vrot.slane %v363, 4
      %v366 = vshll.u32 %v220, 16
      %v368 = vrot.slane %v366, 5
      %v369 = vsel %vm225, %v364, %v368
      %v371 = vshrl.u32 %v195, 16
      %v373 = vrot.slane %v371, 4
      %v374 = vshll.u32 %v195, 16
      %v376 = vrot.slane %v374, 5
      %v377 = vor.u32 %v373, %v376
      %v378 = vrot.slane %v377, 4
      %v380 = vshll.u32 %v196, 16
      %v382 = vrot.slane %v380, 5
      %v383 = vsel %vm225, %v378, %v382
      %v384 = vshrl.u32 %v196, 16
      %v386 = vrot.slane %v384, 4
      %v387 = vor.u32 %v386, %v382
      %v388 = vrot.slane %v387, 4
      %v390 = vshll.u32 %v221, 16
      %v392 = vrot.slane %v390, 5
      %v393 = vsel %vm225, %v388, %v392
      %v395 = vshrl.u32 %v197, 16
      %v397 = vrot.slane %v395, 4
      %v398 = vshll.u32 %v197, 16
      %v400 = vrot.slane %v398, 5
      %v401 = vor.u32 %v397, %v400
      %v402 = vrot.slane %v401, 4
      %v404 = vshll.u32 %v198, 16
      %v406 = vrot.slane %v404, 5
      %v407 = vsel %vm225, %v402, %v406
      %v408 = vshrl.u32 %v198, 16
      %v410 = vrot.slane %v408, 4
      %v411 = vor.u32 %v410, %v406
      %v412 = vrot.slane %v411, 4
      %v414 = vshll.u32 %v222, 16
      %v416 = vrot.slane %v414, 5
      %v417 = vsel %vm225, %v412, %v416
      %v418 = vld [vmem:[%s1 + $0x40] sm:$0xf]
      %v419 = vld [vmem:[%s1 + $0x44] sm:$0xf]
      %v420 = vld [vmem:[%s1 + $0x48] sm:$0xf]
      %v421 = vld [vmem:[%s1 + $0x4c] sm:$0xf]
      %v422 = vld [vmem:[%s1 + $0x50] sm:$0xf]
      %v423 = vld [vmem:[%s1 + $0x54] sm:$0xf]
      %v424 = vld [vmem:[%s1 + $0x58] sm:$0xf]
      %v425 = vld [vmem:[%s1 + $0x5c] sm:$0xf]
      %v426 = vld [vmem:[%s1 + $0x60] sm:$0xf]
      %v427 = vld [vmem:[%s1 + $0x64] sm:$0xf]
      %v428 = vld [vmem:[%s1 + $0x68] sm:$0xf]
      %v429 = vld [vmem:[%s1 + $0x6c] sm:$0xf]
      %v430 = vld [vmem:[%s1 + $0x70] sm:$0xf]
      %v431 = vld [vmem:[%s1 + $0x74] sm:$0xf]
      %v432 = vld [vmem:[%s1 + $0x78] sm:$0xf]
      %v433 = vld [vmem:[%s1 + $0x7c] sm:$0xf]
      %v434 = vunpack.c.l.b16 %v239
      %v435 = vunpack.c.l.b16 %v249
      %v436 = vunpack.c.l.b16 %v263
      %v437 = vunpack.c.l.b16 %v273
      %v438 = vunpack.c.l.b16 %v287
      %v439 = vunpack.c.l.b16 %v297
      %v440 = vunpack.c.l.b16 %v311
      %v441 = vunpack.c.l.b16 %v321
      %v442 = vunpack.c.l.b16 %v335
      %v443 = vunpack.c.l.b16 %v345
      %v444 = vunpack.c.l.b16 %v359
      %v445 = vunpack.c.l.b16 %v369
      %v446 = vunpack.c.l.b16 %v383
      %v447 = vunpack.c.l.b16 %v393
      %v448 = vunpack.c.l.b16 %v407
      %v449 = vunpack.c.l.b16 %v417
      %v450 = vpack.c.b16 %v435, %v434
      %v451 = vpack.c.b16 %v437, %v436
      %v452 = vpack.c.b16 %v439, %v438
      %v453 = vpack.c.b16 %v441, %v440
      %v454 = vpack.c.b16 %v443, %v442
      %v455 = vpack.c.b16 %v445, %v444
      %v456 = vpack.c.b16 %v447, %v446
      %v457 = vpack.c.b16 %v449, %v448
      %v482 = vunpack.c.l.b16 %v418
      %v483 = vunpack.c.l.b16 %v419
      %v484 = vunpack.c.l.b16 %v420
      %v485 = vunpack.c.l.b16 %v421
      %v486 = vunpack.c.l.b16 %v422
      %v487 = vunpack.c.l.b16 %v423
      %v488 = vunpack.c.l.b16 %v424
      %v489 = vunpack.c.l.b16 %v425
      %v490 = vunpack.c.l.b16 %v426
      %v491 = vunpack.c.l.b16 %v427
      %v492 = vunpack.c.l.b16 %v428
      %v493 = vunpack.c.l.b16 %v429
      %v494 = vunpack.c.l.b16 %v430
      %v495 = vunpack.c.l.b16 %v431
      %v496 = vunpack.c.l.b16 %v432
      %v497 = vunpack.c.l.b16 %v433
      %v498 = vpack.c.b16 %v483, %v482
      %v499 = vpack.c.b16 %v485, %v484
      %v500 = vpack.c.b16 %v487, %v486
      %v501 = vpack.c.b16 %v489, %v488
      %v502 = vpack.c.b16 %v491, %v490
      %v503 = vpack.c.b16 %v493, %v492
      %v504 = vpack.c.b16 %v495, %v494
      %v505 = vpack.c.b16 %v497, %v496
      %514 = vmatprep.subr.bf16.mxu0 0
      %515 = vmatpush1.bf16.msra.mxu0 %v498
      %516 = vmatprep.subr.bf16.mxu0 0
      %517 = vmatpush1.bf16.msra.mxu0 %v499
      %518 = vmatprep.subr.bf16.mxu0 0
      %519 = vmatpush1.bf16.msra.mxu0 %v500
      %520 = vmatprep.subr.bf16.mxu0 0
      %521 = vmatpush1.bf16.msra.mxu0 %v501
      %522 = vmatprep.subr.bf16.mxu0 0
      %523 = vmatpush1.bf16.msra.mxu0 %v502
      %524 = vmatprep.subr.bf16.mxu0 0
      %525 = vmatpush1.bf16.msra.mxu0 %v503
      %526 = vmatprep.subr.bf16.mxu0 0
      %527 = vmatpush1.bf16.msra.mxu0 %v504
      %528 = vmatprep.subr.bf16.mxu0 0
      %529 = vmatpush1.bf16.msra.mxu0 %v505
      %530 = vmatprep.subr.bf16.mxu0 0
      %531 = vmatpush1.bf16.msra.mxu0 0
      %532 = vmatprep.subr.bf16.mxu0 0
      %533 = vmatpush1.bf16.msra.mxu0 0
      %534 = vmatprep.subr.bf16.mxu0 0
      %535 = vmatpush1.bf16.msra.mxu0 0
      %536 = vmatprep.subr.bf16.mxu0 0
      %537 = vmatpush1.bf16.msra.mxu0 0
      %538 = vmatprep.subr.bf16.mxu0 0
      %539 = vmatpush1.bf16.msra.mxu0 0
      %540 = vmatprep.subr.bf16.mxu0 0
      %541 = vmatpush1.bf16.msra.mxu0 0
      %542 = vmatprep.subr.bf16.mxu0 0
      %543 = vmatpush1.bf16.msra.mxu0 0
      %544 = vmatprep.subr.bf16.mxu0 0
      %545 = vmatpush1.bf16.msra.mxu0 0
      %546 = vmatprep.mubr.bf16.mxu0 0
      %547 = vmatmul.mubr.bf16.gmra.mrb[0].mxu0 %v450
      %v548 = vpop.f32.mrb[0].mxu0
      %v549 = vadd.f32 0.0, %v548
      %v550 = vpop.f32.mrb[0].mxu0
      %v551 = vpop.f32.mrb[0].mxu0
      %v552 = vadd.f32 0.0, %v551
      %v553 = vpop.f32.mrb[0].mxu0
      %554 = vmatprep.mubr.bf16.mxu0 0
      %555 = vmatmul.mubr.bf16.gmra.mrb[0].mxu0 %v451
      %v556 = vpop.f32.mrb[0].mxu0
      %v557 = vadd.f32 0.0, %v556
      %v558 = vpop.f32.mrb[0].mxu0
      %v559 = vpop.f32.mrb[0].mxu0
      %v560 = vadd.f32 0.0, %v559
      %v561 = vpop.f32.mrb[0].mxu0
      %562 = vmatprep.mubr.bf16.mxu0 0
      %563 = vmatmul.mubr.bf16.gmra.mrb[0].mxu0 %v452
      %v564 = vpop.f32.mrb[0].mxu0
      %v565 = vadd.f32 0.0, %v564
      %v566 = vpop.f32.mrb[0].mxu0
      %v567 = vpop.f32.mrb[0].mxu0
      %v568 = vadd.f32 0.0, %v567
      %v569 = vpop.f32.mrb[0].mxu0
      %570 = vmatprep.mubr.bf16.mxu0 0
      %571 = vmatmul.mubr.bf16.gmra.mrb[0].mxu0 %v453
      %v572 = vpop.f32.mrb[0].mxu0
      %v573 = vadd.f32 0.0, %v572
      %v574 = vpop.f32.mrb[0].mxu0
      %v575 = vpop.f32.mrb[0].mxu0
      %v576 = vadd.f32 0.0, %v575
      %v577 = vpop.f32.mrb[0].mxu0
      %578 = vmatprep.mubr.bf16.mxu0 0
      %579 = vmatmul.mubr.bf16.gmra.mrb[0].mxu0 %v454
      %v580 = vpop.f32.mrb[0].mxu0
      %v581 = vadd.f32 0.0, %v580
      %v582 = vpop.f32.mrb[0].mxu0
      %v583 = vpop.f32.mrb[0].mxu0
      %v584 = vadd.f32 0.0, %v583
      %v585 = vpop.f32.mrb[0].mxu0
      %586 = vmatprep.mubr.bf16.mxu0 0
      %587 = vmatmul.mubr.bf16.gmra.mrb[0].mxu0 %v455
      %v588 = vpop.f32.mrb[0].mxu0
      %v589 = vadd.f32 0.0, %v588
      %v590 = vpop.f32.mrb[0].mxu0
      %v591 = vpop.f32.mrb[0].mxu0
      %v592 = vadd.f32 0.0, %v591
      %v593 = vpop.f32.mrb[0].mxu0
      %594 = vmatprep.mubr.bf16.mxu0 0
      %595 = vmatmul.mubr.bf16.gmra.mrb[0].mxu0 %v456
      %v596 = vpop.f32.mrb[0].mxu0
      %v597 = vadd.f32 0.0, %v596
      %v598 = vpop.f32.mrb[0].mxu0
      %v599 = vpop.f32.mrb[0].mxu0
      %v600 = vadd.f32 0.0, %v599
      %v601 = vpop.f32.mrb[0].mxu0
      %602 = vmatprep.mubr.bf16.mxu0 0
      %603 = vmatmul.mubr.bf16.gmra.mrb[0].mxu0 %v457
      %v604 = vpop.f32.mrb[0].mxu0
      %v605 = vadd.f32 0.0, %v604
      %v606 = vpop.f32.mrb[0].mxu0
      %v607 = vpop.f32.mrb[0].mxu0
      %v608 = vadd.f32 0.0, %v607
      %v609 = vpop.f32.mrb[0].mxu0
      %610 = vdwg.mxu0
      %v627 = vunpack.c.l.b16 %v183
      %v628 = vunpack.c.l.b16 %v184
      %v629 = vunpack.c.l.b16 %v185
      %v630 = vunpack.c.l.b16 %v186
      %v631 = vunpack.c.l.b16 %v187
      %v632 = vunpack.c.l.b16 %v188
      %v633 = vunpack.c.l.b16 %v189
      %v634 = vunpack.c.l.b16 %v190
      %v635 = vunpack.c.l.b16 %v191
      %v636 = vunpack.c.l.b16 %v192
      %v637 = vunpack.c.l.b16 %v193
      %v638 = vunpack.c.l.b16 %v194
      %v639 = vunpack.c.l.b16 %v195
      %v640 = vunpack.c.l.b16 %v196
      %v641 = vunpack.c.l.b16 %v197
      %v642 = vunpack.c.l.b16 %v198
      %v643 = vpack.c.b16 %v628, %v627
      %v644 = vpack.c.b16 %v630, %v629
      %v645 = vpack.c.b16 %v632, %v631
      %v646 = vpack.c.b16 %v634, %v633
      %v647 = vpack.c.b16 %v636, %v635
      %v648 = vpack.c.b16 %v638, %v637
      %v649 = vpack.c.b16 %v640, %v639
      %v650 = vpack.c.b16 %v642, %v641
      %v675 = vunpack.c.l.b16 %v199
      %v676 = vunpack.c.l.b16 %v200
      %v677 = vunpack.c.l.b16 %v201
      %v678 = vunpack.c.l.b16 %v202
      %v679 = vunpack.c.l.b16 %v203
      %v680 = vunpack.c.l.b16 %v204
      %v681 = vunpack.c.l.b16 %v205
      %v682 = vunpack.c.l.b16 %v206
      %v683 = vunpack.c.l.b16 %v207
      %v684 = vunpack.c.l.b16 %v208
      %v685 = vunpack.c.l.b16 %v209
      %v686 = vunpack.c.l.b16 %v210
      %v687 = vunpack.c.l.b16 %v211
      %v688 = vunpack.c.l.b16 %v212
      %v689 = vunpack.c.l.b16 %v213
      %v690 = vunpack.c.l.b16 %v214
      %v691 = vpack.c.b16 %v676, %v675
      %v692 = vpack.c.b16 %v678, %v677
      %v693 = vpack.c.b16 %v680, %v679
      %v694 = vpack.c.b16 %v682, %v681
      %v695 = vpack.c.b16 %v684, %v683
      %v696 = vpack.c.b16 %v686, %v685
      %v697 = vpack.c.b16 %v688, %v687
      %v698 = vpack.c.b16 %v690, %v689
      %707 = vmatprep.subr.bf16.mxu0 0
      %708 = vmatpush1.bf16.msra.mxu0 %v691
      %709 = vmatprep.subr.bf16.mxu0 0
      %710 = vmatpush1.bf16.msra.mxu0 %v692
      %711 = vmatprep.subr.bf16.mxu0 0
      %712 = vmatpush1.bf16.msra.mxu0 %v693
      %713 = vmatprep.subr.bf16.mxu0 0
      %714 = vmatpush1.bf16.msra.mxu0 %v694
      %715 = vmatprep.subr.bf16.mxu0 0
      %716 = vmatpush1.bf16.msra.mxu0 %v695
      %717 = vmatprep.subr.bf16.mxu0 0
      %718 = vmatpush1.bf16.msra.mxu0 %v696
      %719 = vmatprep.subr.bf16.mxu0 0
      %720 = vmatpush1.bf16.msra.mxu0 %v697
      %721 = vmatprep.subr.bf16.mxu0 0
      %722 = vmatpush1.bf16.msra.mxu0 %v698
      %723 = vmatprep.subr.bf16.mxu0 0
      %724 = vmatpush1.bf16.msra.mxu0 0
      %725 = vmatprep.subr.bf16.mxu0 0
      %726 = vmatpush1.bf16.msra.mxu0 0
      %727 = vmatprep.subr.bf16.mxu0 0
      %728 = vmatpush1.bf16.msra.mxu0 0
      %729 = vmatprep.subr.bf16.mxu0 0
      %730 = vmatpush1.bf16.msra.mxu0 0
      %731 = vmatprep.subr.bf16.mxu0 0
      %732 = vmatpush1.bf16.msra.mxu0 0
      %733 = vmatprep.subr.bf16.mxu0 0
      %734 = vmatpush1.bf16.msra.mxu0 0
      %735 = vmatprep.subr.bf16.mxu0 0
      %736 = vmatpush1.bf16.msra.mxu0 0
      %737 = vmatprep.subr.bf16.mxu0 0
      %738 = vmatpush1.bf16.msra.mxu0 0
      %739 = vmatprep.mubr.bf16.mxu0 0
      %740 = vmatmul.mubr.bf16.gmra.mrb[0].mxu0 %v643
      %v741 = vpop.f32.mrb[0].mxu0
      %v742 = vadd.f32 %v549, %v741
      %v743 = vpop.f32.mrb[0].mxu0
      %v744 = vpop.f32.mrb[0].mxu0
      %v745 = vadd.f32 %v552, %v744
      %v746 = vpop.f32.mrb[0].mxu0
      %747 = vmatprep.mubr.bf16.mxu0 0
      %748 = vmatmul.mubr.bf16.gmra.mrb[0].mxu0 %v644
      %v749 = vpop.f32.mrb[0].mxu0
      %v750 = vadd.f32 %v557, %v749
      %v751 = vpop.f32.mrb[0].mxu0
      %v752 = vpop.f32.mrb[0].mxu0
      %v753 = vadd.f32 %v560, %v752
      %v754 = vpop.f32.mrb[0].mxu0
      %755 = vmatprep.mubr.bf16.mxu0 0
      %756 = vmatmul.mubr.bf16.gmra.mrb[0].mxu0 %v645
      %v757 = vpop.f32.mrb[0].mxu0
      %v758 = vadd.f32 %v565, %v757
      %v759 = vpop.f32.mrb[0].mxu0
      %v760 = vpop.f32.mrb[0].mxu0
      %v761 = vadd.f32 %v568, %v760
      %v762 = vpop.f32.mrb[0].mxu0
      %763 = vmatprep.mubr.bf16.mxu0 0
      %764 = vmatmul.mubr.bf16.gmra.mrb[0].mxu0 %v646
      %v765 = vpop.f32.mrb[0].mxu0
      %v766 = vadd.f32 %v573, %v765
      %v767 = vpop.f32.mrb[0].mxu0
      %v768 = vpop.f32.mrb[0].mxu0
      %v769 = vadd.f32 %v576, %v768
      %v770 = vpop.f32.mrb[0].mxu0
      %771 = vmatprep.mubr.bf16.mxu0 0
      %772 = vmatmul.mubr.bf16.gmra.mrb[0].mxu0 %v647
      %v773 = vpop.f32.mrb[0].mxu0
      %v774 = vadd.f32 %v581, %v773
      %v775 = vpop.f32.mrb[0].mxu0
      %v776 = vpop.f32.mrb[0].mxu0
      %v777 = vadd.f32 %v584, %v776
      %v778 = vpop.f32.mrb[0].mxu0
      %779 = vmatprep.mubr.bf16.mxu0 0
      %780 = vmatmul.mubr.bf16.gmra.mrb[0].mxu0 %v648
      %v781 = vpop.f32.mrb[0].mxu0
      %v782 = vadd.f32 %v589, %v781
      %v783 = vpop.f32.mrb[0].mxu0
      %v784 = vpop.f32.mrb[0].mxu0
      %v785 = vadd.f32 %v592, %v784
      %v786 = vpop.f32.mrb[0].mxu0
      %787 = vmatprep.mubr.bf16.mxu0 0
      %788 = vmatmul.mubr.bf16.gmra.mrb[0].mxu0 %v649
      %v789 = vpop.f32.mrb[0].mxu0
      %v790 = vadd.f32 %v597, %v789
      %v791 = vpop.f32.mrb[0].mxu0
      %v792 = vpop.f32.mrb[0].mxu0
      %v793 = vadd.f32 %v600, %v792
      %v794 = vpop.f32.mrb[0].mxu0
      %795 = vmatprep.mubr.bf16.mxu0 0
      %796 = vmatmul.mubr.bf16.gmra.mrb[0].mxu0 %v650
      %v797 = vpop.f32.mrb[0].mxu0
      %v798 = vadd.f32 %v605, %v797
      %v799 = vpop.f32.mrb[0].mxu0
      %v800 = vpop.f32.mrb[0].mxu0
      %v801 = vadd.f32 %v608, %v800
      %v802 = vpop.f32.mrb[0].mxu0
      %803 = vdwg.mxu0
      %v804 = vld [vmem:[%s172] sm:$0xe]
      %v805 = vld [vmem:[%s172 + $0xc] sm:$0xe]
      %v806 = vld [vmem:[%s172 + $0x18] sm:$0xe]
      %v807 = vld [vmem:[%s172 + $0x24] sm:$0xe]
      %v808 = vld [vmem:[%s172 + $0x30] sm:$0xe]
      %v809 = vld [vmem:[%s172 + $0x3c] sm:$0xe]
      %v810 = vld [vmem:[%s172 + $0x48] sm:$0xe]
      %v811 = vld [vmem:[%s172 + $0x54] sm:$0xe]
      %vm828 = vcmask 1042432
      %vm829 = vcmask 1046532
      %vm830 = vmor %vm828, %vm829
      %v831 = vrot.slane %v804, 5
      %v832 = vrot.slane %v831, 4
      %v833 = vrot.slane %v184, 5
      %v834 = vsel %vm830, %v832, %v833
      %v835 = vrot.slane %v833, 4
      %v836 = vrot.slane %v215, 5
      %v837 = vsel %vm830, %v835, %v836
      %v838 = vrot.slane %v805, 5
      %v839 = vrot.slane %v838, 4
      %v840 = vrot.slane %v186, 5
      %v841 = vsel %vm830, %v839, %v840
      %v842 = vrot.slane %v840, 4
      %v843 = vrot.slane %v216, 5
      %v844 = vsel %vm830, %v842, %v843
      %v845 = vrot.slane %v806, 5
      %v846 = vrot.slane %v845, 4
      %v847 = vrot.slane %v188, 5
      %v848 = vsel %vm830, %v846, %v847
      %v849 = vrot.slane %v847, 4
      %v850 = vrot.slane %v217, 5
      %v851 = vsel %vm830, %v849, %v850
      %v852 = vrot.slane %v807, 5
      %v853 = vrot.slane %v852, 4
      %v854 = vrot.slane %v190, 5
      %v855 = vsel %vm830, %v853, %v854
      %v856 = vrot.slane %v854, 4
      %v857 = vrot.slane %v218, 5
      %v858 = vsel %vm830, %v856, %v857
      %v859 = vrot.slane %v808, 5
      %v860 = vrot.slane %v859, 4
      %v861 = vrot.slane %v192, 5
      %v862 = vsel %vm830, %v860, %v861
      %v863 = vrot.slane %v861, 4
      %v864 = vrot.slane %v219, 5
      %v865 = vsel %vm830, %v863, %v864
      %v866 = vrot.slane %v809, 5
      %v867 = vrot.slane %v866, 4
      %v868 = vrot.slane %v194, 5
      %v869 = vsel %vm830, %v867, %v868
      %v870 = vrot.slane %v868, 4
      %v871 = vrot.slane %v220, 5
      %v872 = vsel %vm830, %v870, %v871
      %v873 = vrot.slane %v810, 5
      %v874 = vrot.slane %v873, 4
      %v875 = vrot.slane %v196, 5
      %v876 = vsel %vm830, %v874, %v875
      %v877 = vrot.slane %v875, 4
      %v878 = vrot.slane %v221, 5
      %v879 = vsel %vm830, %v877, %v878
      %v880 = vrot.slane %v811, 5
      %v881 = vrot.slane %v880, 4
      %v882 = vrot.slane %v198, 5
      %v883 = vsel %vm830, %v881, %v882
      %v884 = vrot.slane %v882, 4
      %v885 = vrot.slane %v222, 5
      %v886 = vsel %vm830, %v884, %v885
      %v887 = vld [vmem:[%s1 + $0x80] sm:$0xf]
      %v888 = vld [vmem:[%s1 + $0x84] sm:$0xf]
      %v889 = vld [vmem:[%s1 + $0x88] sm:$0xf]
      %v890 = vld [vmem:[%s1 + $0x8c] sm:$0xf]
      %v891 = vld [vmem:[%s1 + $0x90] sm:$0xf]
      %v892 = vld [vmem:[%s1 + $0x94] sm:$0xf]
      %v893 = vld [vmem:[%s1 + $0x98] sm:$0xf]
      %v894 = vld [vmem:[%s1 + $0x9c] sm:$0xf]
      %v895 = vld [vmem:[%s1 + $0xa0] sm:$0xf]
      %v896 = vld [vmem:[%s1 + $0xa4] sm:$0xf]
      %v897 = vld [vmem:[%s1 + $0xa8] sm:$0xf]
      %v898 = vld [vmem:[%s1 + $0xac] sm:$0xf]
      %v899 = vld [vmem:[%s1 + $0xb0] sm:$0xf]
      %v900 = vld [vmem:[%s1 + $0xb4] sm:$0xf]
      %v901 = vld [vmem:[%s1 + $0xb8] sm:$0xf]
      %v902 = vld [vmem:[%s1 + $0xbc] sm:$0xf]
      %v903 = vunpack.c.l.b16 %v834
      %v904 = vunpack.c.l.b16 %v837
      %v905 = vunpack.c.l.b16 %v841
      %v906 = vunpack.c.l.b16 %v844
      %v907 = vunpack.c.l.b16 %v848
      %v908 = vunpack.c.l.b16 %v851
      %v909 = vunpack.c.l.b16 %v855
      %v910 = vunpack.c.l.b16 %v858
      %v911 = vunpack.c.l.b16 %v862
      %v912 = vunpack.c.l.b16 %v865
      %v913 = vunpack.c.l.b16 %v869
      %v914 = vunpack.c.l.b16 %v872
      %v915 = vunpack.c.l.b16 %v876
      %v916 = vunpack.c.l.b16 %v879
      %v917 = vunpack.c.l.b16 %v883
      %v918 = vunpack.c.l.b16 %v886
      %v919 = vpack.c.b16 %v904, %v903
      %v920 = vpack.c.b16 %v906, %v905
      %v921 = vpack.c.b16 %v908, %v907
      %v922 = vpack.c.b16 %v910, %v909
      %v923 = vpack.c.b16 %v912, %v911
      %v924 = vpack.c.b16 %v914, %v913
      %v925 = vpack.c.b16 %v916, %v915
      %v926 = vpack.c.b16 %v918, %v917
      %v951 = vunpack.c.l.b16 %v887
      %v952 = vunpack.c.l.b16 %v888
      %v953 = vunpack.c.l.b16 %v889
      %v954 = vunpack.c.l.b16 %v890
      %v955 = vunpack.c.l.b16 %v891
      %v956 = vunpack.c.l.b16 %v892
      %v957 = vunpack.c.l.b16 %v893
      %v958 = vunpack.c.l.b16 %v894
      %v959 = vunpack.c.l.b16 %v895
      %v960 = vunpack.c.l.b16 %v896
      %v961 = vunpack.c.l.b16 %v897
      %v962 = vunpack.c.l.b16 %v898
      %v963 = vunpack.c.l.b16 %v899
      %v964 = vunpack.c.l.b16 %v900
      %v965 = vunpack.c.l.b16 %v901
      %v966 = vunpack.c.l.b16 %v902
      %v967 = vpack.c.b16 %v952, %v951
      %v968 = vpack.c.b16 %v954, %v953
      %v969 = vpack.c.b16 %v956, %v955
      %v970 = vpack.c.b16 %v958, %v957
      %v971 = vpack.c.b16 %v960, %v959
      %v972 = vpack.c.b16 %v962, %v961
      %v973 = vpack.c.b16 %v964, %v963
      %v974 = vpack.c.b16 %v966, %v965
      %983 = vmatprep.subr.bf16.mxu0 0
      %984 = vmatpush1.bf16.msra.mxu0 %v967
      %985 = vmatprep.subr.bf16.mxu0 0
      %986 = vmatpush1.bf16.msra.mxu0 %v968
      %987 = vmatprep.subr.bf16.mxu0 0
      %988 = vmatpush1.bf16.msra.mxu0 %v969
      %989 = vmatprep.subr.bf16.mxu0 0
      %990 = vmatpush1.bf16.msra.mxu0 %v970
      %991 = vmatprep.subr.bf16.mxu0 0
      %992 = vmatpush1.bf16.msra.mxu0 %v971
      %993 = vmatprep.subr.bf16.mxu0 0
      %994 = vmatpush1.bf16.msra.mxu0 %v972
      %995 = vmatprep.subr.bf16.mxu0 0
      %996 = vmatpush1.bf16.msra.mxu0 %v973
      %997 = vmatprep.subr.bf16.mxu0 0
      %998 = vmatpush1.bf16.msra.mxu0 %v974
      %999 = vmatprep.subr.bf16.mxu0 0
      %1000 = vmatpush1.bf16.msra.mxu0 0
      %1001 = vmatprep.subr.bf16.mxu0 0
      %1002 = vmatpush1.bf16.msra.mxu0 0
      %1003 = vmatprep.subr.bf16.mxu0 0
      %1004 = vmatpush1.bf16.msra.mxu0 0
      %1005 = vmatprep.subr.bf16.mxu0 0
      %1006 = vmatpush1.bf16.msra.mxu0 0
      %1007 = vmatprep.subr.bf16.mxu0 0
      %1008 = vmatpush1.bf16.msra.mxu0 0
      %1009 = vmatprep.subr.bf16.mxu0 0
      %1010 = vmatpush1.bf16.msra.mxu0 0
      %1011 = vmatprep.subr.bf16.mxu0 0
      %1012 = vmatpush1.bf16.msra.mxu0 0
      %1013 = vmatprep.subr.bf16.mxu0 0
      %1014 = vmatpush1.bf16.msra.mxu0 0
      %1015 = vmatprep.mubr.bf16.mxu0 0
      %1016 = vmatmul.mubr.bf16.gmra.mrb[0].mxu0 %v919
      %v1017 = vpop.f32.mrb[0].mxu0
      %v1018 = vadd.f32 0.0, %v1017
      %v1019 = vpop.f32.mrb[0].mxu0
      %v1020 = vpop.f32.mrb[0].mxu0
      %v1021 = vadd.f32 0.0, %v1020
      %v1022 = vpop.f32.mrb[0].mxu0
      %1023 = vmatprep.mubr.bf16.mxu0 0
      %1024 = vmatmul.mubr.bf16.gmra.mrb[0].mxu0 %v920
      %v1025 = vpop.f32.mrb[0].mxu0
      %v1026 = vadd.f32 0.0, %v1025
      %v1027 = vpop.f32.mrb[0].mxu0
      %v1028 = vpop.f32.mrb[0].mxu0
      %v1029 = vadd.f32 0.0, %v1028
      %v1030 = vpop.f32.mrb[0].mxu0
      %1031 = vmatprep.mubr.bf16.mxu0 0
      %1032 = vmatmul.mubr.bf16.gmra.mrb[0].mxu0 %v921
      %v1033 = vpop.f32.mrb[0].mxu0
      %v1034 = vadd.f32 0.0, %v1033
      %v1035 = vpop.f32.mrb[0].mxu0
      %v1036 = vpop.f32.mrb[0].mxu0
      %v1037 = vadd.f32 0.0, %v1036
      %v1038 = vpop.f32.mrb[0].mxu0
      %1039 = vmatprep.mubr.bf16.mxu0 0
      %1040 = vmatmul.mubr.bf16.gmra.mrb[0].mxu0 %v922
      %v1041 = vpop.f32.mrb[0].mxu0
      %v1042 = vadd.f32 0.0, %v1041
      %v1043 = vpop.f32.mrb[0].mxu0
      %v1044 = vpop.f32.mrb[0].mxu0
      %v1045 = vadd.f32 0.0, %v1044
      %v1046 = vpop.f32.mrb[0].mxu0
      %1047 = vmatprep.mubr.bf16.mxu0 0
      %1048 = vmatmul.mubr.bf16.gmra.mrb[0].mxu0 %v923
      %v1049 = vpop.f32.mrb[0].mxu0
      %v1050 = vadd.f32 0.0, %v1049
      %v1051 = vpop.f32.mrb[0].mxu0
      %v1052 = vpop.f32.mrb[0].mxu0
      %v1053 = vadd.f32 0.0, %v1052
      %v1054 = vpop.f32.mrb[0].mxu0
      %1055 = vmatprep.mubr.bf16.mxu0 0
      %1056 = vmatmul.mubr.bf16.gmra.mrb[0].mxu0 %v924
      %v1057 = vpop.f32.mrb[0].mxu0
      %v1058 = vadd.f32 0.0, %v1057
      %v1059 = vpop.f32.mrb[0].mxu0
      %v1060 = vpop.f32.mrb[0].mxu0
      %v1061 = vadd.f32 0.0, %v1060
      %v1062 = vpop.f32.mrb[0].mxu0
      %1063 = vmatprep.mubr.bf16.mxu0 0
      %1064 = vmatmul.mubr.bf16.gmra.mrb[0].mxu0 %v925
      %v1065 = vpop.f32.mrb[0].mxu0
      %v1066 = vadd.f32 0.0, %v1065
      %v1067 = vpop.f32.mrb[0].mxu0
      %v1068 = vpop.f32.mrb[0].mxu0
      %v1069 = vadd.f32 0.0, %v1068
      %v1070 = vpop.f32.mrb[0].mxu0
      %1071 = vmatprep.mubr.bf16.mxu0 0
      %1072 = vmatmul.mubr.bf16.gmra.mrb[0].mxu0 %v926
      %v1073 = vpop.f32.mrb[0].mxu0
      %v1074 = vadd.f32 0.0, %v1073
      %v1075 = vpop.f32.mrb[0].mxu0
      %v1076 = vpop.f32.mrb[0].mxu0
      %v1077 = vadd.f32 0.0, %v1076
      %v1078 = vpop.f32.mrb[0].mxu0
      %1079 = vdwg.mxu0
      %v1080 = vadd.f32 %v742, %v1018
      %v1081 = vadd.f32 %v745, %v1021
      %v1082 = vadd.f32 %v750, %v1026
      %v1083 = vadd.f32 %v753, %v1029
      %v1084 = vadd.f32 %v758, %v1034
      %v1085 = vadd.f32 %v761, %v1037
      %v1086 = vadd.f32 %v766, %v1042
      %v1087 = vadd.f32 %v769, %v1045
      %v1088 = vadd.f32 %v774, %v1050
      %v1089 = vadd.f32 %v777, %v1053
      %v1090 = vadd.f32 %v782, %v1058
      %v1091 = vadd.f32 %v785, %v1061
      %v1092 = vadd.f32 %v790, %v1066
      %v1093 = vadd.f32 %v793, %v1069
      %v1094 = vadd.f32 %v798, %v1074
      %v1095 = vadd.f32 %v801, %v1077
      %s1096 = scalar_lea.vmem %s172, 12
      %v1097 = vld [vmem:[%s1096] sm:$0xf]
      %v1098 = vld [vmem:[%s1096 + $0x4] sm:$0xf]
      %v1099 = vld [vmem:[%s1096 + $0xc] sm:$0xf]
      %v1100 = vld [vmem:[%s1096 + $0x10] sm:$0xf]
      %v1101 = vld [vmem:[%s1096 + $0x18] sm:$0xf]
      %v1102 = vld [vmem:[%s1096 + $0x1c] sm:$0xf]
      %v1103 = vld [vmem:[%s1096 + $0x24] sm:$0xf]
      %v1104 = vld [vmem:[%s1096 + $0x28] sm:$0xf]
      %v1105 = vld [vmem:[%s1096 + $0x30] sm:$0xf]
      %v1106 = vld [vmem:[%s1096 + $0x34] sm:$0xf]
      %v1107 = vld [vmem:[%s1096 + $0x3c] sm:$0xf]
      %v1108 = vld [vmem:[%s1096 + $0x40] sm:$0xf]
      %v1109 = vld [vmem:[%s1096 + $0x48] sm:$0xf]
      %v1110 = vld [vmem:[%s1096 + $0x4c] sm:$0xf]
      %v1111 = vld [vmem:[%s1096 + $0x54] sm:$0xf]
      %v1112 = vld [vmem:[%s1096 + $0x58] sm:$0xf]
      %v1113 = vld [vmem:[%s1 + $0xc0] sm:$0xf]
      %v1114 = vld [vmem:[%s1 + $0xc4] sm:$0xf]
      %v1115 = vld [vmem:[%s1 + $0xc8] sm:$0xf]
      %v1116 = vld [vmem:[%s1 + $0xcc] sm:$0xf]
      %v1117 = vld [vmem:[%s1 + $0xd0] sm:$0xf]
      %v1118 = vld [vmem:[%s1 + $0xd4] sm:$0xf]
      %v1119 = vld [vmem:[%s1 + $0xd8] sm:$0xf]
      %v1120 = vld [vmem:[%s1 + $0xdc] sm:$0xf]
      %v1121 = vld [vmem:[%s1 + $0xe0] sm:$0xf]
      %v1122 = vld [vmem:[%s1 + $0xe4] sm:$0xf]
      %v1123 = vld [vmem:[%s1 + $0xe8] sm:$0xf]
      %v1124 = vld [vmem:[%s1 + $0xec] sm:$0xf]
      %v1125 = vld [vmem:[%s1 + $0xf0] sm:$0xf]
      %v1126 = vld [vmem:[%s1 + $0xf4] sm:$0xf]
      %v1127 = vld [vmem:[%s1 + $0xf8] sm:$0xf]
      %v1128 = vld [vmem:[%s1 + $0xfc] sm:$0xf]
      %v1145 = vunpack.c.l.b16 %v1097
      %v1146 = vunpack.c.l.b16 %v1098
      %v1147 = vunpack.c.l.b16 %v1099
      %v1148 = vunpack.c.l.b16 %v1100
      %v1149 = vunpack.c.l.b16 %v1101
      %v1150 = vunpack.c.l.b16 %v1102
      %v1151 = vunpack.c.l.b16 %v1103
      %v1152 = vunpack.c.l.b16 %v1104
      %v1153 = vunpack.c.l.b16 %v1105
      %v1154 = vunpack.c.l.b16 %v1106
      %v1155 = vunpack.c.l.b16 %v1107
      %v1156 = vunpack.c.l.b16 %v1108
      %v1157 = vunpack.c.l.b16 %v1109
      %v1158 = vunpack.c.l.b16 %v1110
      %v1159 = vunpack.c.l.b16 %v1111
      %v1160 = vunpack.c.l.b16 %v1112
      %v1161 = vpack.c.b16 %v1146, %v1145
      %v1162 = vpack.c.b16 %v1148, %v1147
      %v1163 = vpack.c.b16 %v1150, %v1149
      %v1164 = vpack.c.b16 %v1152, %v1151
      %v1165 = vpack.c.b16 %v1154, %v1153
      %v1166 = vpack.c.b16 %v1156, %v1155
      %v1167 = vpack.c.b16 %v1158, %v1157
      %v1168 = vpack.c.b16 %v1160, %v1159
      %v1193 = vunpack.c.l.b16 %v1113
      %v1194 = vunpack.c.l.b16 %v1114
      %v1195 = vunpack.c.l.b16 %v1115
      %v1196 = vunpack.c.l.b16 %v1116
      %v1197 = vunpack.c.l.b16 %v1117
      %v1198 = vunpack.c.l.b16 %v1118
      %v1199 = vunpack.c.l.b16 %v1119
      %v1200 = vunpack.c.l.b16 %v1120
      %v1201 = vunpack.c.l.b16 %v1121
      %v1202 = vunpack.c.l.b16 %v1122
      %v1203 = vunpack.c.l.b16 %v1123
      %v1204 = vunpack.c.l.b16 %v1124
      %v1205 = vunpack.c.l.b16 %v1125
      %v1206 = vunpack.c.l.b16 %v1126
      %v1207 = vunpack.c.l.b16 %v1127
      %v1208 = vunpack.c.l.b16 %v1128
      %v1209 = vpack.c.b16 %v1194, %v1193
      %v1210 = vpack.c.b16 %v1196, %v1195
      %v1211 = vpack.c.b16 %v1198, %v1197
      %v1212 = vpack.c.b16 %v1200, %v1199
      %v1213 = vpack.c.b16 %v1202, %v1201
      %v1214 = vpack.c.b16 %v1204, %v1203
      %v1215 = vpack.c.b16 %v1206, %v1205
      %v1216 = vpack.c.b16 %v1208, %v1207
      %1225 = vmatprep.subr.bf16.mxu0 0
      %1226 = vmatpush1.bf16.msra.mxu0 %v1209
      %1227 = vmatprep.subr.bf16.mxu0 0
      %1228 = vmatpush1.bf16.msra.mxu0 %v1210
      %1229 = vmatprep.subr.bf16.mxu0 0
      %1230 = vmatpush1.bf16.msra.mxu0 %v1211
      %1231 = vmatprep.subr.bf16.mxu0 0
      %1232 = vmatpush1.bf16.msra.mxu0 %v1212
      %1233 = vmatprep.subr.bf16.mxu0 0
      %1234 = vmatpush1.bf16.msra.mxu0 %v1213
      %1235 = vmatprep.subr.bf16.mxu0 0
      %1236 = vmatpush1.bf16.msra.mxu0 %v1214
      %1237 = vmatprep.subr.bf16.mxu0 0
      %1238 = vmatpush1.bf16.msra.mxu0 %v1215
      %1239 = vmatprep.subr.bf16.mxu0 0
      %1240 = vmatpush1.bf16.msra.mxu0 %v1216
      %1241 = vmatprep.subr.bf16.mxu0 0
      %1242 = vmatpush1.bf16.msra.mxu0 0
      %1243 = vmatprep.subr.bf16.mxu0 0
      %1244 = vmatpush1.bf16.msra.mxu0 0
      %1245 = vmatprep.subr.bf16.mxu0 0
      %1246 = vmatpush1.bf16.msra.mxu0 0
      %1247 = vmatprep.subr.bf16.mxu0 0
      %1248 = vmatpush1.bf16.msra.mxu0 0
      %1249 = vmatprep.subr.bf16.mxu0 0
      %1250 = vmatpush1.bf16.msra.mxu0 0
      %1251 = vmatprep.subr.bf16.mxu0 0
      %1252 = vmatpush1.bf16.msra.mxu0 0
      %1253 = vmatprep.subr.bf16.mxu0 0
      %1254 = vmatpush1.bf16.msra.mxu0 0
      %1255 = vmatprep.subr.bf16.mxu0 0
      %1256 = vmatpush1.bf16.msra.mxu0 0
      %1257 = vmatprep.mubr.bf16.mxu0 0
      %1258 = vmatmul.mubr.bf16.gmra.mrb[0].mxu0 %v1161
      %v1259 = vpop.f32.mrb[0].mxu0
      %v1260 = vadd.f32 0.0, %v1259
      %v1261 = vpop.f32.mrb[0].mxu0
      %v1262 = vpop.f32.mrb[0].mxu0
      %v1263 = vadd.f32 0.0, %v1262
      %v1264 = vpop.f32.mrb[0].mxu0
      %1265 = vmatprep.mubr.bf16.mxu0 0
      %1266 = vmatmul.mubr.bf16.gmra.mrb[0].mxu0 %v1162
      %v1267 = vpop.f32.mrb[0].mxu0
      %v1268 = vadd.f32 0.0, %v1267
      %v1269 = vpop.f32.mrb[0].mxu0
      %v1270 = vpop.f32.mrb[0].mxu0
      %v1271 = vadd.f32 0.0, %v1270
      %v1272 = vpop.f32.mrb[0].mxu0
      %1273 = vmatprep.mubr.bf16.mxu0 0
      %1274 = vmatmul.mubr.bf16.gmra.mrb[0].mxu0 %v1163
      %v1275 = vpop.f32.mrb[0].mxu0
      %v1276 = vadd.f32 0.0, %v1275
      %v1277 = vpop.f32.mrb[0].mxu0
      %v1278 = vpop.f32.mrb[0].mxu0
      %v1279 = vadd.f32 0.0, %v1278
      %v1280 = vpop.f32.mrb[0].mxu0
      %1281 = vmatprep.mubr.bf16.mxu0 0
      %1282 = vmatmul.mubr.bf16.gmra.mrb[0].mxu0 %v1164
      %v1283 = vpop.f32.mrb[0].mxu0
      %v1284 = vadd.f32 0.0, %v1283
      %v1285 = vpop.f32.mrb[0].mxu0
      %v1286 = vpop.f32.mrb[0].mxu0
      %v1287 = vadd.f32 0.0, %v1286
      %v1288 = vpop.f32.mrb[0].mxu0
      %1289 = vmatprep.mubr.bf16.mxu0 0
      %1290 = vmatmul.mubr.bf16.gmra.mrb[0].mxu0 %v1165
      %v1291 = vpop.f32.mrb[0].mxu0
      %v1292 = vadd.f32 0.0, %v1291
      %v1293 = vpop.f32.mrb[0].mxu0
      %v1294 = vpop.f32.mrb[0].mxu0
      %v1295 = vadd.f32 0.0, %v1294
      %v1296 = vpop.f32.mrb[0].mxu0
      %1297 = vmatprep.mubr.bf16.mxu0 0
      %1298 = vmatmul.mubr.bf16.gmra.mrb[0].mxu0 %v1166
      %v1299 = vpop.f32.mrb[0].mxu0
      %v1300 = vadd.f32 0.0, %v1299
      %v1301 = vpop.f32.mrb[0].mxu0
      %v1302 = vpop.f32.mrb[0].mxu0
      %v1303 = vadd.f32 0.0, %v1302
      %v1304 = vpop.f32.mrb[0].mxu0
      %1305 = vmatprep.mubr.bf16.mxu0 0
      %1306 = vmatmul.mubr.bf16.gmra.mrb[0].mxu0 %v1167
      %v1307 = vpop.f32.mrb[0].mxu0
      %v1308 = vadd.f32 0.0, %v1307
      %v1309 = vpop.f32.mrb[0].mxu0
      %v1310 = vpop.f32.mrb[0].mxu0
      %v1311 = vadd.f32 0.0, %v1310
      %v1312 = vpop.f32.mrb[0].mxu0
      %1313 = vmatprep.mubr.bf16.mxu0 0
      %1314 = vmatmul.mubr.bf16.gmra.mrb[0].mxu0 %v1168
      %v1315 = vpop.f32.mrb[0].mxu0
      %v1316 = vadd.f32 0.0, %v1315
      %v1317 = vpop.f32.mrb[0].mxu0
      %v1318 = vpop.f32.mrb[0].mxu0
      %v1319 = vadd.f32 0.0, %v1318
      %v1320 = vpop.f32.mrb[0].mxu0
      %1321 = vdwg.mxu0
      %v1322 = vadd.f32 %v1080, %v1260
      %v1323 = vadd.f32 %v1081, %v1263
      %v1324 = vadd.f32 %v1082, %v1268
      %v1325 = vadd.f32 %v1083, %v1271
      %v1326 = vadd.f32 %v1084, %v1276
      %v1327 = vadd.f32 %v1085, %v1279
      %v1328 = vadd.f32 %v1086, %v1284
      %v1329 = vadd.f32 %v1087, %v1287
      %v1330 = vadd.f32 %v1088, %v1292
      %v1331 = vadd.f32 %v1089, %v1295
      %v1332 = vadd.f32 %v1090, %v1300
      %v1333 = vadd.f32 %v1091, %v1303
      %v1334 = vadd.f32 %v1092, %v1308
      %v1335 = vadd.f32 %v1093, %v1311
      %v1336 = vadd.f32 %v1094, %v1316
      %v1337 = vadd.f32 %v1095, %v1319
      %v1338 = vld [vmem:[%s1096] sm:$0xf]
      %v1339 = vld [vmem:[%s1096 + $0x4] sm:$0xf]
      %v1340 = vld [vmem:[%s1096 + $0x8] sm:$0x1]
      %v1341 = vld [vmem:[%s1096 + $0xc] sm:$0xf]
      %v1342 = vld [vmem:[%s1096 + $0x10] sm:$0xf]
      %v1343 = vld [vmem:[%s1096 + $0x14] sm:$0x1]
      %v1344 = vld [vmem:[%s1096 + $0x18] sm:$0xf]
      %v1345 = vld [vmem:[%s1096 + $0x1c] sm:$0xf]
      %v1346 = vld [vmem:[%s1096 + $0x20] sm:$0x1]
      %v1347 = vld [vmem:[%s1096 + $0x24] sm:$0xf]
      %v1348 = vld [vmem:[%s1096 + $0x28] sm:$0xf]
      %v1349 = vld [vmem:[%s1096 + $0x2c] sm:$0x1]
      %v1350 = vld [vmem:[%s1096 + $0x30] sm:$0xf]
      %v1351 = vld [vmem:[%s1096 + $0x34] sm:$0xf]
      %v1352 = vld [vmem:[%s1096 + $0x38] sm:$0x1]
      %v1353 = vld [vmem:[%s1096 + $0x3c] sm:$0xf]
      %v1354 = vld [vmem:[%s1096 + $0x40] sm:$0xf]
      %v1355 = vld [vmem:[%s1096 + $0x44] sm:$0x1]
      %v1356 = vld [vmem:[%s1096 + $0x48] sm:$0xf]
      %v1357 = vld [vmem:[%s1096 + $0x4c] sm:$0xf]
      %v1358 = vld [vmem:[%s1096 + $0x50] sm:$0x1]
      %v1359 = vld [vmem:[%s1096 + $0x54] sm:$0xf]
      %v1360 = vld [vmem:[%s1096 + $0x58] sm:$0xf]
      %v1361 = vld [vmem:[%s1096 + $0x5c] sm:$0x1]
      %v1363 = vshrl.u32 %v1338, 16
      %v1365 = vrot.slane %v1363, 4
      %v1366 = vshll.u32 %v1338, 16
      %v1368 = vrot.slane %v1366, 5
      %v1369 = vor.u32 %v1365, %v1368
      %v1370 = vrot.slane %v1369, 4
      %v1372 = vshll.u32 %v1339, 16
      %v1374 = vrot.slane %v1372, 5
      %v1375 = vsel %vm225, %v1370, %v1374
      %v1376 = vshrl.u32 %v1339, 16
      %v1378 = vrot.slane %v1376, 4
      %v1379 = vor.u32 %v1378, %v1374
      %v1380 = vrot.slane %v1379, 4
      %v1382 = vshll.u32 %v1340, 16
      %v1384 = vrot.slane %v1382, 5
      %v1385 = vsel %vm225, %v1380, %v1384
      %v1387 = vshrl.u32 %v1341, 16
      %v1389 = vrot.slane %v1387, 4
      %v1390 = vshll.u32 %v1341, 16
      %v1392 = vrot.slane %v1390, 5
      %v1393 = vor.u32 %v1389, %v1392
      %v1394 = vrot.slane %v1393, 4
      %v1396 = vshll.u32 %v1342, 16
      %v1398 = vrot.slane %v1396, 5
      %v1399 = vsel %vm225, %v1394, %v1398
      %v1400 = vshrl.u32 %v1342, 16
      %v1402 = vrot.slane %v1400, 4
      %v1403 = vor.u32 %v1402, %v1398
      %v1404 = vrot.slane %v1403, 4
      %v1406 = vshll.u32 %v1343, 16
      %v1408 = vrot.slane %v1406, 5
      %v1409 = vsel %vm225, %v1404, %v1408
      %v1411 = vshrl.u32 %v1344, 16
      %v1413 = vrot.slane %v1411, 4
      %v1414 = vshll.u32 %v1344, 16
      %v1416 = vrot.slane %v1414, 5
      %v1417 = vor.u32 %v1413, %v1416
      %v1418 = vrot.slane %v1417, 4
      %v1420 = vshll.u32 %v1345, 16
      %v1422 = vrot.slane %v1420, 5
      %v1423 = vsel %vm225, %v1418, %v1422
      %v1424 = vshrl.u32 %v1345, 16
      %v1426 = vrot.slane %v1424, 4
      %v1427 = vor.u32 %v1426, %v1422
      %v1428 = vrot.slane %v1427, 4
      %v1430 = vshll.u32 %v1346, 16
      %v1432 = vrot.slane %v1430, 5
      %v1433 = vsel %vm225, %v1428, %v1432
      %v1435 = vshrl.u32 %v1347, 16
      %v1437 = vrot.slane %v1435, 4
      %v1438 = vshll.u32 %v1347, 16
      %v1440 = vrot.slane %v1438, 5
      %v1441 = vor.u32 %v1437, %v1440
      %v1442 = vrot.slane %v1441, 4
      %v1444 = vshll.u32 %v1348, 16
      %v1446 = vrot.slane %v1444, 5
      %v1447 = vsel %vm225, %v1442, %v1446
      %v1448 = vshrl.u32 %v1348, 16
      %v1450 = vrot.slane %v1448, 4
      %v1451 = vor.u32 %v1450, %v1446
      %v1452 = vrot.slane %v1451, 4
      %v1454 = vshll.u32 %v1349, 16
      %v1456 = vrot.slane %v1454, 5
      %v1457 = vsel %vm225, %v1452, %v1456
      %v1459 = vshrl.u32 %v1350, 16
      %v1461 = vrot.slane %v1459, 4
      %v1462 = vshll.u32 %v1350, 16
      %v1464 = vrot.slane %v1462, 5
      %v1465 = vor.u32 %v1461, %v1464
      %v1466 = vrot.slane %v1465, 4
      %v1468 = vshll.u32 %v1351, 16
      %v1470 = vrot.slane %v1468, 5
      %v1471 = vsel %vm225, %v1466, %v1470
      %v1472 = vshrl.u32 %v1351, 16
      %v1474 = vrot.slane %v1472, 4
      %v1475 = vor.u32 %v1474, %v1470
      %v1476 = vrot.slane %v1475, 4
      %v1478 = vshll.u32 %v1352, 16
      %v1480 = vrot.slane %v1478, 5
      %v1481 = vsel %vm225, %v1476, %v1480
      %v1483 = vshrl.u32 %v1353, 16
      %v1485 = vrot.slane %v1483, 4
      %v1486 = vshll.u32 %v1353, 16
      %v1488 = vrot.slane %v1486, 5
      %v1489 = vor.u32 %v1485, %v1488
      %v1490 = vrot.slane %v1489, 4
      %v1492 = vshll.u32 %v1354, 16
      %v1494 = vrot.slane %v1492, 5
      %v1495 = vsel %vm225, %v1490, %v1494
      %v1496 = vshrl.u32 %v1354, 16
      %v1498 = vrot.slane %v1496, 4
      %v1499 = vor.u32 %v1498, %v1494
      %v1500 = vrot.slane %v1499, 4
      %v1502 = vshll.u32 %v1355, 16
      %v1504 = vrot.slane %v1502, 5
      %v1505 = vsel %vm225, %v1500, %v1504
      %v1507 = vshrl.u32 %v1356, 16
      %v1509 = vrot.slane %v1507, 4
      %v1510 = vshll.u32 %v1356, 16
      %v1512 = vrot.slane %v1510, 5
      %v1513 = vor.u32 %v1509, %v1512
      %v1514 = vrot.slane %v1513, 4
      %v1516 = vshll.u32 %v1357, 16
      %v1518 = vrot.slane %v1516, 5
      %v1519 = vsel %vm225, %v1514, %v1518
      %v1520 = vshrl.u32 %v1357, 16
      %v1522 = vrot.slane %v1520, 4
      %v1523 = vor.u32 %v1522, %v1518
      %v1524 = vrot.slane %v1523, 4
      %v1526 = vshll.u32 %v1358, 16
      %v1528 = vrot.slane %v1526, 5
      %v1529 = vsel %vm225, %v1524, %v1528
      %v1531 = vshrl.u32 %v1359, 16
      %v1533 = vrot.slane %v1531, 4
      %v1534 = vshll.u32 %v1359, 16
      %v1536 = vrot.slane %v1534, 5
      %v1537 = vor.u32 %v1533, %v1536
      %v1538 = vrot.slane %v1537, 4
      %v1540 = vshll.u32 %v1360, 16
      %v1542 = vrot.slane %v1540, 5
      %v1543 = vsel %vm225, %v1538, %v1542
      %v1544 = vshrl.u32 %v1360, 16
      %v1546 = vrot.slane %v1544, 4
      %v1547 = vor.u32 %v1546, %v1542
      %v1548 = vrot.slane %v1547, 4
      %v1550 = vshll.u32 %v1361, 16
      %v1552 = vrot.slane %v1550, 5
      %v1553 = vsel %vm225, %v1548, %v1552
      %v1554 = vld [vmem:[%s1 + $0x100] sm:$0xf]
      %v1555 = vld [vmem:[%s1 + $0x104] sm:$0xf]
      %v1556 = vld [vmem:[%s1 + $0x108] sm:$0xf]
      %v1557 = vld [vmem:[%s1 + $0x10c] sm:$0xf]
      %v1558 = vld [vmem:[%s1 + $0x110] sm:$0xf]
      %v1559 = vld [vmem:[%s1 + $0x114] sm:$0xf]
      %v1560 = vld [vmem:[%s1 + $0x118] sm:$0xf]
      %v1561 = vld [vmem:[%s1 + $0x11c] sm:$0xf]
      %v1562 = vld [vmem:[%s1 + $0x120] sm:$0xf]
      %v1563 = vld [vmem:[%s1 + $0x124] sm:$0xf]
      %v1564 = vld [vmem:[%s1 + $0x128] sm:$0xf]
      %v1565 = vld [vmem:[%s1 + $0x12c] sm:$0xf]
      %v1566 = vld [vmem:[%s1 + $0x130] sm:$0xf]
      %v1567 = vld [vmem:[%s1 + $0x134] sm:$0xf]
      %v1568 = vld [vmem:[%s1 + $0x138] sm:$0xf]
      %v1569 = vld [vmem:[%s1 + $0x13c] sm:$0xf]
      %v1570 = vunpack.c.l.b16 %v1375
      %v1571 = vunpack.c.l.b16 %v1385
      %v1572 = vunpack.c.l.b16 %v1399
      %v1573 = vunpack.c.l.b16 %v1409
      %v1574 = vunpack.c.l.b16 %v1423
      %v1575 = vunpack.c.l.b16 %v1433
      %v1576 = vunpack.c.l.b16 %v1447
      %v1577 = vunpack.c.l.b16 %v1457
      %v1578 = vunpack.c.l.b16 %v1471
      %v1579 = vunpack.c.l.b16 %v1481
      %v1580 = vunpack.c.l.b16 %v1495
      %v1581 = vunpack.c.l.b16 %v1505
      %v1582 = vunpack.c.l.b16 %v1519
      %v1583 = vunpack.c.l.b16 %v1529
      %v1584 = vunpack.c.l.b16 %v1543
      %v1585 = vunpack.c.l.b16 %v1553
      %v1586 = vpack.c.b16 %v1571, %v1570
      %v1587 = vpack.c.b16 %v1573, %v1572
      %v1588 = vpack.c.b16 %v1575, %v1574
      %v1589 = vpack.c.b16 %v1577, %v1576
      %v1590 = vpack.c.b16 %v1579, %v1578
      %v1591 = vpack.c.b16 %v1581, %v1580
      %v1592 = vpack.c.b16 %v1583, %v1582
      %v1593 = vpack.c.b16 %v1585, %v1584
      %v1618 = vunpack.c.l.b16 %v1554
      %v1619 = vunpack.c.l.b16 %v1555
      %v1620 = vunpack.c.l.b16 %v1556
      %v1621 = vunpack.c.l.b16 %v1557
      %v1622 = vunpack.c.l.b16 %v1558
      %v1623 = vunpack.c.l.b16 %v1559
      %v1624 = vunpack.c.l.b16 %v1560
      %v1625 = vunpack.c.l.b16 %v1561
      %v1626 = vunpack.c.l.b16 %v1562
      %v1627 = vunpack.c.l.b16 %v1563
      %v1628 = vunpack.c.l.b16 %v1564
      %v1629 = vunpack.c.l.b16 %v1565
      %v1630 = vunpack.c.l.b16 %v1566
      %v1631 = vunpack.c.l.b16 %v1567
      %v1632 = vunpack.c.l.b16 %v1568
      %v1633 = vunpack.c.l.b16 %v1569
      %v1634 = vpack.c.b16 %v1619, %v1618
      %v1635 = vpack.c.b16 %v1621, %v1620
      %v1636 = vpack.c.b16 %v1623, %v1622
      %v1637 = vpack.c.b16 %v1625, %v1624
      %v1638 = vpack.c.b16 %v1627, %v1626
      %v1639 = vpack.c.b16 %v1629, %v1628
      %v1640 = vpack.c.b16 %v1631, %v1630
      %v1641 = vpack.c.b16 %v1633, %v1632
      %1650 = vmatprep.subr.bf16.mxu0 0
      %1651 = vmatpush1.bf16.msra.mxu0 %v1634
      %1652 = vmatprep.subr.bf16.mxu0 0
      %1653 = vmatpush1.bf16.msra.mxu0 %v1635
      %1654 = vmatprep.subr.bf16.mxu0 0
      %1655 = vmatpush1.bf16.msra.mxu0 %v1636
      %1656 = vmatprep.subr.bf16.mxu0 0
      %1657 = vmatpush1.bf16.msra.mxu0 %v1637
      %1658 = vmatprep.subr.bf16.mxu0 0
      %1659 = vmatpush1.bf16.msra.mxu0 %v1638
      %1660 = vmatprep.subr.bf16.mxu0 0
      %1661 = vmatpush1.bf16.msra.mxu0 %v1639
      %1662 = vmatprep.subr.bf16.mxu0 0
      %1663 = vmatpush1.bf16.msra.mxu0 %v1640
      %1664 = vmatprep.subr.bf16.mxu0 0
      %1665 = vmatpush1.bf16.msra.mxu0 %v1641
      %1666 = vmatprep.subr.bf16.mxu0 0
      %1667 = vmatpush1.bf16.msra.mxu0 0
      %1668 = vmatprep.subr.bf16.mxu0 0
      %1669 = vmatpush1.bf16.msra.mxu0 0
      %1670 = vmatprep.subr.bf16.mxu0 0
      %1671 = vmatpush1.bf16.msra.mxu0 0
      %1672 = vmatprep.subr.bf16.mxu0 0
      %1673 = vmatpush1.bf16.msra.mxu0 0
      %1674 = vmatprep.subr.bf16.mxu0 0
      %1675 = vmatpush1.bf16.msra.mxu0 0
      %1676 = vmatprep.subr.bf16.mxu0 0
      %1677 = vmatpush1.bf16.msra.mxu0 0
      %1678 = vmatprep.subr.bf16.mxu0 0
      %1679 = vmatpush1.bf16.msra.mxu0 0
      %1680 = vmatprep.subr.bf16.mxu0 0
      %1681 = vmatpush1.bf16.msra.mxu0 0
      %1682 = vmatprep.mubr.bf16.mxu0 0
      %1683 = vmatmul.mubr.bf16.gmra.mrb[0].mxu0 %v1586
      %v1684 = vpop.f32.mrb[0].mxu0
      %v1685 = vadd.f32 0.0, %v1684
      %v1686 = vpop.f32.mrb[0].mxu0
      %v1687 = vpop.f32.mrb[0].mxu0
      %v1688 = vadd.f32 0.0, %v1687
      %v1689 = vpop.f32.mrb[0].mxu0
      %1690 = vmatprep.mubr.bf16.mxu0 0
      %1691 = vmatmul.mubr.bf16.gmra.mrb[0].mxu0 %v1587
      %v1692 = vpop.f32.mrb[0].mxu0
      %v1693 = vadd.f32 0.0, %v1692
      %v1694 = vpop.f32.mrb[0].mxu0
      %v1695 = vpop.f32.mrb[0].mxu0
      %v1696 = vadd.f32 0.0, %v1695
      %v1697 = vpop.f32.mrb[0].mxu0
      %1698 = vmatprep.mubr.bf16.mxu0 0
      %1699 = vmatmul.mubr.bf16.gmra.mrb[0].mxu0 %v1588
      %v1700 = vpop.f32.mrb[0].mxu0
      %v1701 = vadd.f32 0.0, %v1700
      %v1702 = vpop.f32.mrb[0].mxu0
      %v1703 = vpop.f32.mrb[0].mxu0
      %v1704 = vadd.f32 0.0, %v1703
      %v1705 = vpop.f32.mrb[0].mxu0
      %1706 = vmatprep.mubr.bf16.mxu0 0
      %1707 = vmatmul.mubr.bf16.gmra.mrb[0].mxu0 %v1589
      %v1708 = vpop.f32.mrb[0].mxu0
      %v1709 = vadd.f32 0.0, %v1708
      %v1710 = vpop.f32.mrb[0].mxu0
      %v1711 = vpop.f32.mrb[0].mxu0
      %v1712 = vadd.f32 0.0, %v1711
      %v1713 = vpop.f32.mrb[0].mxu0
      %1714 = vmatprep.mubr.bf16.mxu0 0
      %1715 = vmatmul.mubr.bf16.gmra.mrb[0].mxu0 %v1590
      %v1716 = vpop.f32.mrb[0].mxu0
      %v1717 = vadd.f32 0.0, %v1716
      %v1718 = vpop.f32.mrb[0].mxu0
      %v1719 = vpop.f32.mrb[0].mxu0
      %v1720 = vadd.f32 0.0, %v1719
      %v1721 = vpop.f32.mrb[0].mxu0
      %1722 = vmatprep.mubr.bf16.mxu0 0
      %1723 = vmatmul.mubr.bf16.gmra.mrb[0].mxu0 %v1591
      %v1724 = vpop.f32.mrb[0].mxu0
      %v1725 = vadd.f32 0.0, %v1724
      %v1726 = vpop.f32.mrb[0].mxu0
      %v1727 = vpop.f32.mrb[0].mxu0
      %v1728 = vadd.f32 0.0, %v1727
      %v1729 = vpop.f32.mrb[0].mxu0
      %1730 = vmatprep.mubr.bf16.mxu0 0
      %1731 = vmatmul.mubr.bf16.gmra.mrb[0].mxu0 %v1592
      %v1732 = vpop.f32.mrb[0].mxu0
      %v1733 = vadd.f32 0.0, %v1732
      %v1734 = vpop.f32.mrb[0].mxu0
      %v1735 = vpop.f32.mrb[0].mxu0
      %v1736 = vadd.f32 0.0, %v1735
      %v1737 = vpop.f32.mrb[0].mxu0
      %1738 = vmatprep.mubr.bf16.mxu0 0
      %1739 = vmatmul.mubr.bf16.gmra.mrb[0].mxu0 %v1593
      %v1740 = vpop.f32.mrb[0].mxu0
      %v1741 = vadd.f32 0.0, %v1740
      %v1742 = vpop.f32.mrb[0].mxu0
      %v1743 = vpop.f32.mrb[0].mxu0
      %v1744 = vadd.f32 0.0, %v1743
      %v1745 = vpop.f32.mrb[0].mxu0
      %1746 = vdwg.mxu0
      %v1747 = vadd.f32 %v1322, %v1685
      %v1748 = vadd.f32 %v1323, %v1688
      %v1749 = vadd.f32 %v1324, %v1693
      %v1750 = vadd.f32 %v1325, %v1696
      %v1751 = vadd.f32 %v1326, %v1701
      %v1752 = vadd.f32 %v1327, %v1704
      %v1753 = vadd.f32 %v1328, %v1709
      %v1754 = vadd.f32 %v1329, %v1712
      %v1755 = vadd.f32 %v1330, %v1717
      %v1756 = vadd.f32 %v1331, %v1720
      %v1757 = vadd.f32 %v1332, %v1725
      %v1758 = vadd.f32 %v1333, %v1728
      %v1759 = vadd.f32 %v1334, %v1733
      %v1760 = vadd.f32 %v1335, %v1736
      %v1761 = vadd.f32 %v1336, %v1741
      %v1762 = vadd.f32 %v1337, %v1744
      %v1763 = vld [vmem:[%s1096] sm:$0xe]
      %v1764 = vld [vmem:[%s1096 + $0xc] sm:$0xe]
      %v1765 = vld [vmem:[%s1096 + $0x18] sm:$0xe]
      %v1766 = vld [vmem:[%s1096 + $0x24] sm:$0xe]
      %v1767 = vld [vmem:[%s1096 + $0x30] sm:$0xe]
      %v1768 = vld [vmem:[%s1096 + $0x3c] sm:$0xe]
      %v1769 = vld [vmem:[%s1096 + $0x48] sm:$0xe]
      %v1770 = vld [vmem:[%s1096 + $0x54] sm:$0xe]
      %v1795 = vrot.slane %v1763, 5
      %v1796 = vrot.slane %v1795, 4
      %v1797 = vrot.slane %v1339, 5
      %v1798 = vsel %vm830, %v1796, %v1797
      %v1799 = vrot.slane %v1797, 4
      %v1800 = vrot.slane %v1340, 5
      %v1801 = vsel %vm830, %v1799, %v1800
      %v1802 = vrot.slane %v1764, 5
      %v1803 = vrot.slane %v1802, 4
      %v1804 = vrot.slane %v1342, 5
      %v1805 = vsel %vm830, %v1803, %v1804
      %v1806 = vrot.slane %v1804, 4
      %v1807 = vrot.slane %v1343, 5
      %v1808 = vsel %vm830, %v1806, %v1807
      %v1809 = vrot.slane %v1765, 5
      %v1810 = vrot.slane %v1809, 4
      %v1811 = vrot.slane %v1345, 5
      %v1812 = vsel %vm830, %v1810, %v1811
      %v1813 = vrot.slane %v1811, 4
      %v1814 = vrot.slane %v1346, 5
      %v1815 = vsel %vm830, %v1813, %v1814
      %v1816 = vrot.slane %v1766, 5
      %v1817 = vrot.slane %v1816, 4
      %v1818 = vrot.slane %v1348, 5
      %v1819 = vsel %vm830, %v1817, %v1818
      %v1820 = vrot.slane %v1818, 4
      %v1821 = vrot.slane %v1349, 5
      %v1822 = vsel %vm830, %v1820, %v1821
      %v1823 = vrot.slane %v1767, 5
      %v1824 = vrot.slane %v1823, 4
      %v1825 = vrot.slane %v1351, 5
      %v1826 = vsel %vm830, %v1824, %v1825
      %v1827 = vrot.slane %v1825, 4
      %v1828 = vrot.slane %v1352, 5
      %v1829 = vsel %vm830, %v1827, %v1828
      %v1830 = vrot.slane %v1768, 5
      %v1831 = vrot.slane %v1830, 4
      %v1832 = vrot.slane %v1354, 5
      %v1833 = vsel %vm830, %v1831, %v1832
      %v1834 = vrot.slane %v1832, 4
      %v1835 = vrot.slane %v1355, 5
      %v1836 = vsel %vm830, %v1834, %v1835
      %v1837 = vrot.slane %v1769, 5
      %v1838 = vrot.slane %v1837, 4
      %v1839 = vrot.slane %v1357, 5
      %v1840 = vsel %vm830, %v1838, %v1839
      %v1841 = vrot.slane %v1839, 4
      %v1842 = vrot.slane %v1358, 5
      %v1843 = vsel %vm830, %v1841, %v1842
      %v1844 = vrot.slane %v1770, 5
      %v1845 = vrot.slane %v1844, 4
      %v1846 = vrot.slane %v1360, 5
      %v1847 = vsel %vm830, %v1845, %v1846
      %v1848 = vrot.slane %v1846, 4
      %v1849 = vrot.slane %v1361, 5
      %v1850 = vsel %vm830, %v1848, %v1849
      %v1851 = vld [vmem:[%s1 + $0x140] sm:$0xf]
      %v1852 = vld [vmem:[%s1 + $0x144] sm:$0xf]
      %v1853 = vld [vmem:[%s1 + $0x148] sm:$0xf]
      %v1854 = vld [vmem:[%s1 + $0x14c] sm:$0xf]
      %v1855 = vld [vmem:[%s1 + $0x150] sm:$0xf]
      %v1856 = vld [vmem:[%s1 + $0x154] sm:$0xf]
      %v1857 = vld [vmem:[%s1 + $0x158] sm:$0xf]
      %v1858 = vld [vmem:[%s1 + $0x15c] sm:$0xf]
      %v1859 = vld [vmem:[%s1 + $0x160] sm:$0xf]
      %v1860 = vld [vmem:[%s1 + $0x164] sm:$0xf]
      %v1861 = vld [vmem:[%s1 + $0x168] sm:$0xf]
      %v1862 = vld [vmem:[%s1 + $0x16c] sm:$0xf]
      %v1863 = vld [vmem:[%s1 + $0x170] sm:$0xf]
      %v1864 = vld [vmem:[%s1 + $0x174] sm:$0xf]
      %v1865 = vld [vmem:[%s1 + $0x178] sm:$0xf]
      %v1866 = vld [vmem:[%s1 + $0x17c] sm:$0xf]
      %v1867 = vunpack.c.l.b16 %v1798
      %v1868 = vunpack.c.l.b16 %v1801
      %v1869 = vunpack.c.l.b16 %v1805
      %v1870 = vunpack.c.l.b16 %v1808
      %v1871 = vunpack.c.l.b16 %v1812
      %v1872 = vunpack.c.l.b16 %v1815
      %v1873 = vunpack.c.l.b16 %v1819
      %v1874 = vunpack.c.l.b16 %v1822
      %v1875 = vunpack.c.l.b16 %v1826
      %v1876 = vunpack.c.l.b16 %v1829
      %v1877 = vunpack.c.l.b16 %v1833
      %v1878 = vunpack.c.l.b16 %v1836
      %v1879 = vunpack.c.l.b16 %v1840
      %v1880 = vunpack.c.l.b16 %v1843
      %v1881 = vunpack.c.l.b16 %v1847
      %v1882 = vunpack.c.l.b16 %v1850
      %v1883 = vpack.c.b16 %v1868, %v1867
      %v1884 = vpack.c.b16 %v1870, %v1869
      %v1885 = vpack.c.b16 %v1872, %v1871
      %v1886 = vpack.c.b16 %v1874, %v1873
      %v1887 = vpack.c.b16 %v1876, %v1875
      %v1888 = vpack.c.b16 %v1878, %v1877
      %v1889 = vpack.c.b16 %v1880, %v1879
      %v1890 = vpack.c.b16 %v1882, %v1881
      %v1915 = vunpack.c.l.b16 %v1851
      %v1916 = vunpack.c.l.b16 %v1852
      %v1917 = vunpack.c.l.b16 %v1853
      %v1918 = vunpack.c.l.b16 %v1854
      %v1919 = vunpack.c.l.b16 %v1855
      %v1920 = vunpack.c.l.b16 %v1856
      %v1921 = vunpack.c.l.b16 %v1857
      %v1922 = vunpack.c.l.b16 %v1858
      %v1923 = vunpack.c.l.b16 %v1859
      %v1924 = vunpack.c.l.b16 %v1860
      %v1925 = vunpack.c.l.b16 %v1861
      %v1926 = vunpack.c.l.b16 %v1862
      %v1927 = vunpack.c.l.b16 %v1863
      %v1928 = vunpack.c.l.b16 %v1864
      %v1929 = vunpack.c.l.b16 %v1865
      %v1930 = vunpack.c.l.b16 %v1866
      %v1931 = vpack.c.b16 %v1916, %v1915
      %v1932 = vpack.c.b16 %v1918, %v1917
      %v1933 = vpack.c.b16 %v1920, %v1919
      %v1934 = vpack.c.b16 %v1922, %v1921
      %v1935 = vpack.c.b16 %v1924, %v1923
      %v1936 = vpack.c.b16 %v1926, %v1925
      %v1937 = vpack.c.b16 %v1928, %v1927
      %v1938 = vpack.c.b16 %v1930, %v1929
      %1947 = vmatprep.subr.bf16.mxu0 0
      %1948 = vmatpush1.bf16.msra.mxu0 %v1931
      %1949 = vmatprep.subr.bf16.mxu0 0
      %1950 = vmatpush1.bf16.msra.mxu0 %v1932
      %1951 = vmatprep.subr.bf16.mxu0 0
      %1952 = vmatpush1.bf16.msra.mxu0 %v1933
      %1953 = vmatprep.subr.bf16.mxu0 0
      %1954 = vmatpush1.bf16.msra.mxu0 %v1934
      %1955 = vmatprep.subr.bf16.mxu0 0
      %1956 = vmatpush1.bf16.msra.mxu0 %v1935
      %1957 = vmatprep.subr.bf16.mxu0 0
      %1958 = vmatpush1.bf16.msra.mxu0 %v1936
      %1959 = vmatprep.subr.bf16.mxu0 0
      %1960 = vmatpush1.bf16.msra.mxu0 %v1937
      %1961 = vmatprep.subr.bf16.mxu0 0
      %1962 = vmatpush1.bf16.msra.mxu0 %v1938
      %1963 = vmatprep.subr.bf16.mxu0 0
      %1964 = vmatpush1.bf16.msra.mxu0 0
      %1965 = vmatprep.subr.bf16.mxu0 0
      %1966 = vmatpush1.bf16.msra.mxu0 0
      %1967 = vmatprep.subr.bf16.mxu0 0
      %1968 = vmatpush1.bf16.msra.mxu0 0
      %1969 = vmatprep.subr.bf16.mxu0 0
      %1970 = vmatpush1.bf16.msra.mxu0 0
      %1971 = vmatprep.subr.bf16.mxu0 0
      %1972 = vmatpush1.bf16.msra.mxu0 0
      %1973 = vmatprep.subr.bf16.mxu0 0
      %1974 = vmatpush1.bf16.msra.mxu0 0
      %1975 = vmatprep.subr.bf16.mxu0 0
      %1976 = vmatpush1.bf16.msra.mxu0 0
      %1977 = vmatprep.subr.bf16.mxu0 0
      %1978 = vmatpush1.bf16.msra.mxu0 0
      %1979 = vmatprep.mubr.bf16.mxu0 0
      %1980 = vmatmul.mubr.bf16.gmra.mrb[0].mxu0 %v1883
      %v1981 = vpop.f32.mrb[0].mxu0
      %v1982 = vadd.f32 0.0, %v1981
      %v1983 = vpop.f32.mrb[0].mxu0
      %v1984 = vpop.f32.mrb[0].mxu0
      %v1985 = vadd.f32 0.0, %v1984
      %v1986 = vpop.f32.mrb[0].mxu0
      %1987 = vmatprep.mubr.bf16.mxu0 0
      %1988 = vmatmul.mubr.bf16.gmra.mrb[0].mxu0 %v1884
      %v1989 = vpop.f32.mrb[0].mxu0
      %v1990 = vadd.f32 0.0, %v1989
      %v1991 = vpop.f32.mrb[0].mxu0
      %v1992 = vpop.f32.mrb[0].mxu0
      %v1993 = vadd.f32 0.0, %v1992
      %v1994 = vpop.f32.mrb[0].mxu0
      %1995 = vmatprep.mubr.bf16.mxu0 0
      %1996 = vmatmul.mubr.bf16.gmra.mrb[0].mxu0 %v1885
      %v1997 = vpop.f32.mrb[0].mxu0
      %v1998 = vadd.f32 0.0, %v1997
      %v1999 = vpop.f32.mrb[0].mxu0
      %v2000 = vpop.f32.mrb[0].mxu0
      %v2001 = vadd.f32 0.0, %v2000
      %v2002 = vpop.f32.mrb[0].mxu0
      %2003 = vmatprep.mubr.bf16.mxu0 0
      %2004 = vmatmul.mubr.bf16.gmra.mrb[0].mxu0 %v1886
      %v2005 = vpop.f32.mrb[0].mxu0
      %v2006 = vadd.f32 0.0, %v2005
      %v2007 = vpop.f32.mrb[0].mxu0
      %v2008 = vpop.f32.mrb[0].mxu0
      %v2009 = vadd.f32 0.0, %v2008
      %v2010 = vpop.f32.mrb[0].mxu0
      %2011 = vmatprep.mubr.bf16.mxu0 0
      %2012 = vmatmul.mubr.bf16.gmra.mrb[0].mxu0 %v1887
      %v2013 = vpop.f32.mrb[0].mxu0
      %v2014 = vadd.f32 0.0, %v2013
      %v2015 = vpop.f32.mrb[0].mxu0
      %v2016 = vpop.f32.mrb[0].mxu0
      %v2017 = vadd.f32 0.0, %v2016
      %v2018 = vpop.f32.mrb[0].mxu0
      %2019 = vmatprep.mubr.bf16.mxu0 0
      %2020 = vmatmul.mubr.bf16.gmra.mrb[0].mxu0 %v1888
      %v2021 = vpop.f32.mrb[0].mxu0
      %v2022 = vadd.f32 0.0, %v2021
      %v2023 = vpop.f32.mrb[0].mxu0
      %v2024 = vpop.f32.mrb[0].mxu0
      %v2025 = vadd.f32 0.0, %v2024
      %v2026 = vpop.f32.mrb[0].mxu0
      %2027 = vmatprep.mubr.bf16.mxu0 0
      %2028 = vmatmul.mubr.bf16.gmra.mrb[0].mxu0 %v1889
      %v2029 = vpop.f32.mrb[0].mxu0
      %v2030 = vadd.f32 0.0, %v2029
      %v2031 = vpop.f32.mrb[0].mxu0
      %v2032 = vpop.f32.mrb[0].mxu0
      %v2033 = vadd.f32 0.0, %v2032
      %v2034 = vpop.f32.mrb[0].mxu0
      %2035 = vmatprep.mubr.bf16.mxu0 0
      %2036 = vmatmul.mubr.bf16.gmra.mrb[0].mxu0 %v1890
      %v2037 = vpop.f32.mrb[0].mxu0
      %v2038 = vadd.f32 0.0, %v2037
      %v2039 = vpop.f32.mrb[0].mxu0
      %v2040 = vpop.f32.mrb[0].mxu0
      %v2041 = vadd.f32 0.0, %v2040
      %v2042 = vpop.f32.mrb[0].mxu0
      %2043 = vdwg.mxu0
      %v2044 = vadd.f32 %v1747, %v1982
      %v2045 = vadd.f32 %v1748, %v1985
      %v2046 = vadd.f32 %v1749, %v1990
      %v2047 = vadd.f32 %v1750, %v1993
      %v2048 = vadd.f32 %v1751, %v1998
      %v2049 = vadd.f32 %v1752, %v2001
      %v2050 = vadd.f32 %v1753, %v2006
      %v2051 = vadd.f32 %v1754, %v2009
      %v2052 = vadd.f32 %v1755, %v2014
      %v2053 = vadd.f32 %v1756, %v2017
      %v2054 = vadd.f32 %v1757, %v2022
      %v2055 = vadd.f32 %v1758, %v2025
      %v2056 = vadd.f32 %v1759, %v2030
      %v2057 = vadd.f32 %v1760, %v2033
      %v2058 = vadd.f32 %v1761, %v2038
      %v2059 = vadd.f32 %v1762, %v2041
      %s2060 = scalar_lea.vmem %s172, 24
      %v2061 = vld [vmem:[%s2060] sm:$0xf]
      %v2062 = vld [vmem:[%s2060 + $0x4] sm:$0xf]
      %v2063 = vld [vmem:[%s2060 + $0xc] sm:$0xf]
      %v2064 = vld [vmem:[%s2060 + $0x10] sm:$0xf]
      %v2065 = vld [vmem:[%s2060 + $0x18] sm:$0xf]
      %v2066 = vld [vmem:[%s2060 + $0x1c] sm:$0xf]
      %v2067 = vld [vmem:[%s2060 + $0x24] sm:$0xf]
      %v2068 = vld [vmem:[%s2060 + $0x28] sm:$0xf]
      %v2069 = vld [vmem:[%s2060 + $0x30] sm:$0xf]
      %v2070 = vld [vmem:[%s2060 + $0x34] sm:$0xf]
      %v2071 = vld [vmem:[%s2060 + $0x3c] sm:$0xf]
      %v2072 = vld [vmem:[%s2060 + $0x40] sm:$0xf]
      %v2073 = vld [vmem:[%s2060 + $0x48] sm:$0xf]
      %v2074 = vld [vmem:[%s2060 + $0x4c] sm:$0xf]
      %v2075 = vld [vmem:[%s2060 + $0x54] sm:$0xf]
      %v2076 = vld [vmem:[%s2060 + $0x58] sm:$0xf]
      %v2077 = vld [vmem:[%s1 + $0x180] sm:$0xf]
      %v2078 = vld [vmem:[%s1 + $0x184] sm:$0xf]
      %v2079 = vld [vmem:[%s1 + $0x188] sm:$0xf]
      %v2080 = vld [vmem:[%s1 + $0x18c] sm:$0xf]
      %v2081 = vld [vmem:[%s1 + $0x190] sm:$0xf]
      %v2082 = vld [vmem:[%s1 + $0x194] sm:$0xf]
      %v2083 = vld [vmem:[%s1 + $0x198] sm:$0xf]
      %v2084 = vld [vmem:[%s1 + $0x19c] sm:$0xf]
      %v2085 = vld [vmem:[%s1 + $0x1a0] sm:$0xf]
      %v2086 = vld [vmem:[%s1 + $0x1a4] sm:$0xf]
      %v2087 = vld [vmem:[%s1 + $0x1a8] sm:$0xf]
      %v2088 = vld [vmem:[%s1 + $0x1ac] sm:$0xf]
      %v2089 = vld [vmem:[%s1 + $0x1b0] sm:$0xf]
      %v2090 = vld [vmem:[%s1 + $0x1b4] sm:$0xf]
      %v2091 = vld [vmem:[%s1 + $0x1b8] sm:$0xf]
      %v2092 = vld [vmem:[%s1 + $0x1bc] sm:$0xf]
      %v2109 = vunpack.c.l.b16 %v2061
      %v2110 = vunpack.c.l.b16 %v2062
      %v2111 = vunpack.c.l.b16 %v2063
      %v2112 = vunpack.c.l.b16 %v2064
      %v2113 = vunpack.c.l.b16 %v2065
      %v2114 = vunpack.c.l.b16 %v2066
      %v2115 = vunpack.c.l.b16 %v2067
      %v2116 = vunpack.c.l.b16 %v2068
      %v2117 = vunpack.c.l.b16 %v2069
      %v2118 = vunpack.c.l.b16 %v2070
      %v2119 = vunpack.c.l.b16 %v2071
      %v2120 = vunpack.c.l.b16 %v2072
      %v2121 = vunpack.c.l.b16 %v2073
      %v2122 = vunpack.c.l.b16 %v2074
      %v2123 = vunpack.c.l.b16 %v2075
      %v2124 = vunpack.c.l.b16 %v2076
      %v2125 = vpack.c.b16 %v2110, %v2109
      %v2126 = vpack.c.b16 %v2112, %v2111
      %v2127 = vpack.c.b16 %v2114, %v2113
      %v2128 = vpack.c.b16 %v2116, %v2115
      %v2129 = vpack.c.b16 %v2118, %v2117
      %v2130 = vpack.c.b16 %v2120, %v2119
      %v2131 = vpack.c.b16 %v2122, %v2121
      %v2132 = vpack.c.b16 %v2124, %v2123
      %v2157 = vunpack.c.l.b16 %v2077
      %v2158 = vunpack.c.l.b16 %v2078
      %v2159 = vunpack.c.l.b16 %v2079
      %v2160 = vunpack.c.l.b16 %v2080
      %v2161 = vunpack.c.l.b16 %v2081
      %v2162 = vunpack.c.l.b16 %v2082
      %v2163 = vunpack.c.l.b16 %v2083
      %v2164 = vunpack.c.l.b16 %v2084
      %v2165 = vunpack.c.l.b16 %v2085
      %v2166 = vunpack.c.l.b16 %v2086
      %v2167 = vunpack.c.l.b16 %v2087
      %v2168 = vunpack.c.l.b16 %v2088
      %v2169 = vunpack.c.l.b16 %v2089
      %v2170 = vunpack.c.l.b16 %v2090
      %v2171 = vunpack.c.l.b16 %v2091
      %v2172 = vunpack.c.l.b16 %v2092
      %v2173 = vpack.c.b16 %v2158, %v2157
      %v2174 = vpack.c.b16 %v2160, %v2159
      %v2175 = vpack.c.b16 %v2162, %v2161
      %v2176 = vpack.c.b16 %v2164, %v2163
      %v2177 = vpack.c.b16 %v2166, %v2165
      %v2178 = vpack.c.b16 %v2168, %v2167
      %v2179 = vpack.c.b16 %v2170, %v2169
      %v2180 = vpack.c.b16 %v2172, %v2171
      %2189 = vmatprep.subr.bf16.mxu0 0
      %2190 = vmatpush1.bf16.msra.mxu0 %v2173
      %2191 = vmatprep.subr.bf16.mxu0 0
      %2192 = vmatpush1.bf16.msra.mxu0 %v2174
      %2193 = vmatprep.subr.bf16.mxu0 0
      %2194 = vmatpush1.bf16.msra.mxu0 %v2175
      %2195 = vmatprep.subr.bf16.mxu0 0
      %2196 = vmatpush1.bf16.msra.mxu0 %v2176
      %2197 = vmatprep.subr.bf16.mxu0 0
      %2198 = vmatpush1.bf16.msra.mxu0 %v2177
      %2199 = vmatprep.subr.bf16.mxu0 0
      %2200 = vmatpush1.bf16.msra.mxu0 %v2178
      %2201 = vmatprep.subr.bf16.mxu0 0
      %2202 = vmatpush1.bf16.msra.mxu0 %v2179
      %2203 = vmatprep.subr.bf16.mxu0 0
      %2204 = vmatpush1.bf16.msra.mxu0 %v2180
      %2205 = vmatprep.subr.bf16.mxu0 0
      %2206 = vmatpush1.bf16.msra.mxu0 0
      %2207 = vmatprep.subr.bf16.mxu0 0
      %2208 = vmatpush1.bf16.msra.mxu0 0
      %2209 = vmatprep.subr.bf16.mxu0 0
      %2210 = vmatpush1.bf16.msra.mxu0 0
      %2211 = vmatprep.subr.bf16.mxu0 0
      %2212 = vmatpush1.bf16.msra.mxu0 0
      %2213 = vmatprep.subr.bf16.mxu0 0
      %2214 = vmatpush1.bf16.msra.mxu0 0
      %2215 = vmatprep.subr.bf16.mxu0 0
      %2216 = vmatpush1.bf16.msra.mxu0 0
      %2217 = vmatprep.subr.bf16.mxu0 0
      %2218 = vmatpush1.bf16.msra.mxu0 0
      %2219 = vmatprep.subr.bf16.mxu0 0
      %2220 = vmatpush1.bf16.msra.mxu0 0
      %2221 = vmatprep.mubr.bf16.mxu0 0
      %2222 = vmatmul.mubr.bf16.gmra.mrb[0].mxu0 %v2125
      %v2223 = vpop.f32.mrb[0].mxu0
      %v2224 = vadd.f32 0.0, %v2223
      %v2225 = vpop.f32.mrb[0].mxu0
      %v2226 = vpop.f32.mrb[0].mxu0
      %v2227 = vadd.f32 0.0, %v2226
      %v2228 = vpop.f32.mrb[0].mxu0
      %2229 = vmatprep.mubr.bf16.mxu0 0
      %2230 = vmatmul.mubr.bf16.gmra.mrb[0].mxu0 %v2126
      %v2231 = vpop.f32.mrb[0].mxu0
      %v2232 = vadd.f32 0.0, %v2231
      %v2233 = vpop.f32.mrb[0].mxu0
      %v2234 = vpop.f32.mrb[0].mxu0
      %v2235 = vadd.f32 0.0, %v2234
      %v2236 = vpop.f32.mrb[0].mxu0
      %2237 = vmatprep.mubr.bf16.mxu0 0
      %2238 = vmatmul.mubr.bf16.gmra.mrb[0].mxu0 %v2127
      %v2239 = vpop.f32.mrb[0].mxu0
      %v2240 = vadd.f32 0.0, %v2239
      %v2241 = vpop.f32.mrb[0].mxu0
      %v2242 = vpop.f32.mrb[0].mxu0
      %v2243 = vadd.f32 0.0, %v2242
      %v2244 = vpop.f32.mrb[0].mxu0
      %2245 = vmatprep.mubr.bf16.mxu0 0
      %2246 = vmatmul.mubr.bf16.gmra.mrb[0].mxu0 %v2128
      %v2247 = vpop.f32.mrb[0].mxu0
      %v2248 = vadd.f32 0.0, %v2247
      %v2249 = vpop.f32.mrb[0].mxu0
      %v2250 = vpop.f32.mrb[0].mxu0
      %v2251 = vadd.f32 0.0, %v2250
      %v2252 = vpop.f32.mrb[0].mxu0
      %2253 = vmatprep.mubr.bf16.mxu0 0
      %2254 = vmatmul.mubr.bf16.gmra.mrb[0].mxu0 %v2129
      %v2255 = vpop.f32.mrb[0].mxu0
      %v2256 = vadd.f32 0.0, %v2255
      %v2257 = vpop.f32.mrb[0].mxu0
      %v2258 = vpop.f32.mrb[0].mxu0
      %v2259 = vadd.f32 0.0, %v2258
      %v2260 = vpop.f32.mrb[0].mxu0
      %2261 = vmatprep.mubr.bf16.mxu0 0
      %2262 = vmatmul.mubr.bf16.gmra.mrb[0].mxu0 %v2130
      %v2263 = vpop.f32.mrb[0].mxu0
      %v2264 = vadd.f32 0.0, %v2263
      %v2265 = vpop.f32.mrb[0].mxu0
      %v2266 = vpop.f32.mrb[0].mxu0
      %v2267 = vadd.f32 0.0, %v2266
      %v2268 = vpop.f32.mrb[0].mxu0
      %2269 = vmatprep.mubr.bf16.mxu0 0
      %2270 = vmatmul.mubr.bf16.gmra.mrb[0].mxu0 %v2131
      %v2271 = vpop.f32.mrb[0].mxu0
      %v2272 = vadd.f32 0.0, %v2271
      %v2273 = vpop.f32.mrb[0].mxu0
      %v2274 = vpop.f32.mrb[0].mxu0
      %v2275 = vadd.f32 0.0, %v2274
      %v2276 = vpop.f32.mrb[0].mxu0
      %2277 = vmatprep.mubr.bf16.mxu0 0
      %2278 = vmatmul.mubr.bf16.gmra.mrb[0].mxu0 %v2132
      %v2279 = vpop.f32.mrb[0].mxu0
      %v2280 = vadd.f32 0.0, %v2279
      %v2281 = vpop.f32.mrb[0].mxu0
      %v2282 = vpop.f32.mrb[0].mxu0
      %v2283 = vadd.f32 0.0, %v2282
      %v2284 = vpop.f32.mrb[0].mxu0
      %2285 = vdwg.mxu0
      %v2286 = vadd.f32 %v2044, %v2224
      %v2287 = vadd.f32 %v2045, %v2227
      %v2288 = vadd.f32 %v2046, %v2232
      %v2289 = vadd.f32 %v2047, %v2235
      %v2290 = vadd.f32 %v2048, %v2240
      %v2291 = vadd.f32 %v2049, %v2243
      %v2292 = vadd.f32 %v2050, %v2248
      %v2293 = vadd.f32 %v2051, %v2251
      %v2294 = vadd.f32 %v2052, %v2256
      %v2295 = vadd.f32 %v2053, %v2259
      %v2296 = vadd.f32 %v2054, %v2264
      %v2297 = vadd.f32 %v2055, %v2267
      %v2298 = vadd.f32 %v2056, %v2272
      %v2299 = vadd.f32 %v2057, %v2275
      %v2300 = vadd.f32 %v2058, %v2280
      %v2301 = vadd.f32 %v2059, %v2283
      %v2302 = vld [vmem:[%s2060] sm:$0xf]
      %v2303 = vld [vmem:[%s2060 + $0x4] sm:$0xf]
      %v2304 = vld [vmem:[%s2060 + $0x8] sm:$0x1]
      %v2305 = vld [vmem:[%s2060 + $0xc] sm:$0xf]
      %v2306 = vld [vmem:[%s2060 + $0x10] sm:$0xf]
      %v2307 = vld [vmem:[%s2060 + $0x14] sm:$0x1]
      %v2308 = vld [vmem:[%s2060 + $0x18] sm:$0xf]
      %v2309 = vld [vmem:[%s2060 + $0x1c] sm:$0xf]
      %v2310 = vld [vmem:[%s2060 + $0x20] sm:$0x1]
      %v2311 = vld [vmem:[%s2060 + $0x24] sm:$0xf]
      %v2312 = vld [vmem:[%s2060 + $0x28] sm:$0xf]
      %v2313 = vld [vmem:[%s2060 + $0x2c] sm:$0x1]
      %v2314 = vld [vmem:[%s2060 + $0x30] sm:$0xf]
      %v2315 = vld [vmem:[%s2060 + $0x34] sm:$0xf]
      %v2316 = vld [vmem:[%s2060 + $0x38] sm:$0x1]
      %v2317 = vld [vmem:[%s2060 + $0x3c] sm:$0xf]
      %v2318 = vld [vmem:[%s2060 + $0x40] sm:$0xf]
      %v2319 = vld [vmem:[%s2060 + $0x44] sm:$0x1]
      %v2320 = vld [vmem:[%s2060 + $0x48] sm:$0xf]
      %v2321 = vld [vmem:[%s2060 + $0x4c] sm:$0xf]
      %v2322 = vld [vmem:[%s2060 + $0x50] sm:$0x1]
      %v2323 = vld [vmem:[%s2060 + $0x54] sm:$0xf]
      %v2324 = vld [vmem:[%s2060 + $0x58] sm:$0xf]
      %v2325 = vld [vmem:[%s2060 + $0x5c] sm:$0x1]
      %v2327 = vshrl.u32 %v2302, 16
      %v2329 = vrot.slane %v2327, 4
      %v2330 = vshll.u32 %v2302, 16
      %v2332 = vrot.slane %v2330, 5
      %v2333 = vor.u32 %v2329, %v2332
      %v2334 = vrot.slane %v2333, 4
      %v2336 = vshll.u32 %v2303, 16
      %v2338 = vrot.slane %v2336, 5
      %v2339 = vsel %vm225, %v2334, %v2338
      %v2340 = vshrl.u32 %v2303, 16
      %v2342 = vrot.slane %v2340, 4
      %v2343 = vor.u32 %v2342, %v2338
      %v2344 = vrot.slane %v2343, 4
      %v2346 = vshll.u32 %v2304, 16
      %v2348 = vrot.slane %v2346, 5
      %v2349 = vsel %vm225, %v2344, %v2348
      %v2351 = vshrl.u32 %v2305, 16
      %v2353 = vrot.slane %v2351, 4
      %v2354 = vshll.u32 %v2305, 16
      %v2356 = vrot.slane %v2354, 5
      %v2357 = vor.u32 %v2353, %v2356
      %v2358 = vrot.slane %v2357, 4
      %v2360 = vshll.u32 %v2306, 16
      %v2362 = vrot.slane %v2360, 5
      %v2363 = vsel %vm225, %v2358, %v2362
      %v2364 = vshrl.u32 %v2306, 16
      %v2366 = vrot.slane %v2364, 4
      %v2367 = vor.u32 %v2366, %v2362
      %v2368 = vrot.slane %v2367, 4
      %v2370 = vshll.u32 %v2307, 16
      %v2372 = vrot.slane %v2370, 5
      %v2373 = vsel %vm225, %v2368, %v2372
      %v2375 = vshrl.u32 %v2308, 16
      %v2377 = vrot.slane %v2375, 4
      %v2378 = vshll.u32 %v2308, 16
      %v2380 = vrot.slane %v2378, 5
      %v2381 = vor.u32 %v2377, %v2380
      %v2382 = vrot.slane %v2381, 4
      %v2384 = vshll.u32 %v2309, 16
      %v2386 = vrot.slane %v2384, 5
      %v2387 = vsel %vm225, %v2382, %v2386
      %v2388 = vshrl.u32 %v2309, 16
      %v2390 = vrot.slane %v2388, 4
      %v2391 = vor.u32 %v2390, %v2386
      %v2392 = vrot.slane %v2391, 4
      %v2394 = vshll.u32 %v2310, 16
      %v2396 = vrot.slane %v2394, 5
      %v2397 = vsel %vm225, %v2392, %v2396
      %v2399 = vshrl.u32 %v2311, 16
      %v2401 = vrot.slane %v2399, 4
      %v2402 = vshll.u32 %v2311, 16
      %v2404 = vrot.slane %v2402, 5
      %v2405 = vor.u32 %v2401, %v2404
      %v2406 = vrot.slane %v2405, 4
      %v2408 = vshll.u32 %v2312, 16
      %v2410 = vrot.slane %v2408, 5
      %v2411 = vsel %vm225, %v2406, %v2410
      %v2412 = vshrl.u32 %v2312, 16
      %v2414 = vrot.slane %v2412, 4
      %v2415 = vor.u32 %v2414, %v2410
      %v2416 = vrot.slane %v2415, 4
      %v2418 = vshll.u32 %v2313, 16
      %v2420 = vrot.slane %v2418, 5
      %v2421 = vsel %vm225, %v2416, %v2420
      %v2423 = vshrl.u32 %v2314, 16
      %v2425 = vrot.slane %v2423, 4
      %v2426 = vshll.u32 %v2314, 16
      %v2428 = vrot.slane %v2426, 5
      %v2429 = vor.u32 %v2425, %v2428
      %v2430 = vrot.slane %v2429, 4
      %v2432 = vshll.u32 %v2315, 16
      %v2434 = vrot.slane %v2432, 5
      %v2435 = vsel %vm225, %v2430, %v2434
      %v2436 = vshrl.u32 %v2315, 16
      %v2438 = vrot.slane %v2436, 4
      %v2439 = vor.u32 %v2438, %v2434
      %v2440 = vrot.slane %v2439, 4
      %v2442 = vshll.u32 %v2316, 16
      %v2444 = vrot.slane %v2442, 5
      %v2445 = vsel %vm225, %v2440, %v2444
      %v2447 = vshrl.u32 %v2317, 16
      %v2449 = vrot.slane %v2447, 4
      %v2450 = vshll.u32 %v2317, 16
      %v2452 = vrot.slane %v2450, 5
      %v2453 = vor.u32 %v2449, %v2452
      %v2454 = vrot.slane %v2453, 4
      %v2456 = vshll.u32 %v2318, 16
      %v2458 = vrot.slane %v2456, 5
      %v2459 = vsel %vm225, %v2454, %v2458
      %v2460 = vshrl.u32 %v2318, 16
      %v2462 = vrot.slane %v2460, 4
      %v2463 = vor.u32 %v2462, %v2458
      %v2464 = vrot.slane %v2463, 4
      %v2466 = vshll.u32 %v2319, 16
      %v2468 = vrot.slane %v2466, 5
      %v2469 = vsel %vm225, %v2464, %v2468
      %v2471 = vshrl.u32 %v2320, 16
      %v2473 = vrot.slane %v2471, 4
      %v2474 = vshll.u32 %v2320, 16
      %v2476 = vrot.slane %v2474, 5
      %v2477 = vor.u32 %v2473, %v2476
      %v2478 = vrot.slane %v2477, 4
      %v2480 = vshll.u32 %v2321, 16
      %v2482 = vrot.slane %v2480, 5
      %v2483 = vsel %vm225, %v2478, %v2482
      %v2484 = vshrl.u32 %v2321, 16
      %v2486 = vrot.slane %v2484, 4
      %v2487 = vor.u32 %v2486, %v2482
      %v2488 = vrot.slane %v2487, 4
      %v2490 = vshll.u32 %v2322, 16
      %v2492 = vrot.slane %v2490, 5
      %v2493 = vsel %vm225, %v2488, %v2492
      %v2495 = vshrl.u32 %v2323, 16
      %v2497 = vrot.slane %v2495, 4
      %v2498 = vshll.u32 %v2323, 16
      %v2500 = vrot.slane %v2498, 5
      %v2501 = vor.u32 %v2497, %v2500
      %v2502 = vrot.slane %v2501, 4
      %v2504 = vshll.u32 %v2324, 16
      %v2506 = vrot.slane %v2504, 5
      %v2507 = vsel %vm225, %v2502, %v2506
      %v2508 = vshrl.u32 %v2324, 16
      %v2510 = vrot.slane %v2508, 4
      %v2511 = vor.u32 %v2510, %v2506
      %v2512 = vrot.slane %v2511, 4
      %v2514 = vshll.u32 %v2325, 16
      %v2516 = vrot.slane %v2514, 5
      %v2517 = vsel %vm225, %v2512, %v2516
      %v2518 = vld [vmem:[%s1 + $0x1c0] sm:$0xf]
      %v2519 = vld [vmem:[%s1 + $0x1c4] sm:$0xf]
      %v2520 = vld [vmem:[%s1 + $0x1c8] sm:$0xf]
      %v2521 = vld [vmem:[%s1 + $0x1cc] sm:$0xf]
      %v2522 = vld [vmem:[%s1 + $0x1d0] sm:$0xf]
      %v2523 = vld [vmem:[%s1 + $0x1d4] sm:$0xf]
      %v2524 = vld [vmem:[%s1 + $0x1d8] sm:$0xf]
      %v2525 = vld [vmem:[%s1 + $0x1dc] sm:$0xf]
      %v2526 = vld [vmem:[%s1 + $0x1e0] sm:$0xf]
      %v2527 = vld [vmem:[%s1 + $0x1e4] sm:$0xf]
      %v2528 = vld [vmem:[%s1 + $0x1e8] sm:$0xf]
      %v2529 = vld [vmem:[%s1 + $0x1ec] sm:$0xf]
      %v2530 = vld [vmem:[%s1 + $0x1f0] sm:$0xf]
      %v2531 = vld [vmem:[%s1 + $0x1f4] sm:$0xf]
      %v2532 = vld [vmem:[%s1 + $0x1f8] sm:$0xf]
      %v2533 = vld [vmem:[%s1 + $0x1fc] sm:$0xf]
      %v2534 = vunpack.c.l.b16 %v2339
      %v2535 = vunpack.c.l.b16 %v2349
      %v2536 = vunpack.c.l.b16 %v2363
      %v2537 = vunpack.c.l.b16 %v2373
      %v2538 = vunpack.c.l.b16 %v2387
      %v2539 = vunpack.c.l.b16 %v2397
      %v2540 = vunpack.c.l.b16 %v2411
      %v2541 = vunpack.c.l.b16 %v2421
      %v2542 = vunpack.c.l.b16 %v2435
      %v2543 = vunpack.c.l.b16 %v2445
      %v2544 = vunpack.c.l.b16 %v2459
      %v2545 = vunpack.c.l.b16 %v2469
      %v2546 = vunpack.c.l.b16 %v2483
      %v2547 = vunpack.c.l.b16 %v2493
      %v2548 = vunpack.c.l.b16 %v2507
      %v2549 = vunpack.c.l.b16 %v2517
      %v2550 = vpack.c.b16 %v2535, %v2534
      %v2551 = vpack.c.b16 %v2537, %v2536
      %v2552 = vpack.c.b16 %v2539, %v2538
      %v2553 = vpack.c.b16 %v2541, %v2540
      %v2554 = vpack.c.b16 %v2543, %v2542
      %v2555 = vpack.c.b16 %v2545, %v2544
      %v2556 = vpack.c.b16 %v2547, %v2546
      %v2557 = vpack.c.b16 %v2549, %v2548
      %v2582 = vunpack.c.l.b16 %v2518
      %v2583 = vunpack.c.l.b16 %v2519
      %v2584 = vunpack.c.l.b16 %v2520
      %v2585 = vunpack.c.l.b16 %v2521
      %v2586 = vunpack.c.l.b16 %v2522
      %v2587 = vunpack.c.l.b16 %v2523
      %v2588 = vunpack.c.l.b16 %v2524
      %v2589 = vunpack.c.l.b16 %v2525
      %v2590 = vunpack.c.l.b16 %v2526
      %v2591 = vunpack.c.l.b16 %v2527
      %v2592 = vunpack.c.l.b16 %v2528
      %v2593 = vunpack.c.l.b16 %v2529
      %v2594 = vunpack.c.l.b16 %v2530
      %v2595 = vunpack.c.l.b16 %v2531
      %v2596 = vunpack.c.l.b16 %v2532
      %v2597 = vunpack.c.l.b16 %v2533
      %v2598 = vpack.c.b16 %v2583, %v2582
      %v2599 = vpack.c.b16 %v2585, %v2584
      %v2600 = vpack.c.b16 %v2587, %v2586
      %v2601 = vpack.c.b16 %v2589, %v2588
      %v2602 = vpack.c.b16 %v2591, %v2590
      %v2603 = vpack.c.b16 %v2593, %v2592
      %v2604 = vpack.c.b16 %v2595, %v2594
      %v2605 = vpack.c.b16 %v2597, %v2596
      %2614 = vmatprep.subr.bf16.mxu0 0
      %2615 = vmatpush1.bf16.msra.mxu0 %v2598
      %2616 = vmatprep.subr.bf16.mxu0 0
      %2617 = vmatpush1.bf16.msra.mxu0 %v2599
      %2618 = vmatprep.subr.bf16.mxu0 0
      %2619 = vmatpush1.bf16.msra.mxu0 %v2600
      %2620 = vmatprep.subr.bf16.mxu0 0
      %2621 = vmatpush1.bf16.msra.mxu0 %v2601
      %2622 = vmatprep.subr.bf16.mxu0 0
      %2623 = vmatpush1.bf16.msra.mxu0 %v2602
      %2624 = vmatprep.subr.bf16.mxu0 0
      %2625 = vmatpush1.bf16.msra.mxu0 %v2603
      %2626 = vmatprep.subr.bf16.mxu0 0
      %2627 = vmatpush1.bf16.msra.mxu0 %v2604
      %2628 = vmatprep.subr.bf16.mxu0 0
      %2629 = vmatpush1.bf16.msra.mxu0 %v2605
      %2630 = vmatprep.subr.bf16.mxu0 0
      %2631 = vmatpush1.bf16.msra.mxu0 0
      %2632 = vmatprep.subr.bf16.mxu0 0
      %2633 = vmatpush1.bf16.msra.mxu0 0
      %2634 = vmatprep.subr.bf16.mxu0 0
      %2635 = vmatpush1.bf16.msra.mxu0 0
      %2636 = vmatprep.subr.bf16.mxu0 0
      %2637 = vmatpush1.bf16.msra.mxu0 0
      %2638 = vmatprep.subr.bf16.mxu0 0
      %2639 = vmatpush1.bf16.msra.mxu0 0
      %2640 = vmatprep.subr.bf16.mxu0 0
      %2641 = vmatpush1.bf16.msra.mxu0 0
      %2642 = vmatprep.subr.bf16.mxu0 0
      %2643 = vmatpush1.bf16.msra.mxu0 0
      %2644 = vmatprep.subr.bf16.mxu0 0
      %2645 = vmatpush1.bf16.msra.mxu0 0
      %2646 = vmatprep.mubr.bf16.mxu0 0
      %2647 = vmatmul.mubr.bf16.gmra.mrb[0].mxu0 %v2550
      %v2648 = vpop.f32.mrb[0].mxu0
      %v2649 = vadd.f32 0.0, %v2648
      %v2650 = vpop.f32.mrb[0].mxu0
      %v2651 = vpop.f32.mrb[0].mxu0
      %v2652 = vadd.f32 0.0, %v2651
      %v2653 = vpop.f32.mrb[0].mxu0
      %2654 = vmatprep.mubr.bf16.mxu0 0
      %2655 = vmatmul.mubr.bf16.gmra.mrb[0].mxu0 %v2551
      %v2656 = vpop.f32.mrb[0].mxu0
      %v2657 = vadd.f32 0.0, %v2656
      %v2658 = vpop.f32.mrb[0].mxu0
      %v2659 = vpop.f32.mrb[0].mxu0
      %v2660 = vadd.f32 0.0, %v2659
      %v2661 = vpop.f32.mrb[0].mxu0
      %2662 = vmatprep.mubr.bf16.mxu0 0
      %2663 = vmatmul.mubr.bf16.gmra.mrb[0].mxu0 %v2552
      %v2664 = vpop.f32.mrb[0].mxu0
      %v2665 = vadd.f32 0.0, %v2664
      %v2666 = vpop.f32.mrb[0].mxu0
      %v2667 = vpop.f32.mrb[0].mxu0
      %v2668 = vadd.f32 0.0, %v2667
      %v2669 = vpop.f32.mrb[0].mxu0
      %2670 = vmatprep.mubr.bf16.mxu0 0
      %2671 = vmatmul.mubr.bf16.gmra.mrb[0].mxu0 %v2553
      %v2672 = vpop.f32.mrb[0].mxu0
      %v2673 = vadd.f32 0.0, %v2672
      %v2674 = vpop.f32.mrb[0].mxu0
      %v2675 = vpop.f32.mrb[0].mxu0
      %v2676 = vadd.f32 0.0, %v2675
      %v2677 = vpop.f32.mrb[0].mxu0
      %2678 = vmatprep.mubr.bf16.mxu0 0
      %2679 = vmatmul.mubr.bf16.gmra.mrb[0].mxu0 %v2554
      %v2680 = vpop.f32.mrb[0].mxu0
      %v2681 = vadd.f32 0.0, %v2680
      %v2682 = vpop.f32.mrb[0].mxu0
      %v2683 = vpop.f32.mrb[0].mxu0
      %v2684 = vadd.f32 0.0, %v2683
      %v2685 = vpop.f32.mrb[0].mxu0
      %2686 = vmatprep.mubr.bf16.mxu0 0
      %2687 = vmatmul.mubr.bf16.gmra.mrb[0].mxu0 %v2555
      %v2688 = vpop.f32.mrb[0].mxu0
      %v2689 = vadd.f32 0.0, %v2688
      %v2690 = vpop.f32.mrb[0].mxu0
      %v2691 = vpop.f32.mrb[0].mxu0
      %v2692 = vadd.f32 0.0, %v2691
      %v2693 = vpop.f32.mrb[0].mxu0
      %2694 = vmatprep.mubr.bf16.mxu0 0
      %2695 = vmatmul.mubr.bf16.gmra.mrb[0].mxu0 %v2556
      %v2696 = vpop.f32.mrb[0].mxu0
      %v2697 = vadd.f32 0.0, %v2696
      %v2698 = vpop.f32.mrb[0].mxu0
      %v2699 = vpop.f32.mrb[0].mxu0
      %v2700 = vadd.f32 0.0, %v2699
      %v2701 = vpop.f32.mrb[0].mxu0
      %2702 = vmatprep.mubr.bf16.mxu0 0
      %2703 = vmatmul.mubr.bf16.gmra.mrb[0].mxu0 %v2557
      %v2704 = vpop.f32.mrb[0].mxu0
      %v2705 = vadd.f32 0.0, %v2704
      %v2706 = vpop.f32.mrb[0].mxu0
      %v2707 = vpop.f32.mrb[0].mxu0
      %v2708 = vadd.f32 0.0, %v2707
      %v2709 = vpop.f32.mrb[0].mxu0
      %2710 = vdwg.mxu0
      %v2711 = vadd.f32 %v2286, %v2649
      %v2712 = vadd.f32 %v2287, %v2652
      %v2713 = vadd.f32 %v2288, %v2657
      %v2714 = vadd.f32 %v2289, %v2660
      %v2715 = vadd.f32 %v2290, %v2665
      %v2716 = vadd.f32 %v2291, %v2668
      %v2717 = vadd.f32 %v2292, %v2673
      %v2718 = vadd.f32 %v2293, %v2676
      %v2719 = vadd.f32 %v2294, %v2681
      %v2720 = vadd.f32 %v2295, %v2684
      %v2721 = vadd.f32 %v2296, %v2689
      %v2722 = vadd.f32 %v2297, %v2692
      %v2723 = vadd.f32 %v2298, %v2697
      %v2724 = vadd.f32 %v2299, %v2700
      %v2725 = vadd.f32 %v2300, %v2705
      %v2726 = vadd.f32 %v2301, %v2708
      %v2727 = vld [vmem:[%s2060] sm:$0xe]
      %v2728 = vld [vmem:[%s2060 + $0xc] sm:$0xe]
      %v2729 = vld [vmem:[%s2060 + $0x18] sm:$0xe]
      %v2730 = vld [vmem:[%s2060 + $0x24] sm:$0xe]
      %v2731 = vld [vmem:[%s2060 + $0x30] sm:$0xe]
      %v2732 = vld [vmem:[%s2060 + $0x3c] sm:$0xe]
      %v2733 = vld [vmem:[%s2060 + $0x48] sm:$0xe]
      %v2734 = vld [vmem:[%s2060 + $0x54] sm:$0xe]
      %v2759 = vrot.slane %v2727, 5
      %v2760 = vrot.slane %v2759, 4
      %v2761 = vrot.slane %v2303, 5
      %v2762 = vsel %vm830, %v2760, %v2761
      %v2763 = vrot.slane %v2761, 4
      %v2764 = vrot.slane %v2304, 5
      %v2765 = vsel %vm830, %v2763, %v2764
      %v2766 = vrot.slane %v2728, 5
      %v2767 = vrot.slane %v2766, 4
      %v2768 = vrot.slane %v2306, 5
      %v2769 = vsel %vm830, %v2767, %v2768
      %v2770 = vrot.slane %v2768, 4
      %v2771 = vrot.slane %v2307, 5
      %v2772 = vsel %vm830, %v2770, %v2771
      %v2773 = vrot.slane %v2729, 5
      %v2774 = vrot.slane %v2773, 4
      %v2775 = vrot.slane %v2309, 5
      %v2776 = vsel %vm830, %v2774, %v2775
      %v2777 = vrot.slane %v2775, 4
      %v2778 = vrot.slane %v2310, 5
      %v2779 = vsel %vm830, %v2777, %v2778
      %v2780 = vrot.slane %v2730, 5
      %v2781 = vrot.slane %v2780, 4
      %v2782 = vrot.slane %v2312, 5
      %v2783 = vsel %vm830, %v2781, %v2782
      %v2784 = vrot.slane %v2782, 4
      %v2785 = vrot.slane %v2313, 5
      %v2786 = vsel %vm830, %v2784, %v2785
      %v2787 = vrot.slane %v2731, 5
      %v2788 = vrot.slane %v2787, 4
      %v2789 = vrot.slane %v2315, 5
      %v2790 = vsel %vm830, %v2788, %v2789
      %v2791 = vrot.slane %v2789, 4
      %v2792 = vrot.slane %v2316, 5
      %v2793 = vsel %vm830, %v2791, %v2792
      %v2794 = vrot.slane %v2732, 5
      %v2795 = vrot.slane %v2794, 4
      %v2796 = vrot.slane %v2318, 5
      %v2797 = vsel %vm830, %v2795, %v2796
      %v2798 = vrot.slane %v2796, 4
      %v2799 = vrot.slane %v2319, 5
      %v2800 = vsel %vm830, %v2798, %v2799
      %v2801 = vrot.slane %v2733, 5
      %v2802 = vrot.slane %v2801, 4
      %v2803 = vrot.slane %v2321, 5
      %v2804 = vsel %vm830, %v2802, %v2803
      %v2805 = vrot.slane %v2803, 4
      %v2806 = vrot.slane %v2322, 5
      %v2807 = vsel %vm830, %v2805, %v2806
      %v2808 = vrot.slane %v2734, 5
      %v2809 = vrot.slane %v2808, 4
      %v2810 = vrot.slane %v2324, 5
      %v2811 = vsel %vm830, %v2809, %v2810
      %v2812 = vrot.slane %v2810, 4
      %v2813 = vrot.slane %v2325, 5
      %v2814 = vsel %vm830, %v2812, %v2813
      %v2815 = vld [vmem:[%s1 + $0x200] sm:$0xf]
      %v2816 = vld [vmem:[%s1 + $0x204] sm:$0xf]
      %v2817 = vld [vmem:[%s1 + $0x208] sm:$0xf]
      %v2818 = vld [vmem:[%s1 + $0x20c] sm:$0xf]
      %v2819 = vld [vmem:[%s1 + $0x210] sm:$0xf]
      %v2820 = vld [vmem:[%s1 + $0x214] sm:$0xf]
      %v2821 = vld [vmem:[%s1 + $0x218] sm:$0xf]
      %v2822 = vld [vmem:[%s1 + $0x21c] sm:$0xf]
      %v2823 = vld [vmem:[%s1 + $0x220] sm:$0xf]
      %v2824 = vld [vmem:[%s1 + $0x224] sm:$0xf]
      %v2825 = vld [vmem:[%s1 + $0x228] sm:$0xf]
      %v2826 = vld [vmem:[%s1 + $0x22c] sm:$0xf]
      %v2827 = vld [vmem:[%s1 + $0x230] sm:$0xf]
      %v2828 = vld [vmem:[%s1 + $0x234] sm:$0xf]
      %v2829 = vld [vmem:[%s1 + $0x238] sm:$0xf]
      %v2830 = vld [vmem:[%s1 + $0x23c] sm:$0xf]
      %v2831 = vunpack.c.l.b16 %v2762
      %v2832 = vunpack.c.l.b16 %v2765
      %v2833 = vunpack.c.l.b16 %v2769
      %v2834 = vunpack.c.l.b16 %v2772
      %v2835 = vunpack.c.l.b16 %v2776
      %v2836 = vunpack.c.l.b16 %v2779
      %v2837 = vunpack.c.l.b16 %v2783
      %v2838 = vunpack.c.l.b16 %v2786
      %v2839 = vunpack.c.l.b16 %v2790
      %v2840 = vunpack.c.l.b16 %v2793
      %v2841 = vunpack.c.l.b16 %v2797
      %v2842 = vunpack.c.l.b16 %v2800
      %v2843 = vunpack.c.l.b16 %v2804
      %v2844 = vunpack.c.l.b16 %v2807
      %v2845 = vunpack.c.l.b16 %v2811
      %v2846 = vunpack.c.l.b16 %v2814
      %v2847 = vpack.c.b16 %v2832, %v2831
      %v2848 = vpack.c.b16 %v2834, %v2833
      %v2849 = vpack.c.b16 %v2836, %v2835
      %v2850 = vpack.c.b16 %v2838, %v2837
      %v2851 = vpack.c.b16 %v2840, %v2839
      %v2852 = vpack.c.b16 %v2842, %v2841
      %v2853 = vpack.c.b16 %v2844, %v2843
      %v2854 = vpack.c.b16 %v2846, %v2845
      %v2879 = vunpack.c.l.b16 %v2815
      %v2880 = vunpack.c.l.b16 %v2816
      %v2881 = vunpack.c.l.b16 %v2817
      %v2882 = vunpack.c.l.b16 %v2818
      %v2883 = vunpack.c.l.b16 %v2819
      %v2884 = vunpack.c.l.b16 %v2820
      %v2885 = vunpack.c.l.b16 %v2821
      %v2886 = vunpack.c.l.b16 %v2822
      %v2887 = vunpack.c.l.b16 %v2823
      %v2888 = vunpack.c.l.b16 %v2824
      %v2889 = vunpack.c.l.b16 %v2825
      %v2890 = vunpack.c.l.b16 %v2826
      %v2891 = vunpack.c.l.b16 %v2827
      %v2892 = vunpack.c.l.b16 %v2828
      %v2893 = vunpack.c.l.b16 %v2829
      %v2894 = vunpack.c.l.b16 %v2830
      %v2895 = vpack.c.b16 %v2880, %v2879
      %v2896 = vpack.c.b16 %v2882, %v2881
      %v2897 = vpack.c.b16 %v2884, %v2883
      %v2898 = vpack.c.b16 %v2886, %v2885
      %v2899 = vpack.c.b16 %v2888, %v2887
      %v2900 = vpack.c.b16 %v2890, %v2889
      %v2901 = vpack.c.b16 %v2892, %v2891
      %v2902 = vpack.c.b16 %v2894, %v2893
      %2911 = vmatprep.subr.bf16.mxu0 0
      %2912 = vmatpush1.bf16.msra.mxu0 %v2895
      %2913 = vmatprep.subr.bf16.mxu0 0
      %2914 = vmatpush1.bf16.msra.mxu0 %v2896
      %2915 = vmatprep.subr.bf16.mxu0 0
      %2916 = vmatpush1.bf16.msra.mxu0 %v2897
      %2917 = vmatprep.subr.bf16.mxu0 0
      %2918 = vmatpush1.bf16.msra.mxu0 %v2898
      %2919 = vmatprep.subr.bf16.mxu0 0
      %2920 = vmatpush1.bf16.msra.mxu0 %v2899
      %2921 = vmatprep.subr.bf16.mxu0 0
      %2922 = vmatpush1.bf16.msra.mxu0 %v2900
      %2923 = vmatprep.subr.bf16.mxu0 0
      %2924 = vmatpush1.bf16.msra.mxu0 %v2901
      %2925 = vmatprep.subr.bf16.mxu0 0
      %2926 = vmatpush1.bf16.msra.mxu0 %v2902
      %2927 = vmatprep.subr.bf16.mxu0 0
      %2928 = vmatpush1.bf16.msra.mxu0 0
      %2929 = vmatprep.subr.bf16.mxu0 0
      %2930 = vmatpush1.bf16.msra.mxu0 0
      %2931 = vmatprep.subr.bf16.mxu0 0
      %2932 = vmatpush1.bf16.msra.mxu0 0
      %2933 = vmatprep.subr.bf16.mxu0 0
      %2934 = vmatpush1.bf16.msra.mxu0 0
      %2935 = vmatprep.subr.bf16.mxu0 0
      %2936 = vmatpush1.bf16.msra.mxu0 0
      %2937 = vmatprep.subr.bf16.mxu0 0
      %2938 = vmatpush1.bf16.msra.mxu0 0
      %2939 = vmatprep.subr.bf16.mxu0 0
      %2940 = vmatpush1.bf16.msra.mxu0 0
      %2941 = vmatprep.subr.bf16.mxu0 0
      %2942 = vmatpush1.bf16.msra.mxu0 0
      %2943 = vmatprep.mubr.bf16.mxu0 0
      %2944 = vmatmul.mubr.bf16.gmra.mrb[0].mxu0 %v2847
      %v2945 = vpop.f32.mrb[0].mxu0
      %v2946 = vadd.f32 0.0, %v2945
      %v2947 = vpop.f32.mrb[0].mxu0
      %v2948 = vpop.f32.mrb[0].mxu0
      %v2949 = vadd.f32 0.0, %v2948
      %v2950 = vpop.f32.mrb[0].mxu0
      %2951 = vmatprep.mubr.bf16.mxu0 0
      %2952 = vmatmul.mubr.bf16.gmra.mrb[0].mxu0 %v2848
      %v2953 = vpop.f32.mrb[0].mxu0
      %v2954 = vadd.f32 0.0, %v2953
      %v2955 = vpop.f32.mrb[0].mxu0
      %v2956 = vpop.f32.mrb[0].mxu0
      %v2957 = vadd.f32 0.0, %v2956
      %v2958 = vpop.f32.mrb[0].mxu0
      %2959 = vmatprep.mubr.bf16.mxu0 0
      %2960 = vmatmul.mubr.bf16.gmra.mrb[0].mxu0 %v2849
      %v2961 = vpop.f32.mrb[0].mxu0
      %v2962 = vadd.f32 0.0, %v2961
      %v2963 = vpop.f32.mrb[0].mxu0
      %v2964 = vpop.f32.mrb[0].mxu0
      %v2965 = vadd.f32 0.0, %v2964
      %v2966 = vpop.f32.mrb[0].mxu0
      %2967 = vmatprep.mubr.bf16.mxu0 0
      %2968 = vmatmul.mubr.bf16.gmra.mrb[0].mxu0 %v2850
      %v2969 = vpop.f32.mrb[0].mxu0
      %v2970 = vadd.f32 0.0, %v2969
      %v2971 = vpop.f32.mrb[0].mxu0
      %v2972 = vpop.f32.mrb[0].mxu0
      %v2973 = vadd.f32 0.0, %v2972
      %v2974 = vpop.f32.mrb[0].mxu0
      %2975 = vmatprep.mubr.bf16.mxu0 0
      %2976 = vmatmul.mubr.bf16.gmra.mrb[0].mxu0 %v2851
      %v2977 = vpop.f32.mrb[0].mxu0
      %v2978 = vadd.f32 0.0, %v2977
      %v2979 = vpop.f32.mrb[0].mxu0
      %v2980 = vpop.f32.mrb[0].mxu0
      %v2981 = vadd.f32 0.0, %v2980
      %v2982 = vpop.f32.mrb[0].mxu0
      %2983 = vmatprep.mubr.bf16.mxu0 0
      %2984 = vmatmul.mubr.bf16.gmra.mrb[0].mxu0 %v2852
      %v2985 = vpop.f32.mrb[0].mxu0
      %v2986 = vadd.f32 0.0, %v2985
      %v2987 = vpop.f32.mrb[0].mxu0
      %v2988 = vpop.f32.mrb[0].mxu0
      %v2989 = vadd.f32 0.0, %v2988
      %v2990 = vpop.f32.mrb[0].mxu0
      %2991 = vmatprep.mubr.bf16.mxu0 0
      %2992 = vmatmul.mubr.bf16.gmra.mrb[0].mxu0 %v2853
      %v2993 = vpop.f32.mrb[0].mxu0
      %v2994 = vadd.f32 0.0, %v2993
      %v2995 = vpop.f32.mrb[0].mxu0
      %v2996 = vpop.f32.mrb[0].mxu0
      %v2997 = vadd.f32 0.0, %v2996
      %v2998 = vpop.f32.mrb[0].mxu0
      %2999 = vmatprep.mubr.bf16.mxu0 0
      %3000 = vmatmul.mubr.bf16.gmra.mrb[0].mxu0 %v2854
      %v3001 = vpop.f32.mrb[0].mxu0
      %v3002 = vadd.f32 0.0, %v3001
      %v3003 = vpop.f32.mrb[0].mxu0
      %v3004 = vpop.f32.mrb[0].mxu0
      %v3005 = vadd.f32 0.0, %v3004
      %v3006 = vpop.f32.mrb[0].mxu0
      %3007 = vdwg.mxu0
      %v3008 = vadd.f32 %v2711, %v2946
      %v3009 = vadd.f32 %v2712, %v2949
      %v3010 = vadd.f32 %v2713, %v2954
      %v3011 = vadd.f32 %v2714, %v2957
      %v3012 = vadd.f32 %v2715, %v2962
      %v3013 = vadd.f32 %v2716, %v2965
      %v3014 = vadd.f32 %v2717, %v2970
      %v3015 = vadd.f32 %v2718, %v2973
      %v3016 = vadd.f32 %v2719, %v2978
      %v3017 = vadd.f32 %v2720, %v2981
      %v3018 = vadd.f32 %v2721, %v2986
      %v3019 = vadd.f32 %v2722, %v2989
      %v3020 = vadd.f32 %v2723, %v2994
      %v3021 = vadd.f32 %v2724, %v2997
      %v3022 = vadd.f32 %v2725, %v3002
      %v3023 = vadd.f32 %v2726, %v3005
      %3024 = vst [vmem:[%s177] sm:$0xff] %v3008
      %3025 = vst [vmem:[%s177 + $0x8] sm:$0xff] %v3009
      %3026 = vst [vmem:[%s177 + $0x10] sm:$0xff] %v3010
      %3027 = vst [vmem:[%s177 + $0x18] sm:$0xff] %v3011
      %3028 = vst [vmem:[%s177 + $0x20] sm:$0xff] %v3012
      %3029 = vst [vmem:[%s177 + $0x28] sm:$0xff] %v3013
      %3030 = vst [vmem:[%s177 + $0x30] sm:$0xff] %v3014
      %3031 = vst [vmem:[%s177 + $0x38] sm:$0xff] %v3015
      %3032 = vst [vmem:[%s177 + $0x40] sm:$0xff] %v3016
      %3033 = vst [vmem:[%s177 + $0x48] sm:$0xff] %v3017
      %3034 = vst [vmem:[%s177 + $0x50] sm:$0xff] %v3018
      %3035 = vst [vmem:[%s177 + $0x58] sm:$0xff] %v3019
      %3036 = vst [vmem:[%s177 + $0x60] sm:$0xff] %v3020
      %3037 = vst [vmem:[%s177 + $0x68] sm:$0xff] %v3021
      %3038 = vst [vmem:[%s177 + $0x70] sm:$0xff] %v3022
      %3039 = vst [vmem:[%s177 + $0x78] sm:$0xff] %v3023
      %v3040 = vadd.f32 %v3008, %v3009
      %v3041 = vadd.f32 %v3040, %v3010
      %v3042 = vadd.f32 %v3041, %v3011
      %v3043 = vadd.f32 %v3042, %v3012
      %v3044 = vadd.f32 %v3043, %v3013
      %v3045 = vadd.f32 %v3044, %v3014
      %v3046 = vadd.f32 %v3045, %v3015
      %v3047 = vadd.f32 %v3046, %v3016
      %v3048 = vadd.f32 %v3047, %v3017
      %v3049 = vadd.f32 %v3048, %v3018
      %v3050 = vadd.f32 %v3049, %v3019
      %v3051 = vadd.f32 %v3050, %v3020
      %v3052 = vadd.f32 %v3051, %v3021
      %v3053 = vadd.f32 %v3052, %v3022
      %v3054 = vadd.f32 %v3053, %v3023
      %v3055 = vrot.slane %v3054, 4
      %v3056 = vadd.f32 %v3054, %v3055
      %v3057 = vrot.slane %v3056, 2
      %v3058 = vadd.f32 %v3056, %v3057
      %v3059 = vrot.slane %v3058, 1
      %v3060 = vadd.f32 %v3058, %v3059
      %3061 = vst [vmem:[%s181] sm:$0x1] %v3060
      %v3062 = vmul.f32 %v3008, %v3008
      %v3063 = vmul.f32 %v3009, %v3009
      %v3064 = vmul.f32 %v3010, %v3010
      %v3065 = vmul.f32 %v3011, %v3011
      %v3066 = vmul.f32 %v3012, %v3012
      %v3067 = vmul.f32 %v3013, %v3013
      %v3068 = vmul.f32 %v3014, %v3014
      %v3069 = vmul.f32 %v3015, %v3015
      %v3070 = vmul.f32 %v3016, %v3016
      %v3071 = vmul.f32 %v3017, %v3017
      %v3072 = vmul.f32 %v3018, %v3018
      %v3073 = vmul.f32 %v3019, %v3019
      %v3074 = vmul.f32 %v3020, %v3020
      %v3075 = vmul.f32 %v3021, %v3021
      %v3076 = vmul.f32 %v3022, %v3022
      %v3077 = vmul.f32 %v3023, %v3023
      %v3078 = vadd.f32 %v3062, %v3063
      %v3079 = vadd.f32 %v3078, %v3064
      %v3080 = vadd.f32 %v3079, %v3065
      %v3081 = vadd.f32 %v3080, %v3066
      %v3082 = vadd.f32 %v3081, %v3067
      %v3083 = vadd.f32 %v3082, %v3068
      %v3084 = vadd.f32 %v3083, %v3069
      %v3085 = vadd.f32 %v3084, %v3070
      %v3086 = vadd.f32 %v3085, %v3071
      %v3087 = vadd.f32 %v3086, %v3072
      %v3088 = vadd.f32 %v3087, %v3073
      %v3089 = vadd.f32 %v3088, %v3074
      %v3090 = vadd.f32 %v3089, %v3075
      %v3091 = vadd.f32 %v3090, %v3076
      %v3092 = vadd.f32 %v3091, %v3077
      %v3093 = vrot.slane %v3092, 4
      %v3094 = vadd.f32 %v3092, %v3093
      %v3095 = vrot.slane %v3094, 2
      %v3096 = vadd.f32 %v3094, %v3095
      %v3097 = vrot.slane %v3096, 1
      %v3098 = vadd.f32 %v3096, %v3097
      %3099 = vst [vmem:[%s181 + $0x1] sm:$0x1] %v3098
      %p3100 = scmp.lt.s32.totalorder %s15, 3
      %s3101 = scalar_select %p3100, %s15, 3
      %s3102 = smul.addr %s3101, 16
      %s3103 = smul.addr %s3102, 8
      %s3104 = scalar_lea.vmem %s2, %s3103
      %p3105 = scmp.lt.s32.totalorder %s15, 3
      %s3106 = scalar_select %p3105, %s15, 3
      %s3107 = smul.addr %s3106, 2
      %s3108 = scalar_lea.vmem %s3, %s3107
      // Predicated region
      $region29: #{basic_block_forward.4} parent=27 // pred_check
        %p3109 = pneg %p80
      $region30: #{basic_block_forward.4} parent=27 // pred_check_branch
        %3111 = sbr.rel (%p3109) target = $region32
      $region31: #{basic_block_forward.4} parent=27 // pred_region
        _
      $region32: #{basic_block_forward.4} parent=27 // pred_fallthru
        _
      // Predicated region
      $region33: #{basic_block_forward.4} parent=27 // pred_check
        %p3112 = pneg %p106
      $region34: #{basic_block_forward.4} parent=27 // pred_check_branch
        %3114 = sbr.rel (%p3112) target = $region36
      $region35: #{basic_block_forward.4} parent=27 // pred_region
        _
      $region36: #{basic_block_forward.4} parent=27 // pred_fallthru
        _
    $region28: #{basic_block_forward.4} parent=5 // pred_fallthru
      _
    %p3115 = scmp.le.s32.totalorder 2, %s10
    // Predicated region
    $region37: #{basic_block_forward.4} parent=5 // pred_check
      %p3116 = pneg %p3115
    $region38: #{basic_block_forward.4} parent=5 // pred_check_branch
      %3118 = sbr.rel (%p3116) target = $region40
    $region39: #{basic_block_forward.4} parent=5 // pred_region
      %s3119 = ssub.s32 %s10, 2
      // Predicated region
      $region41: #{basic_block_forward.4} parent=39 // pred_check
        %p3120 = pneg %p86
      $region42: #{basic_block_forward.4} parent=39 // pred_check_branch
        %3122 = sbr.rel (%p3120) target = $region44
      $region43: #{basic_block_forward.4} parent=39 // pred_region
        %p3123 = scmp.lt.s32.totalorder %s16, 3
        %s3124 = scalar_select %p3123, %s16, 3
        %s3125 = smul.addr %s3124, 16
        %s3126 = smul.addr %s3125, 8
        %s3127 = scalar_lea.vmem %s2, %s3126
      $region44: #{basic_block_forward.4} parent=39 // pred_fallthru
        _
      // Predicated region
      $region45: #{basic_block_forward.4} parent=39 // pred_check
        %p3128 = pneg %p112
      $region46: #{basic_block_forward.4} parent=39 // pred_check_branch
        %3130 = sbr.rel (%p3128) target = $region48
      $region47: #{basic_block_forward.4} parent=39 // pred_region
        %p3131 = scmp.lt.s32.totalorder %s16, 3
        %s3132 = scalar_select %p3131, %s16, 3
        %s3133 = smul.addr %s3132, 2
        %s3134 = scalar_lea.vmem %s3, %s3133
      $region48: #{basic_block_forward.4} parent=39 // pred_fallthru
        _
    $region40: #{basic_block_forward.4} parent=5 // pred_fallthru
      _
  $region6: #{basic_block_forward.4} parent=0 // loop_footer
    %s14 = sadd.s32 1, %s10
  $region7: #{basic_block_forward.4} parent=0 // loop_footer_branch
    %9 = sbr.rel target = $region3
  $region8: #{basic_block_forward.4} parent=0 // loop_exit
    _

// kernel: basic_block_forward.7
$region0: #{basic_block_forward.7}
  #allocation0 [shape = 'u32[]', space=smem, size = 0x4, offset = 0x4, fixed_abs, tag = 'smem constant byte address 0x4 - core index']
  #allocation1 [shape = 'u32[144,128]{1,0:T(1,128)}', space=vmem, size = 0x12000, scoped, tag = 'internal scratch']
  %s0 = inlined_call_operand.vmem [shape: f32[512,128], index: 0, kind: input, shape index: {}]
  %s1 = inlined_call_operand.vmem [shape: f32[1,128], index: 1, kind: input, shape index: {}]
  %s2 = inlined_call_operand.vmem [shape: f32[1,128], index: 2, kind: input, shape index: {}]
  %s3 = inlined_call_operand.vmem [shape: f32[512,128], index: 3, kind: input, shape index: {}]
  %s4 = inlined_call_operand.vmem [shape: f32[512,128], index: 4, kind: output, shape index: {}]
  %s5 = sld [smem:[#allocation0]]
  $region26: #{basic_block_forward.7} parent=0
    _
  %s7 = ssub.s32 1, %s5
  %s8 = scalar_select 0, %s7, %s5
  // Predicated region
  $region2: #{basic_block_forward.7} parent=0 // pred_check
    _
  $region3: #{basic_block_forward.7} parent=0 // pred_check_branch
    %10 = sbr.rel (0) target = $region5
  $region4: #{basic_block_forward.7} parent=0 // pred_region
    _
  $region5: #{basic_block_forward.7} parent=0 // pred_fallthru
    _
  // Predicated region
  $region6: #{basic_block_forward.7} parent=0 // pred_check
    _
  $region7: #{basic_block_forward.7} parent=0 // pred_check_branch
    %12 = sbr.rel (0) target = $region9
  $region8: #{basic_block_forward.7} parent=0 // pred_region
    _
  $region9: #{basic_block_forward.7} parent=0 // pred_fallthru
    _
  // Predicated region
  $region10: #{basic_block_forward.7} parent=0 // pred_check
    _
  $region11: #{basic_block_forward.7} parent=0 // pred_check_branch
    %14 = sbr.rel (0) target = $region13
  $region12: #{basic_block_forward.7} parent=0 // pred_region
    _
  $region13: #{basic_block_forward.7} parent=0 // pred_fallthru
    _
  // Predicated region
  $region14: #{basic_block_forward.7} parent=0 // pred_check
    _
  $region15: #{basic_block_forward.7} parent=0 // pred_check_branch
    %16 = sbr.rel (0) target = $region17
  $region16: #{basic_block_forward.7} parent=0 // pred_region
    _
  $region17: #{basic_block_forward.7} parent=0 // pred_fallthru
    _
  %v17 = vld [vmem:[%s0] sm:$0xff]
  %v18 = vld [vmem:[%s0 + $0x8] sm:$0xff]
  %v19 = vld [vmem:[%s0 + $0x10] sm:$0xff]
  %v20 = vld [vmem:[%s0 + $0x18] sm:$0xff]
  %v21 = vld [vmem:[%s0 + $0x20] sm:$0xff]
  %v22 = vld [vmem:[%s0 + $0x28] sm:$0xff]
  %v23 = vld [vmem:[%s0 + $0x30] sm:$0xff]
  %v24 = vld [vmem:[%s0 + $0x38] sm:$0xff]
  %v25 = vld [vmem:[%s0 + $0x40] sm:$0xff]
  %v26 = vld [vmem:[%s0 + $0x48] sm:$0xff]
  %v27 = vld [vmem:[%s0 + $0x50] sm:$0xff]
  %v28 = vld [vmem:[%s0 + $0x58] sm:$0xff]
  %v29 = vld [vmem:[%s0 + $0x60] sm:$0xff]
  %v30 = vld [vmem:[%s0 + $0x68] sm:$0xff]
  %v31 = vld [vmem:[%s0 + $0x70] sm:$0xff]
  %v32 = vld [vmem:[%s0 + $0x78] sm:$0xff]
  %v33 = vld [vmem:[%s0 + $0x80] sm:$0xff]
  %v34 = vld [vmem:[%s0 + $0x88] sm:$0xff]
  %v35 = vld [vmem:[%s0 + $0x90] sm:$0xff]
  %v36 = vld [vmem:[%s0 + $0x98] sm:$0xff]
  %v37 = vld [vmem:[%s0 + $0xa0] sm:$0xff]
  %v38 = vld [vmem:[%s0 + $0xa8] sm:$0xff]
  %v39 = vld [vmem:[%s0 + $0xb0] sm:$0xff]
  %v40 = vld [vmem:[%s0 + $0xb8] sm:$0xff]
  %v41 = vld [vmem:[%s0 + $0xc0] sm:$0xff]
  %v42 = vld [vmem:[%s0 + $0xc8] sm:$0xff]
  %v43 = vld [vmem:[%s0 + $0xd0] sm:$0xff]
  %v44 = vld [vmem:[%s0 + $0xd8] sm:$0xff]
  %v45 = vld [vmem:[%s0 + $0xe0] sm:$0xff]
  %v46 = vld [vmem:[%s0 + $0xe8] sm:$0xff]
  %v47 = vld [vmem:[%s0 + $0xf0] sm:$0xff]
  %v48 = vld [vmem:[%s0 + $0xf8] sm:$0xff]
  %v49 = vld [vmem:[%s0 + $0x100] sm:$0xff]
  %v50 = vld [vmem:[%s0 + $0x108] sm:$0xff]
  %v51 = vld [vmem:[%s0 + $0x110] sm:$0xff]
  %v52 = vld [vmem:[%s0 + $0x118] sm:$0xff]
  %v53 = vld [vmem:[%s0 + $0x120] sm:$0xff]
  %v54 = vld [vmem:[%s0 + $0x128] sm:$0xff]
  %v55 = vld [vmem:[%s0 + $0x130] sm:$0xff]
  %v56 = vld [vmem:[%s0 + $0x138] sm:$0xff]
  %v57 = vld [vmem:[%s0 + $0x140] sm:$0xff]
  %v58 = vld [vmem:[%s0 + $0x148] sm:$0xff]
  %v59 = vld [vmem:[%s0 + $0x150] sm:$0xff]
  %v60 = vld [vmem:[%s0 + $0x158] sm:$0xff]
  %v61 = vld [vmem:[%s0 + $0x160] sm:$0xff]
  %v62 = vld [vmem:[%s0 + $0x168] sm:$0xff]
  %v63 = vld [vmem:[%s0 + $0x170] sm:$0xff]
  %v64 = vld [vmem:[%s0 + $0x178] sm:$0xff]
  %v65 = vld [vmem:[%s0 + $0x180] sm:$0xff]
  %v66 = vld [vmem:[%s0 + $0x188] sm:$0xff]
  %v67 = vld [vmem:[%s0 + $0x190] sm:$0xff]
  %v68 = vld [vmem:[%s0 + $0x198] sm:$0xff]
  %v69 = vld [vmem:[%s0 + $0x1a0] sm:$0xff]
  %v70 = vld [vmem:[%s0 + $0x1a8] sm:$0xff]
  %v71 = vld [vmem:[%s0 + $0x1b0] sm:$0xff]
  %v72 = vld [vmem:[%s0 + $0x1b8] sm:$0xff]
  %v73 = vld [vmem:[%s0 + $0x1c0] sm:$0xff]
  %v74 = vld [vmem:[%s0 + $0x1c8] sm:$0xff]
  %v75 = vld [vmem:[%s0 + $0x1d0] sm:$0xff]
  %v76 = vld [vmem:[%s0 + $0x1d8] sm:$0xff]
  %v77 = vld [vmem:[%s0 + $0x1e0] sm:$0xff]
  %v78 = vld [vmem:[%s0 + $0x1e8] sm:$0xff]
  %v79 = vld [vmem:[%s0 + $0x1f0] sm:$0xff]
  %v80 = vld [vmem:[%s0 + $0x1f8] sm:$0xff]
  %v81 = vld [vmem:[%s1] sm:$0x1]
  %v83 = vlaneseq
  %v84 = vshrl.u32 %v83, 7
  %v85 = vsub.s32 0, %v84
  %v86 = vrot.slane %v81, %v85
  %v88 = vmul.f32 %v17, %v86
  %v89 = vmul.f32 %v18, %v86
  %v90 = vmul.f32 %v19, %v86
  %v91 = vmul.f32 %v20, %v86
  %v92 = vmul.f32 %v21, %v86
  %v93 = vmul.f32 %v22, %v86
  %v94 = vmul.f32 %v23, %v86
  %v95 = vmul.f32 %v24, %v86
  %v96 = vmul.f32 %v25, %v86
  %v97 = vmul.f32 %v26, %v86
  %v98 = vmul.f32 %v27, %v86
  %v99 = vmul.f32 %v28, %v86
  %v100 = vmul.f32 %v29, %v86
  %v101 = vmul.f32 %v30, %v86
  %v102 = vmul.f32 %v31, %v86
  %v103 = vmul.f32 %v32, %v86
  %v104 = vmul.f32 %v33, %v86
  %v105 = vmul.f32 %v34, %v86
  %v106 = vmul.f32 %v35, %v86
  %v107 = vmul.f32 %v36, %v86
  %v108 = vmul.f32 %v37, %v86
  %v109 = vmul.f32 %v38, %v86
  %v110 = vmul.f32 %v39, %v86
  %v111 = vmul.f32 %v40, %v86
  %v112 = vmul.f32 %v41, %v86
  %v113 = vmul.f32 %v42, %v86
  %v114 = vmul.f32 %v43, %v86
  %v115 = vmul.f32 %v44, %v86
  %v116 = vmul.f32 %v45, %v86
  %v117 = vmul.f32 %v46, %v86
  %v118 = vmul.f32 %v47, %v86
  %v119 = vmul.f32 %v48, %v86
  %v120 = vmul.f32 %v49, %v86
  %v121 = vmul.f32 %v50, %v86
  %v122 = vmul.f32 %v51, %v86
  %v123 = vmul.f32 %v52, %v86
  %v124 = vmul.f32 %v53, %v86
  %v125 = vmul.f32 %v54, %v86
  %v126 = vmul.f32 %v55, %v86
  %v127 = vmul.f32 %v56, %v86
  %v128 = vmul.f32 %v57, %v86
  %v129 = vmul.f32 %v58, %v86
  %v130 = vmul.f32 %v59, %v86
  %v131 = vmul.f32 %v60, %v86
  %v132 = vmul.f32 %v61, %v86
  %v133 = vmul.f32 %v62, %v86
  %v134 = vmul.f32 %v63, %v86
  %v135 = vmul.f32 %v64, %v86
  %v136 = vmul.f32 %v65, %v86
  %v137 = vmul.f32 %v66, %v86
  %v138 = vmul.f32 %v67, %v86
  %v139 = vmul.f32 %v68, %v86
  %v140 = vmul.f32 %v69, %v86
  %v141 = vmul.f32 %v70, %v86
  %v142 = vmul.f32 %v71, %v86
  %v143 = vmul.f32 %v72, %v86
  %v144 = vmul.f32 %v73, %v86
  %v145 = vmul.f32 %v74, %v86
  %v146 = vmul.f32 %v75, %v86
  %v147 = vmul.f32 %v76, %v86
  %v148 = vmul.f32 %v77, %v86
  %v149 = vmul.f32 %v78, %v86
  %v150 = vmul.f32 %v79, %v86
  %v151 = vmul.f32 %v80, %v86
  %v152 = vld [vmem:[%s2] sm:$0x1]
  %v154 = vlaneseq
  %v155 = vshrl.u32 %v154, 7
  %v156 = vsub.s32 0, %v155
  %v157 = vrot.slane %v152, %v156
  %v159 = vadd.f32 %v88, %v157
  %v160 = vadd.f32 %v89, %v157
  %v161 = vadd.f32 %v90, %v157
  %v162 = vadd.f32 %v91, %v157
  %v163 = vadd.f32 %v92, %v157
  %v164 = vadd.f32 %v93, %v157
  %v165 = vadd.f32 %v94, %v157
  %v166 = vadd.f32 %v95, %v157
  %v167 = vadd.f32 %v96, %v157
  %v168 = vadd.f32 %v97, %v157
  %v169 = vadd.f32 %v98, %v157
  %v170 = vadd.f32 %v99, %v157
  %v171 = vadd.f32 %v100, %v157
  %v172 = vadd.f32 %v101, %v157
  %v173 = vadd.f32 %v102, %v157
  %v174 = vadd.f32 %v103, %v157
  %v175 = vadd.f32 %v104, %v157
  %v176 = vadd.f32 %v105, %v157
  %v177 = vadd.f32 %v106, %v157
  %v178 = vadd.f32 %v107, %v157
  %v179 = vadd.f32 %v108, %v157
  %v180 = vadd.f32 %v109, %v157
  %v181 = vadd.f32 %v110, %v157
  %v182 = vadd.f32 %v111, %v157
  %v183 = vadd.f32 %v112, %v157
  %v184 = vadd.f32 %v113, %v157
  %v185 = vadd.f32 %v114, %v157
  %v186 = vadd.f32 %v115, %v157
  %v187 = vadd.f32 %v116, %v157
  %v188 = vadd.f32 %v117, %v157
  %v189 = vadd.f32 %v118, %v157
  %v190 = vadd.f32 %v119, %v157
  %v191 = vadd.f32 %v120, %v157
  %v192 = vadd.f32 %v121, %v157
  %v193 = vadd.f32 %v122, %v157
  %v194 = vadd.f32 %v123, %v157
  %v195 = vadd.f32 %v124, %v157
  %v196 = vadd.f32 %v125, %v157
  %v197 = vadd.f32 %v126, %v157
  %v198 = vadd.f32 %v127, %v157
  %v199 = vadd.f32 %v128, %v157
  %v200 = vadd.f32 %v129, %v157
  %v201 = vadd.f32 %v130, %v157
  %v202 = vadd.f32 %v131, %v157
  %v203 = vadd.f32 %v132, %v157
  %v204 = vadd.f32 %v133, %v157
  %v205 = vadd.f32 %v134, %v157
  %v206 = vadd.f32 %v135, %v157
  %v207 = vadd.f32 %v136, %v157
  %v208 = vadd.f32 %v137, %v157
  %v209 = vadd.f32 %v138, %v157
  %v210 = vadd.f32 %v139, %v157
  %v211 = vadd.f32 %v140, %v157
  %v212 = vadd.f32 %v141, %v157
  %v213 = vadd.f32 %v142, %v157
  %v214 = vadd.f32 %v143, %v157
  %v215 = vadd.f32 %v144, %v157
  %v216 = vadd.f32 %v145, %v157
  %v217 = vadd.f32 %v146, %v157
  %v218 = vadd.f32 %v147, %v157
  %v219 = vadd.f32 %v148, %v157
  %v220 = vadd.f32 %v149, %v157
  %v221 = vadd.f32 %v150, %v157
  %v222 = vadd.f32 %v151, %v157
  %v223 = vld [vmem:[%s3] sm:$0xff]
  %v224 = vld [vmem:[%s3 + $0x8] sm:$0xff]
  %v225 = vld [vmem:[%s3 + $0x10] sm:$0xff]
  %v226 = vld [vmem:[%s3 + $0x18] sm:$0xff]
  %v227 = vld [vmem:[%s3 + $0x20] sm:$0xff]
  %v228 = vld [vmem:[%s3 + $0x28] sm:$0xff]
  %v229 = vld [vmem:[%s3 + $0x30] sm:$0xff]
  %v230 = vld [vmem:[%s3 + $0x38] sm:$0xff]
  %v231 = vld [vmem:[%s3 + $0x40] sm:$0xff]
  %v232 = vld [vmem:[%s3 + $0x48] sm:$0xff]
  %v233 = vld [vmem:[%s3 + $0x50] sm:$0xff]
  %v234 = vld [vmem:[%s3 + $0x58] sm:$0xff]
  %v235 = vld [vmem:[%s3 + $0x60] sm:$0xff]
  %v236 = vld [vmem:[%s3 + $0x68] sm:$0xff]
  %v237 = vld [vmem:[%s3 + $0x70] sm:$0xff]
  %v238 = vld [vmem:[%s3 + $0x78] sm:$0xff]
  %v239 = vld [vmem:[%s3 + $0x80] sm:$0xff]
  %v240 = vld [vmem:[%s3 + $0x88] sm:$0xff]
  %v241 = vld [vmem:[%s3 + $0x90] sm:$0xff]
  %v242 = vld [vmem:[%s3 + $0x98] sm:$0xff]
  %v243 = vld [vmem:[%s3 + $0xa0] sm:$0xff]
  %v244 = vld [vmem:[%s3 + $0xa8] sm:$0xff]
  %v245 = vld [vmem:[%s3 + $0xb0] sm:$0xff]
  %v246 = vld [vmem:[%s3 + $0xb8] sm:$0xff]
  %v247 = vld [vmem:[%s3 + $0xc0] sm:$0xff]
  %v248 = vld [vmem:[%s3 + $0xc8] sm:$0xff]
  %v249 = vld [vmem:[%s3 + $0xd0] sm:$0xff]
  %v250 = vld [vmem:[%s3 + $0xd8] sm:$0xff]
  %v251 = vld [vmem:[%s3 + $0xe0] sm:$0xff]
  %v252 = vld [vmem:[%s3 + $0xe8] sm:$0xff]
  %v253 = vld [vmem:[%s3 + $0xf0] sm:$0xff]
  %v254 = vld [vmem:[%s3 + $0xf8] sm:$0xff]
  %v255 = vld [vmem:[%s3 + $0x100] sm:$0xff]
  %v256 = vld [vmem:[%s3 + $0x108] sm:$0xff]
  %v257 = vld [vmem:[%s3 + $0x110] sm:$0xff]
  %v258 = vld [vmem:[%s3 + $0x118] sm:$0xff]
  %v259 = vld [vmem:[%s3 + $0x120] sm:$0xff]
  %v260 = vld [vmem:[%s3 + $0x128] sm:$0xff]
  %v261 = vld [vmem:[%s3 + $0x130] sm:$0xff]
  %v262 = vld [vmem:[%s3 + $0x138] sm:$0xff]
  %v263 = vld [vmem:[%s3 + $0x140] sm:$0xff]
  %v264 = vld [vmem:[%s3 + $0x148] sm:$0xff]
  %v265 = vld [vmem:[%s3 + $0x150] sm:$0xff]
  %v266 = vld [vmem:[%s3 + $0x158] sm:$0xff]
  %v267 = vld [vmem:[%s3 + $0x160] sm:$0xff]
  %v268 = vld [vmem:[%s3 + $0x168] sm:$0xff]
  %v269 = vld [vmem:[%s3 + $0x170] sm:$0xff]
  %v270 = vld [vmem:[%s3 + $0x178] sm:$0xff]
  %v271 = vld [vmem:[%s3 + $0x180] sm:$0xff]
  %v272 = vld [vmem:[%s3 + $0x188] sm:$0xff]
  %v273 = vld [vmem:[%s3 + $0x190] sm:$0xff]
  %v274 = vld [vmem:[%s3 + $0x198] sm:$0xff]
  %v275 = vld [vmem:[%s3 + $0x1a0] sm:$0xff]
  %v276 = vld [vmem:[%s3 + $0x1a8] sm:$0xff]
  %v277 = vld [vmem:[%s3 + $0x1b0] sm:$0xff]
  %v278 = vld [vmem:[%s3 + $0x1b8] sm:$0xff]
  %v279 = vld [vmem:[%s3 + $0x1c0] sm:$0xff]
  %v280 = vld [vmem:[%s3 + $0x1c8] sm:$0xff]
  %v281 = vld [vmem:[%s3 + $0x1d0] sm:$0xff]
  %v282 = vld [vmem:[%s3 + $0x1d8] sm:$0xff]
  %v283 = vld [vmem:[%s3 + $0x1e0] sm:$0xff]
  %v284 = vld [vmem:[%s3 + $0x1e8] sm:$0xff]
  %v285 = vld [vmem:[%s3 + $0x1f0] sm:$0xff]
  %v286 = vld [vmem:[%s3 + $0x1f8] sm:$0xff]
  %v287 = vadd.f32 %v159, %v223
  %v288 = vadd.f32 %v160, %v224
  %v289 = vadd.f32 %v161, %v225
  %v290 = vadd.f32 %v162, %v226
  %v291 = vadd.f32 %v163, %v227
  %v292 = vadd.f32 %v164, %v228
  %v293 = vadd.f32 %v165, %v229
  %v294 = vadd.f32 %v166, %v230
  %v295 = vadd.f32 %v167, %v231
  %v296 = vadd.f32 %v168, %v232
  %v297 = vadd.f32 %v169, %v233
  %v298 = vadd.f32 %v170, %v234
  %v299 = vadd.f32 %v171, %v235
  %v300 = vadd.f32 %v172, %v236
  %v301 = vadd.f32 %v173, %v237
  %v302 = vadd.f32 %v174, %v238
  %v303 = vadd.f32 %v175, %v239
  %v304 = vadd.f32 %v176, %v240
  %v305 = vadd.f32 %v177, %v241
  %v306 = vadd.f32 %v178, %v242
  %v307 = vadd.f32 %v179, %v243
  %v308 = vadd.f32 %v180, %v244
  %v309 = vadd.f32 %v181, %v245
  %v310 = vadd.f32 %v182, %v246
  %v311 = vadd.f32 %v183, %v247
  %v312 = vadd.f32 %v184, %v248
  %v313 = vadd.f32 %v185, %v249
  %v314 = vadd.f32 %v186, %v250
  %v315 = vadd.f32 %v187, %v251
  %v316 = vadd.f32 %v188, %v252
  %v317 = vadd.f32 %v189, %v253
  %v318 = vadd.f32 %v190, %v254
  %v319 = vadd.f32 %v191, %v255
  %v320 = vadd.f32 %v192, %v256
  %v321 = vadd.f32 %v193, %v257
  %v322 = vadd.f32 %v194, %v258
  %v323 = vadd.f32 %v195, %v259
  %v324 = vadd.f32 %v196, %v260
  %v325 = vadd.f32 %v197, %v261
  %v326 = vadd.f32 %v198, %v262
  %v327 = vadd.f32 %v199, %v263
  %v328 = vadd.f32 %v200, %v264
  %v329 = vadd.f32 %v201, %v265
  %v330 = vadd.f32 %v202, %v266
  %v331 = vadd.f32 %v203, %v267
  %v332 = vadd.f32 %v204, %v268
  %v333 = vadd.f32 %v205, %v269
  %v334 = vadd.f32 %v206, %v270
  %v335 = vadd.f32 %v207, %v271
  %v336 = vadd.f32 %v208, %v272
  %v337 = vadd.f32 %v209, %v273
  %v338 = vadd.f32 %v210, %v274
  %v339 = vadd.f32 %v211, %v275
  %v340 = vadd.f32 %v212, %v276
  %v341 = vadd.f32 %v213, %v277
  %v342 = vadd.f32 %v214, %v278
  %v343 = vadd.f32 %v215, %v279
  %v344 = vadd.f32 %v216, %v280
  %v345 = vadd.f32 %v217, %v281
  %v346 = vadd.f32 %v218, %v282
  %v347 = vadd.f32 %v219, %v283
  %v348 = vadd.f32 %v220, %v284
  %v349 = vadd.f32 %v221, %v285
  %v350 = vadd.f32 %v222, %v286
  %v351 = vmax.f32 %v287, 0.0
  %v352 = vmax.f32 %v288, 0.0
  %v353 = vmax.f32 %v289, 0.0
  %v354 = vmax.f32 %v290, 0.0
  %v355 = vmax.f32 %v291, 0.0
  %v356 = vmax.f32 %v292, 0.0
  %v357 = vmax.f32 %v293, 0.0
  %v358 = vmax.f32 %v294, 0.0
  %v359 = vmax.f32 %v295, 0.0
  %v360 = vmax.f32 %v296, 0.0
  %v361 = vmax.f32 %v297, 0.0
  %v362 = vmax.f32 %v298, 0.0
  %v363 = vmax.f32 %v299, 0.0
  %v364 = vmax.f32 %v300, 0.0
  %v365 = vmax.f32 %v301, 0.0
  %v366 = vmax.f32 %v302, 0.0
  %v367 = vmax.f32 %v303, 0.0
  %v368 = vmax.f32 %v304, 0.0
  %v369 = vmax.f32 %v305, 0.0
  %v370 = vmax.f32 %v306, 0.0
  %v371 = vmax.f32 %v307, 0.0
  %v372 = vmax.f32 %v308, 0.0
  %v373 = vmax.f32 %v309, 0.0
  %v374 = vmax.f32 %v310, 0.0
  %v375 = vmax.f32 %v311, 0.0
  %v376 = vmax.f32 %v312, 0.0
  %v377 = vmax.f32 %v313, 0.0
  %v378 = vmax.f32 %v314, 0.0
  %v379 = vmax.f32 %v315, 0.0
  %v380 = vmax.f32 %v316, 0.0
  %v381 = vmax.f32 %v317, 0.0
  %v382 = vmax.f32 %v318, 0.0
  %v383 = vmax.f32 %v319, 0.0
  %v384 = vmax.f32 %v320, 0.0
  %v385 = vmax.f32 %v321, 0.0
  %v386 = vmax.f32 %v322, 0.0
  %v387 = vmax.f32 %v323, 0.0
  %v388 = vmax.f32 %v324, 0.0
  %v389 = vmax.f32 %v325, 0.0
  %v390 = vmax.f32 %v326, 0.0
  %v391 = vmax.f32 %v327, 0.0
  %v392 = vmax.f32 %v328, 0.0
  %v393 = vmax.f32 %v329, 0.0
  %v394 = vmax.f32 %v330, 0.0
  %v395 = vmax.f32 %v331, 0.0
  %v396 = vmax.f32 %v332, 0.0
  %v397 = vmax.f32 %v333, 0.0
  %v398 = vmax.f32 %v334, 0.0
  %v399 = vmax.f32 %v335, 0.0
  %v400 = vmax.f32 %v336, 0.0
  %v401 = vmax.f32 %v337, 0.0
  %v402 = vmax.f32 %v338, 0.0
  %v403 = vmax.f32 %v339, 0.0
  %v404 = vmax.f32 %v340, 0.0
  %v405 = vmax.f32 %v341, 0.0
  %v406 = vmax.f32 %v342, 0.0
  %v407 = vmax.f32 %v343, 0.0
  %v408 = vmax.f32 %v344, 0.0
  %v409 = vmax.f32 %v345, 0.0
  %v410 = vmax.f32 %v346, 0.0
  %v411 = vmax.f32 %v347, 0.0
  %v412 = vmax.f32 %v348, 0.0
  %v413 = vmax.f32 %v349, 0.0
  %v414 = vmax.f32 %v350, 0.0
  %415 = vst [vmem:[%s4] sm:$0xff] %v351
  %416 = vst [vmem:[%s4 + $0x8] sm:$0xff] %v352
  %417 = vst [vmem:[%s4 + $0x10] sm:$0xff] %v353
  %418 = vst [vmem:[%s4 + $0x18] sm:$0xff] %v354
  %419 = vst [vmem:[%s4 + $0x20] sm:$0xff] %v355
  %420 = vst [vmem:[%s4 + $0x28] sm:$0xff] %v356
  %421 = vst [vmem:[%s4 + $0x30] sm:$0xff] %v357
  %422 = vst [vmem:[%s4 + $0x38] sm:$0xff] %v358
  %423 = vst [vmem:[%s4 + $0x40] sm:$0xff] %v359
  %424 = vst [vmem:[%s4 + $0x48] sm:$0xff] %v360
  %425 = vst [vmem:[%s4 + $0x50] sm:$0xff] %v361
  %426 = vst [vmem:[%s4 + $0x58] sm:$0xff] %v362
  %427 = vst [vmem:[%s4 + $0x60] sm:$0xff] %v363
  %428 = vst [vmem:[%s4 + $0x68] sm:$0xff] %v364
  %429 = vst [vmem:[%s4 + $0x70] sm:$0xff] %v365
  %430 = vst [vmem:[%s4 + $0x78] sm:$0xff] %v366
  %431 = vst [vmem:[%s4 + $0x80] sm:$0xff] %v367
  %432 = vst [vmem:[%s4 + $0x88] sm:$0xff] %v368
  %433 = vst [vmem:[%s4 + $0x90] sm:$0xff] %v369
  %434 = vst [vmem:[%s4 + $0x98] sm:$0xff] %v370
  %435 = vst [vmem:[%s4 + $0xa0] sm:$0xff] %v371
  %436 = vst [vmem:[%s4 + $0xa8] sm:$0xff] %v372
  %437 = vst [vmem:[%s4 + $0xb0] sm:$0xff] %v373
  %438 = vst [vmem:[%s4 + $0xb8] sm:$0xff] %v374
  %439 = vst [vmem:[%s4 + $0xc0] sm:$0xff] %v375
  %440 = vst [vmem:[%s4 + $0xc8] sm:$0xff] %v376
  %441 = vst [vmem:[%s4 + $0xd0] sm:$0xff] %v377
  %442 = vst [vmem:[%s4 + $0xd8] sm:$0xff] %v378
  %443 = vst [vmem:[%s4 + $0xe0] sm:$0xff] %v379
  %444 = vst [vmem:[%s4 + $0xe8] sm:$0xff] %v380
  %445 = vst [vmem:[%s4 + $0xf0] sm:$0xff] %v381
  %446 = vst [vmem:[%s4 + $0xf8] sm:$0xff] %v382
  %447 = vst [vmem:[%s4 + $0x100] sm:$0xff] %v383
  %448 = vst [vmem:[%s4 + $0x108] sm:$0xff] %v384
  %449 = vst [vmem:[%s4 + $0x110] sm:$0xff] %v385
  %450 = vst [vmem:[%s4 + $0x118] sm:$0xff] %v386
  %451 = vst [vmem:[%s4 + $0x120] sm:$0xff] %v387
  %452 = vst [vmem:[%s4 + $0x128] sm:$0xff] %v388
  %453 = vst [vmem:[%s4 + $0x130] sm:$0xff] %v389
  %454 = vst [vmem:[%s4 + $0x138] sm:$0xff] %v390
  %455 = vst [vmem:[%s4 + $0x140] sm:$0xff] %v391
  %456 = vst [vmem:[%s4 + $0x148] sm:$0xff] %v392
  %457 = vst [vmem:[%s4 + $0x150] sm:$0xff] %v393
  %458 = vst [vmem:[%s4 + $0x158] sm:$0xff] %v394
  %459 = vst [vmem:[%s4 + $0x160] sm:$0xff] %v395
  %460 = vst [vmem:[%s4 + $0x168] sm:$0xff] %v396
  %461 = vst [vmem:[%s4 + $0x170] sm:$0xff] %v397
  %462 = vst [vmem:[%s4 + $0x178] sm:$0xff] %v398
  %463 = vst [vmem:[%s4 + $0x180] sm:$0xff] %v399
  %464 = vst [vmem:[%s4 + $0x188] sm:$0xff] %v400
  %465 = vst [vmem:[%s4 + $0x190] sm:$0xff] %v401
  %466 = vst [vmem:[%s4 + $0x198] sm:$0xff] %v402
  %467 = vst [vmem:[%s4 + $0x1a0] sm:$0xff] %v403
  %468 = vst [vmem:[%s4 + $0x1a8] sm:$0xff] %v404
  %469 = vst [vmem:[%s4 + $0x1b0] sm:$0xff] %v405
  %470 = vst [vmem:[%s4 + $0x1b8] sm:$0xff] %v406
  %471 = vst [vmem:[%s4 + $0x1c0] sm:$0xff] %v407
  %472 = vst [vmem:[%s4 + $0x1c8] sm:$0xff] %v408
  %473 = vst [vmem:[%s4 + $0x1d0] sm:$0xff] %v409
  %474 = vst [vmem:[%s4 + $0x1d8] sm:$0xff] %v410
  %475 = vst [vmem:[%s4 + $0x1e0] sm:$0xff] %v411
  %476 = vst [vmem:[%s4 + $0x1e8] sm:$0xff] %v412
  %477 = vst [vmem:[%s4 + $0x1f0] sm:$0xff] %v413
  %478 = vst [vmem:[%s4 + $0x1f8] sm:$0xff] %v414
  // Predicated region
  $region18: #{basic_block_forward.7} parent=0 // pred_check
    _
  $region19: #{basic_block_forward.7} parent=0 // pred_check_branch
    %480 = sbr.rel (0) target = $region21
  $region20: #{basic_block_forward.7} parent=0 // pred_region
    _
  $region21: #{basic_block_forward.7} parent=0 // pred_fallthru
    _
  // Predicated region
  $region22: #{basic_block_forward.7} parent=0 // pred_check
    _
  $region23: #{basic_block_forward.7} parent=0 // pred_check_branch
    %482 = sbr.rel (0) target = $region25
  $region24: #{basic_block_forward.7} parent=0 // pred_region
    _
  $region25: #{basic_block_forward.7} parent=0 // pred_fallthru
    _

</llo_original>
